<compile_context>
chip_gen: v5e
topology: v5e:2x2
jax: 0.10.0
libtpu: 0.0.40
codegen_flags: <defaults>
</compile_context>

<pallas_src>
import functools

import numpy as np
import jax
import jax.numpy as jnp
from jax.experimental import pallas as pl
from jax.experimental.pallas import tpu as pltpu


NUM_LAYERS = 5
OUT_LANES = 128          # lane-padded head width -> unmasked vector stores


# ----------------------------------------------------------------------------
# Single fused kernel: Linear1 -> 5x fused-direction biRNN -> Linear2/Linear3.
# No grid: every operand is one full VMEM block.
# ----------------------------------------------------------------------------
def _fused_myrnn_kernel(x_ref, w1_ref, b1_ref, wih_ref, whh_ref, bias_ref,
                        w2_ref, b2_ref, w3_ref, b3_ref,
                        o1_ref, o2_ref, act_ref, *, S, Bp, H):
    H2 = 2 * H

    # ---- Linear1 + ReLU ----------------------------------------------------
    # w1/b1 are zero-padded to 2H output columns, so the right half of `act`
    # is exactly 0 after the ReLU (layer-0 W_ih rows for that half are also
    # zero).  One full-width store into the activation scratch.
    act_ref[...] = jnp.maximum(
        jnp.dot(x_ref[...], w1_ref[...], preferred_element_type=jnp.float32)
        + b1_ref[...], 0.0)                                       # (S*Bp, 2H)

    # Lane mask selecting the forward-direction half (columns [0, H)).
    # Hoisted once; reused by every layer / step.
    fwd_mask = jax.lax.broadcasted_iota(jnp.int32, (Bp, H2), 1) < H

    # ---- 5 bidirectional layers, fwd+bwd fused per recurrence step ----------
    for layer in range(NUM_LAYERS):
        # Hoisted input projection for BOTH directions in one matmul:
        #   pre[:, :H] = x_t @ W_ih_fwd^T + (b_ih+b_hh)_fwd
        #   pre[:, H:] = x_t @ W_ih_bwd^T + (b_ih+b_hh)_bwd
        pre = jnp.dot(act_ref[...], wih_ref[layer],
                      preferred_element_type=jnp.float32) + bias_ref[layer]
        w_hh = whh_ref[layer]                    # block-diagonal (2H, 2H)

        h = jnp.zeros((Bp, H2), jnp.float32)     # [h_fwd | h_bwd], h0 = 0
        hs = [None] * S
        for t in range(S):                       # unrolled; 1 matmul+tanh/step
            tb = S - 1 - t
            # fwd half consumes pre at time t, bwd half at time S-1-t.
            # Both slices are 8-sublane aligned, full lane extent; the select
            # is a single VPU op off the serial h-chain.
            pre_t = jnp.where(fwd_mask,
                              pre[t * Bp:(t + 1) * Bp, :],
                              pre[tb * Bp:(tb + 1) * Bp, :])
            h = jnp.tanh(pre_t + jnp.dot(
                h, w_hh, preferred_element_type=jnp.float32))
            hs[t] = h

        # Re-assemble the layer output in the VMEM scratch: at output time t
        # the fwd half comes from step t, the bwd half from step S-1-t.
        # (pre was already consumed above, so overwriting act_ref is safe.)
        for t in range(S):
            act_ref[t * Bp:(t + 1) * Bp, :] = jnp.where(
                fwd_mask, hs[t], hs[S - 1 - t])

    # ---- heads: Linear2 (sigmoid) and Linear3, lane-padded outputs ----------
    act = act_ref[...]
    o1_ref[...] = jax.nn.sigmoid(
        jnp.dot(act, w2_ref[...], preferred_element_type=jnp.float32)
        + b2_ref[...])
    o2_ref[...] = (jnp.dot(act, w3_ref[...],
                           preferred_element_type=jnp.float32) + b3_ref[...])


# ----------------------------------------------------------------------------
# Parameter init (deterministic, PyTorch-style uniform(-1/sqrt(fan), ...)).
# ----------------------------------------------------------------------------
def init_params(key, input_dim, hidden_size):
    def unif(k, shape, fan):
        bound = 1.0 / np.sqrt(fan)
        return jax.random.uniform(k, shape, jnp.float32, -bound, bound)

    keys = iter(jax.random.split(key, 8 + NUM_LAYERS * 8))
    p = {}
    p["l1_w"] = unif(next(keys), (hidden_size, input_dim), input_dim)
    p["l1_b"] = unif(next(keys), (hidden_size,), input_dim)
    rnn = []
    for layer in range(NUM_LAYERS):
        in_dim = hidden_size if layer == 0 else 2 * hidden_size
        dirs = []
        for _d in range(2):  # forward / backward
            w_ih = unif(next(keys), (hidden_size, in_dim), hidden_size)
            w_hh = unif(next(keys), (hidden_size, hidden_size), hidden_size)
            b_ih = unif(next(keys), (hidden_size,), hidden_size)
            b_hh = unif(next(keys), (hidden_size,), hidden_size)
            dirs.append((w_ih, w_hh, b_ih, b_hh))
        rnn.append(tuple(dirs))
    p["rnn"] = rnn
    p["l2_w"] = unif(next(keys), (2, 2 * hidden_size), 2 * hidden_size)
    p["l2_b"] = unif(next(keys), (2,), 2 * hidden_size)
    p["l3_w"] = unif(next(keys), (1, 2 * hidden_size), 2 * hidden_size)
    p["l3_b"] = unif(next(keys), (1,), 2 * hidden_size)
    return p


def pack_params(params):
    """One-time prep: transpose, combine directions/biases, pad to lanes."""
    H = params["l1_w"].shape[0]
    D = params["l1_w"].shape[1]
    H2 = 2 * H
    f32 = jnp.float32

    packed = {}
    # Linear1 padded to 2H output columns (right half exactly 0 after ReLU).
    packed["w1"] = jnp.zeros((D, H2), f32).at[:, :H].set(params["l1_w"].T)
    packed["b1"] = jnp.zeros((1, H2), f32).at[0, :H].set(params["l1_b"])

    wih, whh, bias = [], [], []
    for layer, (fwd, bwd) in enumerate(params["rnn"]):
        wf_ih, wf_hh, bf_ih, bf_hh = fwd
        wb_ih, wb_hh, bb_ih, bb_hh = bwd
        in_dim = H if layer == 0 else H2          # layer 0 rows zero-padded
        wih_l = (jnp.zeros((H2, H2), f32)
                 .at[:in_dim, :H].set(wf_ih.T)
                 .at[:in_dim, H:].set(wb_ih.T))
        whh_l = (jnp.zeros((H2, H2), f32)          # block-diag [Wf^T | Wb^T]
                 .at[:H, :H].set(wf_hh.T)
                 .at[H:, H:].set(wb_hh.T))
        bias_l = jnp.concatenate([bf_ih + bf_hh, bb_ih + bb_hh]).reshape(1, H2)
        wih.append(wih_l)
        whh.append(whh_l)
        bias.append(bias_l)
    packed["wih"] = jnp.stack(wih)                 # (L, 2H, 2H)
    packed["whh"] = jnp.stack(whh)                 # (L, 2H, 2H)
    packed["bias"] = jnp.stack(bias)               # (L, 1, 2H)

    # Heads, lane-padded to 128 columns (unmasked stores).
    packed["w2"] = jnp.zeros((H2, OUT_LANES), f32).at[:, :2].set(params["l2_w"].T)
    packed["b2"] = jnp.zeros((1, OUT_LANES), f32).at[0, :2].set(params["l2_b"])
    packed["w3"] = jnp.zeros((H2, OUT_LANES), f32).at[:, :1].set(params["l3_w"].T)
    packed["b3"] = jnp.zeros((1, OUT_LANES), f32).at[0, :1].set(params["l3_b"])
    return packed


# ----------------------------------------------------------------------------
# Full forward pass: one pallas_call for the entire network.
# ----------------------------------------------------------------------------
@jax.jit
def myrnn_forward(packed, x):
    S, B, D = x.shape
    H2 = packed["whh"].shape[-1]
    H = H2 // 2
    Bp = ((B + 7) // 8) * 8                 # pad batch to the 8-sublane tile
    SB = S * Bp

    xp = jnp.pad(x, ((0, 0), (0, Bp - B), (0, 0))).reshape(SB, D)

    # Advisory cost hint for the XLA scheduler.
    flops = (2 * SB * D * H2
             + NUM_LAYERS * (2 * SB * H2 * H2 + S * 2 * Bp * H2 * H2)
             + 2 * 2 * SB * H2 * OUT_LANES)
    trans = NUM_LAYERS * SB * H2 + SB * OUT_LANES
    in_names = ("w1", "b1", "wih", "whh", "bias", "w2", "b2", "w3", "b3")
    bytes_accessed = 4 * (xp.size + sum(packed[k].size for k in in_names)
                          + 2 * SB * OUT_LANES)

    vmem = pl.BlockSpec(memory_space=pltpu.MemorySpace.VMEM)
    o1, o2 = pl.pallas_call(
        functools.partial(_fused_myrnn_kernel, S=S, Bp=Bp, H=H),
        out_shape=(jax.ShapeDtypeStruct((SB, OUT_LANES), jnp.float32),
                   jax.ShapeDtypeStruct((SB, OUT_LANES), jnp.float32)),
        in_specs=[vmem] * (1 + len(in_names)),
        out_specs=(vmem, vmem),
        scratch_shapes=[pltpu.VMEM((SB, H2), jnp.float32)],
        cost_estimate=pl.CostEstimate(flops=flops, transcendentals=trans,
                                      bytes_accessed=bytes_accessed),
    )(xp, packed["w1"], packed["b1"], packed["wih"], packed["whh"],
      packed["bias"], packed["w2"], packed["b2"], packed["w3"], packed["b3"])

    # Drop batch padding and lane padding.
    out1 = o1.reshape(S, Bp, OUT_LANES)[:, :B, :2]
    out2 = o2.reshape(S, Bp, OUT_LANES)[:, :B, :1]
    return out1, out2


# Pure-JAX reference (mirrors torch semantics) for a correctness check.
def reference_forward(params, x):
    S, B, _ = x.shape
    H = params["l1_w"].shape[0]
    out = jnp.maximum(x @ params["l1_w"].T + params["l1_b"], 0.0)

    def run_dir(xseq, p):
        w_ih, w_hh, b_ih, b_hh = p

        def step(h, xt):
            h_new = jnp.tanh(xt @ w_ih.T + b_ih + h @ w_hh.T + b_hh)
            return h_new, h_new

        h0 = jnp.zeros((B, H), jnp.float32)
        _, ys = jax.lax.scan(step, h0, xseq)
        return ys

    for fwd_p, bwd_p in params["rnn"]:
        f = run_dir(out, fwd_p)
        b = run_dir(out[::-1], bwd_p)[::-1]
        out = jnp.concatenate([f, b], axis=-1)

    out1 = jax.nn.sigmoid(out @ params["l2_w"].T + params["l2_b"])
    out2 = out @ params["l3_w"].T + params["l3_b"]
    return out1, out2


if __name__ == "__main__":
    SEQ, BATCH, INPUT_DIM, HIDDEN = 8, 4, 16, 32

    key = jax.random.PRNGKey(0)
    k_x, k_p = jax.random.split(key)
    x = jax.random.normal(k_x, (SEQ, BATCH, INPUT_DIM), jnp.float32)
    params = init_params(k_p, INPUT_DIM, HIDDEN)
    packed = pack_params(params)

    out1, out2 = myrnn_forward(packed, x)
    jax.block_until_ready((out1, out2))

    ref1, ref2 = reference_forward(params, x)
    assert out1.shape == (SEQ, BATCH, 2) and out2.shape == (SEQ, BATCH, 1)
    np.testing.assert_allclose(np.asarray(out1), np.asarray(ref1),
                               rtol=1e-4, atol=1e-4)
    np.testing.assert_allclose(np.asarray(out2), np.asarray(ref2),
                               rtol=1e-4, atol=1e-4)
    print("KERNEL_OK")
</pallas_src>

<mosaic_0001>
module attributes {stable_mosaic.version = 11 : i64} {
  func.func @_fused_myrnn_kernel(%arg0: memref<64x16xf32, #tpu.memory_space<vmem>>, %arg1: memref<16x64xf32, #tpu.memory_space<vmem>>, %arg2: memref<1x64xf32, #tpu.memory_space<vmem>>, %arg3: memref<5x64x64xf32, #tpu.memory_space<vmem>>, %arg4: memref<5x64x64xf32, #tpu.memory_space<vmem>>, %arg5: memref<5x1x64xf32, #tpu.memory_space<vmem>>, %arg6: memref<64x128xf32, #tpu.memory_space<vmem>>, %arg7: memref<1x128xf32, #tpu.memory_space<vmem>>, %arg8: memref<64x128xf32, #tpu.memory_space<vmem>>, %arg9: memref<1x128xf32, #tpu.memory_space<vmem>>, %arg10: memref<64x128xf32, #tpu.memory_space<vmem>>, %arg11: memref<64x128xf32, #tpu.memory_space<vmem>>, %arg12: memref<64x64xf32, #tpu.memory_space<vmem>>) attributes {dimension_semantics = [], scalar_prefetch = 0 : i64, scratch_operands = 1 : i64, tpu.core_type = #tpu.core_type<tc>} {
    %c0 = arith.constant 0 : index
    %c0_0 = arith.constant 0 : index
    %0 = vector.load %arg0[%c0, %c0_0] : memref<64x16xf32, #tpu.memory_space<vmem>>, vector<64x16xf32>
    %c0_1 = arith.constant 0 : index
    %c0_2 = arith.constant 0 : index
    %1 = vector.load %arg1[%c0_1, %c0_2] : memref<16x64xf32, #tpu.memory_space<vmem>>, vector<16x64xf32>
    %cst = arith.constant dense<0.000000e+00> : vector<64x64xf32>
    %2 = tpu.matmul %0, %1, %cst {dimension_numbers = #tpu.dot_dimension_numbers<[1], [0], [0], [1], [0, 0, 1, 1], [], []>} : vector<64x16xf32>, vector<16x64xf32>, vector<64x64xf32> -> vector<64x64xf32>
    %c0_3 = arith.constant 0 : index
    %c0_4 = arith.constant 0 : index
    %3 = vector.load %arg2[%c0_3, %c0_4] : memref<1x64xf32, #tpu.memory_space<vmem>>, vector<1x64xf32>
    %4 = vector.broadcast %3 : vector<1x64xf32> to vector<64x64xf32>
    %5 = arith.addf %2, %4 : vector<64x64xf32>
    %cst_5 = arith.constant 0.000000e+00 : f32
    %6 = vector.broadcast %cst_5 : f32 to vector<64x64xf32>
    %7 = arith.maximumf %5, %6 : vector<64x64xf32>
    %c0_6 = arith.constant 0 : index
    %c0_7 = arith.constant 0 : index
    %8 = vector.load %arg12[%c0_6, %c0_7] : memref<64x64xf32, #tpu.memory_space<vmem>>, vector<64x64xf32>
    tpu.vector_store %arg12[%c0_6, %c0_7], %7 {strides = array<i32>} : memref<64x64xf32, #tpu.memory_space<vmem>>, vector<64x64xf32>,
    %9 = tpu.iota {dimensions = array<i32: 1>} : vector<8x64xi32>
    %c32_i32 = arith.constant 32 : i32
    %10 = vector.broadcast %c32_i32 : i32 to vector<8x64xi32>
    %11 = arith.cmpi slt, %9, %10 : vector<8x64xi32>
    %c0_8 = arith.constant 0 : index
    %c0_9 = arith.constant 0 : index
    %12 = vector.load %arg12[%c0_8, %c0_9] : memref<64x64xf32, #tpu.memory_space<vmem>>, vector<64x64xf32>
    %c0_10 = arith.constant 0 : index
    %c0_11 = arith.constant 0 : index
    %c0_12 = arith.constant 0 : index
    %13 = vector.load %arg3[%c0_10, %c0_11, %c0_12] : memref<5x64x64xf32, #tpu.memory_space<vmem>>, vector<1x64x64xf32>
    %14 = vector.shape_cast %13 : vector<1x64x64xf32> to vector<64x64xf32>
    %cst_13 = arith.constant dense<0.000000e+00> : vector<64x64xf32>
    %15 = tpu.matmul %12, %14, %cst_13 {dimension_numbers = #tpu.dot_dimension_numbers<[1], [0], [0], [1], [0, 0, 1, 1], [], []>} : vector<64x64xf32>, vector<64x64xf32>, vector<64x64xf32> -> vector<64x64xf32>
    %c0_14 = arith.constant 0 : index
    %c0_15 = arith.constant 0 : index
    %c0_16 = arith.constant 0 : index
    %16 = vector.load %arg5[%c0_14, %c0_15, %c0_16] : memref<5x1x64xf32, #tpu.memory_space<vmem>>, vector<1x1x64xf32>
    %17 = vector.shape_cast %16 : vector<1x1x64xf32> to vector<1x64xf32>
    %18 = vector.broadcast %17 : vector<1x64xf32> to vector<64x64xf32>
    %19 = arith.addf %15, %18 : vector<64x64xf32>
    %c0_17 = arith.constant 0 : index
    %c0_18 = arith.constant 0 : index
    %c0_19 = arith.constant 0 : index
    %20 = vector.load %arg4[%c0_17, %c0_18, %c0_19] : memref<5x64x64xf32, #tpu.memory_space<vmem>>, vector<1x64x64xf32>
    %21 = vector.shape_cast %20 : vector<1x64x64xf32> to vector<64x64xf32>
    %cst_20 = arith.constant 0.000000e+00 : f32
    %22 = vector.broadcast %cst_20 : f32 to vector<8x64xf32>
    %23 = vector.extract_strided_slice %19 {offsets = [0, 0], sizes = [8, 64], strides = [1, 1]} : vector<64x64xf32> to vector<8x64xf32>
    %24 = vector.extract_strided_slice %19 {offsets = [56, 0], sizes = [8, 64], strides = [1, 1]} : vector<64x64xf32> to vector<8x64xf32>
    %25 = arith.select %11, %23, %24 : vector<8x64xi1>, vector<8x64xf32>
    %cst_21 = arith.constant dense<0.000000e+00> : vector<8x64xf32>
    %26 = tpu.matmul %22, %21, %cst_21 {dimension_numbers = #tpu.dot_dimension_numbers<[1], [0], [0], [1], [0, 0, 1, 1], [], []>} : vector<8x64xf32>, vector<64x64xf32>, vector<8x64xf32> -> vector<8x64xf32>
    %27 = arith.addf %25, %26 : vector<8x64xf32>
    %28 = math.tanh %27 : vector<8x64xf32>
    %29 = vector.extract_strided_slice %19 {offsets = [8, 0], sizes = [8, 64], strides = [1, 1]} : vector<64x64xf32> to vector<8x64xf32>
    %30 = vector.extract_strided_slice %19 {offsets = [48, 0], sizes = [8, 64], strides = [1, 1]} : vector<64x64xf32> to vector<8x64xf32>
    %31 = arith.select %11, %29, %30 : vector<8x64xi1>, vector<8x64xf32>
    %cst_22 = arith.constant dense<0.000000e+00> : vector<8x64xf32>
    %32 = tpu.matmul %28, %21, %cst_22 {dimension_numbers = #tpu.dot_dimension_numbers<[1], [0], [0], [1], [0, 0, 1, 1], [], []>} : vector<8x64xf32>, vector<64x64xf32>, vector<8x64xf32> -> vector<8x64xf32>
    %33 = arith.addf %31, %32 : vector<8x64xf32>
    %34 = math.tanh %33 : vector<8x64xf32>
    %35 = vector.extract_strided_slice %19 {offsets = [16, 0], sizes = [8, 64], strides = [1, 1]} : vector<64x64xf32> to vector<8x64xf32>
    %36 = vector.extract_strided_slice %19 {offsets = [40, 0], sizes = [8, 64], strides = [1, 1]} : vector<64x64xf32> to vector<8x64xf32>
    %37 = arith.select %11, %35, %36 : vector<8x64xi1>, vector<8x64xf32>
    %cst_23 = arith.constant dense<0.000000e+00> : vector<8x64xf32>
    %38 = tpu.matmul %34, %21, %cst_23 {dimension_numbers = #tpu.dot_dimension_numbers<[1], [0], [0], [1], [0, 0, 1, 1], [], []>} : vector<8x64xf32>, vector<64x64xf32>, vector<8x64xf32> -> vector<8x64xf32>
    %39 = arith.addf %37, %38 : vector<8x64xf32>
    %40 = math.tanh %39 : vector<8x64xf32>
    %41 = vector.extract_strided_slice %19 {offsets = [24, 0], sizes = [8, 64], strides = [1, 1]} : vector<64x64xf32> to vector<8x64xf32>
    %42 = vector.extract_strided_slice %19 {offsets = [32, 0], sizes = [8, 64], strides = [1, 1]} : vector<64x64xf32> to vector<8x64xf32>
    %43 = arith.select %11, %41, %42 : vector<8x64xi1>, vector<8x64xf32>
    %cst_24 = arith.constant dense<0.000000e+00> : vector<8x64xf32>
    %44 = tpu.matmul %40, %21, %cst_24 {dimension_numbers = #tpu.dot_dimension_numbers<[1], [0], [0], [1], [0, 0, 1, 1], [], []>} : vector<8x64xf32>, vector<64x64xf32>, vector<8x64xf32> -> vector<8x64xf32>
    %45 = arith.addf %43, %44 : vector<8x64xf32>
    %46 = math.tanh %45 : vector<8x64xf32>
    %47 = vector.extract_strided_slice %19 {offsets = [32, 0], sizes = [8, 64], strides = [1, 1]} : vector<64x64xf32> to vector<8x64xf32>
    %48 = vector.extract_strided_slice %19 {offsets = [24, 0], sizes = [8, 64], strides = [1, 1]} : vector<64x64xf32> to vector<8x64xf32>
    %49 = arith.select %11, %47, %48 : vector<8x64xi1>, vector<8x64xf32>
    %cst_25 = arith.constant dense<0.000000e+00> : vector<8x64xf32>
    %50 = tpu.matmul %46, %21, %cst_25 {dimension_numbers = #tpu.dot_dimension_numbers<[1], [0], [0], [1], [0, 0, 1, 1], [], []>} : vector<8x64xf32>, vector<64x64xf32>, vector<8x64xf32> -> vector<8x64xf32>
    %51 = arith.addf %49, %50 : vector<8x64xf32>
    %52 = math.tanh %51 : vector<8x64xf32>
    %53 = vector.extract_strided_slice %19 {offsets = [40, 0], sizes = [8, 64], strides = [1, 1]} : vector<64x64xf32> to vector<8x64xf32>
    %54 = vector.extract_strided_slice %19 {offsets = [16, 0], sizes = [8, 64], strides = [1, 1]} : vector<64x64xf32> to vector<8x64xf32>
    %55 = arith.select %11, %53, %54 : vector<8x64xi1>, vector<8x64xf32>
    %cst_26 = arith.constant dense<0.000000e+00> : vector<8x64xf32>
    %56 = tpu.matmul %52, %21, %cst_26 {dimension_numbers = #tpu.dot_dimension_numbers<[1], [0], [0], [1], [0, 0, 1, 1], [], []>} : vector<8x64xf32>, vector<64x64xf32>, vector<8x64xf32> -> vector<8x64xf32>
    %57 = arith.addf %55, %56 : vector<8x64xf32>
    %58 = math.tanh %57 : vector<8x64xf32>
    %59 = vector.extract_strided_slice %19 {offsets = [48, 0], sizes = [8, 64], strides = [1, 1]} : vector<64x64xf32> to vector<8x64xf32>
    %60 = vector.extract_strided_slice %19 {offsets = [8, 0], sizes = [8, 64], strides = [1, 1]} : vector<64x64xf32> to vector<8x64xf32>
    %61 = arith.select %11, %59, %60 : vector<8x64xi1>, vector<8x64xf32>
    %cst_27 = arith.constant dense<0.000000e+00> : vector<8x64xf32>
    %62 = tpu.matmul %58, %21, %cst_27 {dimension_numbers = #tpu.dot_dimension_numbers<[1], [0], [0], [1], [0, 0, 1, 1], [], []>} : vector<8x64xf32>, vector<64x64xf32>, vector<8x64xf32> -> vector<8x64xf32>
    %63 = arith.addf %61, %62 : vector<8x64xf32>
    %64 = math.tanh %63 : vector<8x64xf32>
    %65 = vector.extract_strided_slice %19 {offsets = [56, 0], sizes = [8, 64], strides = [1, 1]} : vector<64x64xf32> to vector<8x64xf32>
    %66 = vector.extract_strided_slice %19 {offsets = [0, 0], sizes = [8, 64], strides = [1, 1]} : vector<64x64xf32> to vector<8x64xf32>
    %67 = arith.select %11, %65, %66 : vector<8x64xi1>, vector<8x64xf32>
    %cst_28 = arith.constant dense<0.000000e+00> : vector<8x64xf32>
    %68 = tpu.matmul %64, %21, %cst_28 {dimension_numbers = #tpu.dot_dimension_numbers<[1], [0], [0], [1], [0, 0, 1, 1], [], []>} : vector<8x64xf32>, vector<64x64xf32>, vector<8x64xf32> -> vector<8x64xf32>
    %69 = arith.addf %67, %68 : vector<8x64xf32>
    %70 = math.tanh %69 : vector<8x64xf32>
    %71 = arith.select %11, %28, %70 : vector<8x64xi1>, vector<8x64xf32>
    %c0_29 = arith.constant 0 : index
    %c0_30 = arith.constant 0 : index
    %72 = vector.load %arg12[%c0_29, %c0_30] : memref<64x64xf32, #tpu.memory_space<vmem>>, vector<8x64xf32>
    tpu.vector_store %arg12[%c0_29, %c0_30], %71 {strides = array<i32>} : memref<64x64xf32, #tpu.memory_space<vmem>>, vector<8x64xf32>,
    %73 = arith.select %11, %34, %64 : vector<8x64xi1>, vector<8x64xf32>
    %c8 = arith.constant 8 : index
    %c0_31 = arith.constant 0 : index
    %74 = vector.load %arg12[%c8, %c0_31] : memref<64x64xf32, #tpu.memory_space<vmem>>, vector<8x64xf32>
    tpu.vector_store %arg12[%c8, %c0_31], %73 {strides = array<i32>} : memref<64x64xf32, #tpu.memory_space<vmem>>, vector<8x64xf32>,
    %75 = arith.select %11, %40, %58 : vector<8x64xi1>, vector<8x64xf32>
    %c16 = arith.constant 16 : index
    %c0_32 = arith.constant 0 : index
    %76 = vector.load %arg12[%c16, %c0_32] : memref<64x64xf32, #tpu.memory_space<vmem>>, vector<8x64xf32>
    tpu.vector_store %arg12[%c16, %c0_32], %75 {strides = array<i32>} : memref<64x64xf32, #tpu.memory_space<vmem>>, vector<8x64xf32>,
    %77 = arith.select %11, %46, %52 : vector<8x64xi1>, vector<8x64xf32>
    %c24 = arith.constant 24 : index
    %c0_33 = arith.constant 0 : index
    %78 = vector.load %arg12[%c24, %c0_33] : memref<64x64xf32, #tpu.memory_space<vmem>>, vector<8x64xf32>
    tpu.vector_store %arg12[%c24, %c0_33], %77 {strides = array<i32>} : memref<64x64xf32, #tpu.memory_space<vmem>>, vector<8x64xf32>,
    %79 = arith.select %11, %52, %46 : vector<8x64xi1>, vector<8x64xf32>
    %c32 = arith.constant 32 : index
    %c0_34 = arith.constant 0 : index
    %80 = vector.load %arg12[%c32, %c0_34] : memref<64x64xf32, #tpu.memory_space<vmem>>, vector<8x64xf32>
    tpu.vector_store %arg12[%c32, %c0_34], %79 {strides = array<i32>} : memref<64x64xf32, #tpu.memory_space<vmem>>, vector<8x64xf32>,
    %81 = arith.select %11, %58, %40 : vector<8x64xi1>, vector<8x64xf32>
    %c40 = arith.constant 40 : index
    %c0_35 = arith.constant 0 : index
    %82 = vector.load %arg12[%c40, %c0_35] : memref<64x64xf32, #tpu.memory_space<vmem>>, vector<8x64xf32>
    tpu.vector_store %arg12[%c40, %c0_35], %81 {strides = array<i32>} : memref<64x64xf32, #tpu.memory_space<vmem>>, vector<8x64xf32>,
    %83 = arith.select %11, %64, %34 : vector<8x64xi1>, vector<8x64xf32>
    %c48 = arith.constant 48 : index
    %c0_36 = arith.constant 0 : index
    %84 = vector.load %arg12[%c48, %c0_36] : memref<64x64xf32, #tpu.memory_space<vmem>>, vector<8x64xf32>
    tpu.vector_store %arg12[%c48, %c0_36], %83 {strides = array<i32>} : memref<64x64xf32, #tpu.memory_space<vmem>>, vector<8x64xf32>,
    %85 = arith.select %11, %70, %28 : vector<8x64xi1>, vector<8x64xf32>
    %c56 = arith.constant 56 : index
    %c0_37 = arith.constant 0 : index
    %86 = vector.load %arg12[%c56, %c0_37] : memref<64x64xf32, #tpu.memory_space<vmem>>, vector<8x64xf32>
    tpu.vector_store %arg12[%c56, %c0_37], %85 {strides = array<i32>} : memref<64x64xf32, #tpu.memory_space<vmem>>, vector<8x64xf32>,
    %c0_38 = arith.constant 0 : index
    %c0_39 = arith.constant 0 : index
    %87 = vector.load %arg12[%c0_38, %c0_39] : memref<64x64xf32, #tpu.memory_space<vmem>>, vector<64x64xf32>
    %c1 = arith.constant 1 : index
    %c0_40 = arith.constant 0 : index
    %c0_41 = arith.constant 0 : index
    %88 = vector.load %arg3[%c1, %c0_40, %c0_41] : memref<5x64x64xf32, #tpu.memory_space<vmem>>, vector<1x64x64xf32>
    %89 = vector.shape_cast %88 : vector<1x64x64xf32> to vector<64x64xf32>
    %cst_42 = arith.constant dense<0.000000e+00> : vector<64x64xf32>
    %90 = tpu.matmul %87, %89, %cst_42 {dimension_numbers = #tpu.dot_dimension_numbers<[1], [0], [0], [1], [0, 0, 1, 1], [], []>} : vector<64x64xf32>, vector<64x64xf32>, vector<64x64xf32> -> vector<64x64xf32>
    %c1_43 = arith.constant 1 : index
    %c0_44 = arith.constant 0 : index
    %c0_45 = arith.constant 0 : index
    %91 = vector.load %arg5[%c1_43, %c0_44, %c0_45] : memref<5x1x64xf32, #tpu.memory_space<vmem>>, vector<1x1x64xf32>
    %92 = vector.shape_cast %91 : vector<1x1x64xf32> to vector<1x64xf32>
    %93 = vector.broadcast %92 : vector<1x64xf32> to vector<64x64xf32>
    %94 = arith.addf %90, %93 : vector<64x64xf32>
    %c1_46 = arith.constant 1 : index
    %c0_47 = arith.constant 0 : index
    %c0_48 = arith.constant 0 : index
    %95 = vector.load %arg4[%c1_46, %c0_47, %c0_48] : memref<5x64x64xf32, #tpu.memory_space<vmem>>, vector<1x64x64xf32>
    %96 = vector.shape_cast %95 : vector<1x64x64xf32> to vector<64x64xf32>
    %cst_49 = arith.constant 0.000000e+00 : f32
    %97 = vector.broadcast %cst_49 : f32 to vector<8x64xf32>
    %98 = vector.extract_strided_slice %94 {offsets = [0, 0], sizes = [8, 64], strides = [1, 1]} : vector<64x64xf32> to vector<8x64xf32>
    %99 = vector.extract_strided_slice %94 {offsets = [56, 0], sizes = [8, 64], strides = [1, 1]} : vector<64x64xf32> to vector<8x64xf32>
    %100 = arith.select %11, %98, %99 : vector<8x64xi1>, vector<8x64xf32>
    %cst_50 = arith.constant dense<0.000000e+00> : vector<8x64xf32>
    %101 = tpu.matmul %97, %96, %cst_50 {dimension_numbers = #tpu.dot_dimension_numbers<[1], [0], [0], [1], [0, 0, 1, 1], [], []>} : vector<8x64xf32>, vector<64x64xf32>, vector<8x64xf32> -> vector<8x64xf32>
    %102 = arith.addf %100, %101 : vector<8x64xf32>
    %103 = math.tanh %102 : vector<8x64xf32>
    %104 = vector.extract_strided_slice %94 {offsets = [8, 0], sizes = [8, 64], strides = [1, 1]} : vector<64x64xf32> to vector<8x64xf32>
    %105 = vector.extract_strided_slice %94 {offsets = [48, 0], sizes = [8, 64], strides = [1, 1]} : vector<64x64xf32> to vector<8x64xf32>
    %106 = arith.select %11, %104, %105 : vector<8x64xi1>, vector<8x64xf32>
    %cst_51 = arith.constant dense<0.000000e+00> : vector<8x64xf32>
    %107 = tpu.matmul %103, %96, %cst_51 {dimension_numbers = #tpu.dot_dimension_numbers<[1], [0], [0], [1], [0, 0, 1, 1], [], []>} : vector<8x64xf32>, vector<64x64xf32>, vector<8x64xf32> -> vector<8x64xf32>
    %108 = arith.addf %106, %107 : vector<8x64xf32>
    %109 = math.tanh %108 : vector<8x64xf32>
    %110 = vector.extract_strided_slice %94 {offsets = [16, 0], sizes = [8, 64], strides = [1, 1]} : vector<64x64xf32> to vector<8x64xf32>
    %111 = vector.extract_strided_slice %94 {offsets = [40, 0], sizes = [8, 64], strides = [1, 1]} : vector<64x64xf32> to vector<8x64xf32>
    %112 = arith.select %11, %110, %111 : vector<8x64xi1>, vector<8x64xf32>
    %cst_52 = arith.constant dense<0.000000e+00> : vector<8x64xf32>
    %113 = tpu.matmul %109, %96, %cst_52 {dimension_numbers = #tpu.dot_dimension_numbers<[1], [0], [0], [1], [0, 0, 1, 1], [], []>} : vector<8x64xf32>, vector<64x64xf32>, vector<8x64xf32> -> vector<8x64xf32>
    %114 = arith.addf %112, %113 : vector<8x64xf32>
    %115 = math.tanh %114 : vector<8x64xf32>
    %116 = vector.extract_strided_slice %94 {offsets = [24, 0], sizes = [8, 64], strides = [1, 1]} : vector<64x64xf32> to vector<8x64xf32>
    %117 = vector.extract_strided_slice %94 {offsets = [32, 0], sizes = [8, 64], strides = [1, 1]} : vector<64x64xf32> to vector<8x64xf32>
    %118 = arith.select %11, %116, %117 : vector<8x64xi1>, vector<8x64xf32>
    %cst_53 = arith.constant dense<0.000000e+00> : vector<8x64xf32>
    %119 = tpu.matmul %115, %96, %cst_53 {dimension_numbers = #tpu.dot_dimension_numbers<[1], [0], [0], [1], [0, 0, 1, 1], [], []>} : vector<8x64xf32>, vector<64x64xf32>, vector<8x64xf32> -> vector<8x64xf32>
    %120 = arith.addf %118, %119 : vector<8x64xf32>
    %121 = math.tanh %120 : vector<8x64xf32>
    %122 = vector.extract_strided_slice %94 {offsets = [32, 0], sizes = [8, 64], strides = [1, 1]} : vector<64x64xf32> to vector<8x64xf32>
    %123 = vector.extract_strided_slice %94 {offsets = [24, 0], sizes = [8, 64], strides = [1, 1]} : vector<64x64xf32> to vector<8x64xf32>
    %124 = arith.select %11, %122, %123 : vector<8x64xi1>, vector<8x64xf32>
    %cst_54 = arith.constant dense<0.000000e+00> : vector<8x64xf32>
    %125 = tpu.matmul %121, %96, %cst_54 {dimension_numbers = #tpu.dot_dimension_numbers<[1], [0], [0], [1], [0, 0, 1, 1], [], []>} : vector<8x64xf32>, vector<64x64xf32>, vector<8x64xf32> -> vector<8x64xf32>
    %126 = arith.addf %124, %125 : vector<8x64xf32>
    %127 = math.tanh %126 : vector<8x64xf32>
    %128 = vector.extract_strided_slice %94 {offsets = [40, 0], sizes = [8, 64], strides = [1, 1]} : vector<64x64xf32> to vector<8x64xf32>
    %129 = vector.extract_strided_slice %94 {offsets = [16, 0], sizes = [8, 64], strides = [1, 1]} : vector<64x64xf32> to vector<8x64xf32>
    %130 = arith.select %11, %128, %129 : vector<8x64xi1>, vector<8x64xf32>
    %cst_55 = arith.constant dense<0.000000e+00> : vector<8x64xf32>
    %131 = tpu.matmul %127, %96, %cst_55 {dimension_numbers = #tpu.dot_dimension_numbers<[1], [0], [0], [1], [0, 0, 1, 1], [], []>} : vector<8x64xf32>, vector<64x64xf32>, vector<8x64xf32> -> vector<8x64xf32>
    %132 = arith.addf %130, %131 : vector<8x64xf32>
    %133 = math.tanh %132 : vector<8x64xf32>
    %134 = vector.extract_strided_slice %94 {offsets = [48, 0], sizes = [8, 64], strides = [1, 1]} : vector<64x64xf32> to vector<8x64xf32>
    %135 = vector.extract_strided_slice %94 {offsets = [8, 0], sizes = [8, 64], strides = [1, 1]} : vector<64x64xf32> to vector<8x64xf32>
    %136 = arith.select %11, %134, %135 : vector<8x64xi1>, vector<8x64xf32>
    %cst_56 = arith.constant dense<0.000000e+00> : vector<8x64xf32>
    %137 = tpu.matmul %133, %96, %cst_56 {dimension_numbers = #tpu.dot_dimension_numbers<[1], [0], [0], [1], [0, 0, 1, 1], [], []>} : vector<8x64xf32>, vector<64x64xf32>, vector<8x64xf32> -> vector<8x64xf32>
    %138 = arith.addf %136, %137 : vector<8x64xf32>
    %139 = math.tanh %138 : vector<8x64xf32>
    %140 = vector.extract_strided_slice %94 {offsets = [56, 0], sizes = [8, 64], strides = [1, 1]} : vector<64x64xf32> to vector<8x64xf32>
    %141 = vector.extract_strided_slice %94 {offsets = [0, 0], sizes = [8, 64], strides = [1, 1]} : vector<64x64xf32> to vector<8x64xf32>
    %142 = arith.select %11, %140, %141 : vector<8x64xi1>, vector<8x64xf32>
    %cst_57 = arith.constant dense<0.000000e+00> : vector<8x64xf32>
    %143 = tpu.matmul %139, %96, %cst_57 {dimension_numbers = #tpu.dot_dimension_numbers<[1], [0], [0], [1], [0, 0, 1, 1], [], []>} : vector<8x64xf32>, vector<64x64xf32>, vector<8x64xf32> -> vector<8x64xf32>
    %144 = arith.addf %142, %143 : vector<8x64xf32>
    %145 = math.tanh %144 : vector<8x64xf32>
    %146 = arith.select %11, %103, %145 : vector<8x64xi1>, vector<8x64xf32>
    %c0_58 = arith.constant 0 : index
    %c0_59 = arith.constant 0 : index
    %147 = vector.load %arg12[%c0_58, %c0_59] : memref<64x64xf32, #tpu.memory_space<vmem>>, vector<8x64xf32>
    tpu.vector_store %arg12[%c0_58, %c0_59], %146 {strides = array<i32>} : memref<64x64xf32, #tpu.memory_space<vmem>>, vector<8x64xf32>,
    %148 = arith.select %11, %109, %139 : vector<8x64xi1>, vector<8x64xf32>
    %c8_60 = arith.constant 8 : index
    %c0_61 = arith.constant 0 : index
    %149 = vector.load %arg12[%c8_60, %c0_61] : memref<64x64xf32, #tpu.memory_space<vmem>>, vector<8x64xf32>
    tpu.vector_store %arg12[%c8_60, %c0_61], %148 {strides = array<i32>} : memref<64x64xf32, #tpu.memory_space<vmem>>, vector<8x64xf32>,
    %150 = arith.select %11, %115, %133 : vector<8x64xi1>, vector<8x64xf32>
    %c16_62 = arith.constant 16 : index
    %c0_63 = arith.constant 0 : index
    %151 = vector.load %arg12[%c16_62, %c0_63] : memref<64x64xf32, #tpu.memory_space<vmem>>, vector<8x64xf32>
    tpu.vector_store %arg12[%c16_62, %c0_63], %150 {strides = array<i32>} : memref<64x64xf32, #tpu.memory_space<vmem>>, vector<8x64xf32>,
    %152 = arith.select %11, %121, %127 : vector<8x64xi1>, vector<8x64xf32>
    %c24_64 = arith.constant 24 : index
    %c0_65 = arith.constant 0 : index
    %153 = vector.load %arg12[%c24_64, %c0_65] : memref<64x64xf32, #tpu.memory_space<vmem>>, vector<8x64xf32>
    tpu.vector_store %arg12[%c24_64, %c0_65], %152 {strides = array<i32>} : memref<64x64xf32, #tpu.memory_space<vmem>>, vector<8x64xf32>,
    %154 = arith.select %11, %127, %121 : vector<8x64xi1>, vector<8x64xf32>
    %c32_66 = arith.constant 32 : index
    %c0_67 = arith.constant 0 : index
    %155 = vector.load %arg12[%c32_66, %c0_67] : memref<64x64xf32, #tpu.memory_space<vmem>>, vector<8x64xf32>
    tpu.vector_store %arg12[%c32_66, %c0_67], %154 {strides = array<i32>} : memref<64x64xf32, #tpu.memory_space<vmem>>, vector<8x64xf32>,
    %156 = arith.select %11, %133, %115 : vector<8x64xi1>, vector<8x64xf32>
    %c40_68 = arith.constant 40 : index
    %c0_69 = arith.constant 0 : index
    %157 = vector.load %arg12[%c40_68, %c0_69] : memref<64x64xf32, #tpu.memory_space<vmem>>, vector<8x64xf32>
    tpu.vector_store %arg12[%c40_68, %c0_69], %156 {strides = array<i32>} : memref<64x64xf32, #tpu.memory_space<vmem>>, vector<8x64xf32>,
    %158 = arith.select %11, %139, %109 : vector<8x64xi1>, vector<8x64xf32>
    %c48_70 = arith.constant 48 : index
    %c0_71 = arith.constant 0 : index
    %159 = vector.load %arg12[%c48_70, %c0_71] : memref<64x64xf32, #tpu.memory_space<vmem>>, vector<8x64xf32>
    tpu.vector_store %arg12[%c48_70, %c0_71], %158 {strides = array<i32>} : memref<64x64xf32, #tpu.memory_space<vmem>>, vector<8x64xf32>,
    %160 = arith.select %11, %145, %103 : vector<8x64xi1>, vector<8x64xf32>
    %c56_72 = arith.constant 56 : index
    %c0_73 = arith.constant 0 : index
    %161 = vector.load %arg12[%c56_72, %c0_73] : memref<64x64xf32, #tpu.memory_space<vmem>>, vector<8x64xf32>
    tpu.vector_store %arg12[%c56_72, %c0_73], %160 {strides = array<i32>} : memref<64x64xf32, #tpu.memory_space<vmem>>, vector<8x64xf32>,
    %c0_74 = arith.constant 0 : index
    %c0_75 = arith.constant 0 : index
    %162 = vector.load %arg12[%c0_74, %c0_75] : memref<64x64xf32, #tpu.memory_space<vmem>>, vector<64x64xf32>
    %c2 = arith.constant 2 : index
    %c0_76 = arith.constant 0 : index
    %c0_77 = arith.constant 0 : index
    %163 = vector.load %arg3[%c2, %c0_76, %c0_77] : memref<5x64x64xf32, #tpu.memory_space<vmem>>, vector<1x64x64xf32>
    %164 = vector.shape_cast %163 : vector<1x64x64xf32> to vector<64x64xf32>
    %cst_78 = arith.constant dense<0.000000e+00> : vector<64x64xf32>
    %165 = tpu.matmul %162, %164, %cst_78 {dimension_numbers = #tpu.dot_dimension_numbers<[1], [0], [0], [1], [0, 0, 1, 1], [], []>} : vector<64x64xf32>, vector<64x64xf32>, vector<64x64xf32> -> vector<64x64xf32>
    %c2_79 = arith.constant 2 : index
    %c0_80 = arith.constant 0 : index
    %c0_81 = arith.constant 0 : index
    %166 = vector.load %arg5[%c2_79, %c0_80, %c0_81] : memref<5x1x64xf32, #tpu.memory_space<vmem>>, vector<1x1x64xf32>
    %167 = vector.shape_cast %166 : vector<1x1x64xf32> to vector<1x64xf32>
    %168 = vector.broadcast %167 : vector<1x64xf32> to vector<64x64xf32>
    %169 = arith.addf %165, %168 : vector<64x64xf32>
    %c2_82 = arith.constant 2 : index
    %c0_83 = arith.constant 0 : index
    %c0_84 = arith.constant 0 : index
    %170 = vector.load %arg4[%c2_82, %c0_83, %c0_84] : memref<5x64x64xf32, #tpu.memory_space<vmem>>, vector<1x64x64xf32>
    %171 = vector.shape_cast %170 : vector<1x64x64xf32> to vector<64x64xf32>
    %cst_85 = arith.constant 0.000000e+00 : f32
    %172 = vector.broadcast %cst_85 : f32 to vector<8x64xf32>
    %173 = vector.extract_strided_slice %169 {offsets = [0, 0], sizes = [8, 64], strides = [1, 1]} : vector<64x64xf32> to vector<8x64xf32>
    %174 = vector.extract_strided_slice %169 {offsets = [56, 0], sizes = [8, 64], strides = [1, 1]} : vector<64x64xf32> to vector<8x64xf32>
    %175 = arith.select %11, %173, %174 : vector<8x64xi1>, vector<8x64xf32>
    %cst_86 = arith.constant dense<0.000000e+00> : vector<8x64xf32>
    %176 = tpu.matmul %172, %171, %cst_86 {dimension_numbers = #tpu.dot_dimension_numbers<[1], [0], [0], [1], [0, 0, 1, 1], [], []>} : vector<8x64xf32>, vector<64x64xf32>, vector<8x64xf32> -> vector<8x64xf32>
    %177 = arith.addf %175, %176 : vector<8x64xf32>
    %178 = math.tanh %177 : vector<8x64xf32>
    %179 = vector.extract_strided_slice %169 {offsets = [8, 0], sizes = [8, 64], strides = [1, 1]} : vector<64x64xf32> to vector<8x64xf32>
    %180 = vector.extract_strided_slice %169 {offsets = [48, 0], sizes = [8, 64], strides = [1, 1]} : vector<64x64xf32> to vector<8x64xf32>
    %181 = arith.select %11, %179, %180 : vector<8x64xi1>, vector<8x64xf32>
    %cst_87 = arith.constant dense<0.000000e+00> : vector<8x64xf32>
    %182 = tpu.matmul %178, %171, %cst_87 {dimension_numbers = #tpu.dot_dimension_numbers<[1], [0], [0], [1], [0, 0, 1, 1], [], []>} : vector<8x64xf32>, vector<64x64xf32>, vector<8x64xf32> -> vector<8x64xf32>
    %183 = arith.addf %181, %182 : vector<8x64xf32>
    %184 = math.tanh %183 : vector<8x64xf32>
    %185 = vector.extract_strided_slice %169 {offsets = [16, 0], sizes = [8, 64], strides = [1, 1]} : vector<64x64xf32> to vector<8x64xf32>
    %186 = vector.extract_strided_slice %169 {offsets = [40, 0], sizes = [8, 64], strides = [1, 1]} : vector<64x64xf32> to vector<8x64xf32>
    %187 = arith.select %11, %185, %186 : vector<8x64xi1>, vector<8x64xf32>
    %cst_88 = arith.constant dense<0.000000e+00> : vector<8x64xf32>
    %188 = tpu.matmul %184, %171, %cst_88 {dimension_numbers = #tpu.dot_dimension_numbers<[1], [0], [0], [1], [0, 0, 1, 1], [], []>} : vector<8x64xf32>, vector<64x64xf32>, vector<8x64xf32> -> vector<8x64xf32>
    %189 = arith.addf %187, %188 : vector<8x64xf32>
    %190 = math.tanh %189 : vector<8x64xf32>
    %191 = vector.extract_strided_slice %169 {offsets = [24, 0], sizes = [8, 64], strides = [1, 1]} : vector<64x64xf32> to vector<8x64xf32>
    %192 = vector.extract_strided_slice %169 {offsets = [32, 0], sizes = [8, 64], strides = [1, 1]} : vector<64x64xf32> to vector<8x64xf32>
    %193 = arith.select %11, %191, %192 : vector<8x64xi1>, vector<8x64xf32>
    %cst_89 = arith.constant dense<0.000000e+00> : vector<8x64xf32>
    %194 = tpu.matmul %190, %171, %cst_89 {dimension_numbers = #tpu.dot_dimension_numbers<[1], [0], [0], [1], [0, 0, 1, 1], [], []>} : vector<8x64xf32>, vector<64x64xf32>, vector<8x64xf32> -> vector<8x64xf32>
    %195 = arith.addf %193, %194 : vector<8x64xf32>
    %196 = math.tanh %195 : vector<8x64xf32>
    %197 = vector.extract_strided_slice %169 {offsets = [32, 0], sizes = [8, 64], strides = [1, 1]} : vector<64x64xf32> to vector<8x64xf32>
    %198 = vector.extract_strided_slice %169 {offsets = [24, 0], sizes = [8, 64], strides = [1, 1]} : vector<64x64xf32> to vector<8x64xf32>
    %199 = arith.select %11, %197, %198 : vector<8x64xi1>, vector<8x64xf32>
    %cst_90 = arith.constant dense<0.000000e+00> : vector<8x64xf32>
    %200 = tpu.matmul %196, %171, %cst_90 {dimension_numbers = #tpu.dot_dimension_numbers<[1], [0], [0], [1], [0, 0, 1, 1], [], []>} : vector<8x64xf32>, vector<64x64xf32>, vector<8x64xf32> -> vector<8x64xf32>
    %201 = arith.addf %199, %200 : vector<8x64xf32>
    %202 = math.tanh %201 : vector<8x64xf32>
    %203 = vector.extract_strided_slice %169 {offsets = [40, 0], sizes = [8, 64], strides = [1, 1]} : vector<64x64xf32> to vector<8x64xf32>
    %204 = vector.extract_strided_slice %169 {offsets = [16, 0], sizes = [8, 64], strides = [1, 1]} : vector<64x64xf32> to vector<8x64xf32>
    %205 = arith.select %11, %203, %204 : vector<8x64xi1>, vector<8x64xf32>
    %cst_91 = arith.constant dense<0.000000e+00> : vector<8x64xf32>
    %206 = tpu.matmul %202, %171, %cst_91 {dimension_numbers = #tpu.dot_dimension_numbers<[1], [0], [0], [1], [0, 0, 1, 1], [], []>} : vector<8x64xf32>, vector<64x64xf32>, vector<8x64xf32> -> vector<8x64xf32>
    %207 = arith.addf %205, %206 : vector<8x64xf32>
    %208 = math.tanh %207 : vector<8x64xf32>
    %209 = vector.extract_strided_slice %169 {offsets = [48, 0], sizes = [8, 64], strides = [1, 1]} : vector<64x64xf32> to vector<8x64xf32>
    %210 = vector.extract_strided_slice %169 {offsets = [8, 0], sizes = [8, 64], strides = [1, 1]} : vector<64x64xf32> to vector<8x64xf32>
    %211 = arith.select %11, %209, %210 : vector<8x64xi1>, vector<8x64xf32>
    %cst_92 = arith.constant dense<0.000000e+00> : vector<8x64xf32>
    %212 = tpu.matmul %208, %171, %cst_92 {dimension_numbers = #tpu.dot_dimension_numbers<[1], [0], [0], [1], [0, 0, 1, 1], [], []>} : vector<8x64xf32>, vector<64x64xf32>, vector<8x64xf32> -> vector<8x64xf32>
    %213 = arith.addf %211, %212 : vector<8x64xf32>
    %214 = math.tanh %213 : vector<8x64xf32>
    %215 = vector.extract_strided_slice %169 {offsets = [56, 0], sizes = [8, 64], strides = [1, 1]} : vector<64x64xf32> to vector<8x64xf32>
    %216 = vector.extract_strided_slice %169 {offsets = [0, 0], sizes = [8, 64], strides = [1, 1]} : vector<64x64xf32> to vector<8x64xf32>
    %217 = arith.select %11, %215, %216 : vector<8x64xi1>, vector<8x64xf32>
    %cst_93 = arith.constant dense<0.000000e+00> : vector<8x64xf32>
    %218 = tpu.matmul %214, %171, %cst_93 {dimension_numbers = #tpu.dot_dimension_numbers<[1], [0], [0], [1], [0, 0, 1, 1], [], []>} : vector<8x64xf32>, vector<64x64xf32>, vector<8x64xf32> -> vector<8x64xf32>
    %219 = arith.addf %217, %218 : vector<8x64xf32>
    %220 = math.tanh %219 : vector<8x64xf32>
    %221 = arith.select %11, %178, %220 : vector<8x64xi1>, vector<8x64xf32>
    %c0_94 = arith.constant 0 : index
    %c0_95 = arith.constant 0 : index
    %222 = vector.load %arg12[%c0_94, %c0_95] : memref<64x64xf32, #tpu.memory_space<vmem>>, vector<8x64xf32>
    tpu.vector_store %arg12[%c0_94, %c0_95], %221 {strides = array<i32>} : memref<64x64xf32, #tpu.memory_space<vmem>>, vector<8x64xf32>,
    %223 = arith.select %11, %184, %214 : vector<8x64xi1>, vector<8x64xf32>
    %c8_96 = arith.constant 8 : index
    %c0_97 = arith.constant 0 : index
    %224 = vector.load %arg12[%c8_96, %c0_97] : memref<64x64xf32, #tpu.memory_space<vmem>>, vector<8x64xf32>
    tpu.vector_store %arg12[%c8_96, %c0_97], %223 {strides = array<i32>} : memref<64x64xf32, #tpu.memory_space<vmem>>, vector<8x64xf32>,
    %225 = arith.select %11, %190, %208 : vector<8x64xi1>, vector<8x64xf32>
    %c16_98 = arith.constant 16 : index
    %c0_99 = arith.constant 0 : index
    %226 = vector.load %arg12[%c16_98, %c0_99] : memref<64x64xf32, #tpu.memory_space<vmem>>, vector<8x64xf32>
    tpu.vector_store %arg12[%c16_98, %c0_99], %225 {strides = array<i32>} : memref<64x64xf32, #tpu.memory_space<vmem>>, vector<8x64xf32>,
    %227 = arith.select %11, %196, %202 : vector<8x64xi1>, vector<8x64xf32>
    %c24_100 = arith.constant 24 : index
    %c0_101 = arith.constant 0 : index
    %228 = vector.load %arg12[%c24_100, %c0_101] : memref<64x64xf32, #tpu.memory_space<vmem>>, vector<8x64xf32>
    tpu.vector_store %arg12[%c24_100, %c0_101], %227 {strides = array<i32>} : memref<64x64xf32, #tpu.memory_space<vmem>>, vector<8x64xf32>,
    %229 = arith.select %11, %202, %196 : vector<8x64xi1>, vector<8x64xf32>
    %c32_102 = arith.constant 32 : index
    %c0_103 = arith.constant 0 : index
    %230 = vector.load %arg12[%c32_102, %c0_103] : memref<64x64xf32, #tpu.memory_space<vmem>>, vector<8x64xf32>
    tpu.vector_store %arg12[%c32_102, %c0_103], %229 {strides = array<i32>} : memref<64x64xf32, #tpu.memory_space<vmem>>, vector<8x64xf32>,
    %231 = arith.select %11, %208, %190 : vector<8x64xi1>, vector<8x64xf32>
    %c40_104 = arith.constant 40 : index
    %c0_105 = arith.constant 0 : index
    %232 = vector.load %arg12[%c40_104, %c0_105] : memref<64x64xf32, #tpu.memory_space<vmem>>, vector<8x64xf32>
    tpu.vector_store %arg12[%c40_104, %c0_105], %231 {strides = array<i32>} : memref<64x64xf32, #tpu.memory_space<vmem>>, vector<8x64xf32>,
    %233 = arith.select %11, %214, %184 : vector<8x64xi1>, vector<8x64xf32>
    %c48_106 = arith.constant 48 : index
    %c0_107 = arith.constant 0 : index
    %234 = vector.load %arg12[%c48_106, %c0_107] : memref<64x64xf32, #tpu.memory_space<vmem>>, vector<8x64xf32>
    tpu.vector_store %arg12[%c48_106, %c0_107], %233 {strides = array<i32>} : memref<64x64xf32, #tpu.memory_space<vmem>>, vector<8x64xf32>,
    %235 = arith.select %11, %220, %178 : vector<8x64xi1>, vector<8x64xf32>
    %c56_108 = arith.constant 56 : index
    %c0_109 = arith.constant 0 : index
    %236 = vector.load %arg12[%c56_108, %c0_109] : memref<64x64xf32, #tpu.memory_space<vmem>>, vector<8x64xf32>
    tpu.vector_store %arg12[%c56_108, %c0_109], %235 {strides = array<i32>} : memref<64x64xf32, #tpu.memory_space<vmem>>, vector<8x64xf32>,
    %c0_110 = arith.constant 0 : index
    %c0_111 = arith.constant 0 : index
    %237 = vector.load %arg12[%c0_110, %c0_111] : memref<64x64xf32, #tpu.memory_space<vmem>>, vector<64x64xf32>
    %c3 = arith.constant 3 : index
    %c0_112 = arith.constant 0 : index
    %c0_113 = arith.constant 0 : index
    %238 = vector.load %arg3[%c3, %c0_112, %c0_113] : memref<5x64x64xf32, #tpu.memory_space<vmem>>, vector<1x64x64xf32>
    %239 = vector.shape_cast %238 : vector<1x64x64xf32> to vector<64x64xf32>
    %cst_114 = arith.constant dense<0.000000e+00> : vector<64x64xf32>
    %240 = tpu.matmul %237, %239, %cst_114 {dimension_numbers = #tpu.dot_dimension_numbers<[1], [0], [0], [1], [0, 0, 1, 1], [], []>} : vector<64x64xf32>, vector<64x64xf32>, vector<64x64xf32> -> vector<64x64xf32>
    %c3_115 = arith.constant 3 : index
    %c0_116 = arith.constant 0 : index
    %c0_117 = arith.constant 0 : index
    %241 = vector.load %arg5[%c3_115, %c0_116, %c0_117] : memref<5x1x64xf32, #tpu.memory_space<vmem>>, vector<1x1x64xf32>
    %242 = vector.shape_cast %241 : vector<1x1x64xf32> to vector<1x64xf32>
    %243 = vector.broadcast %242 : vector<1x64xf32> to vector<64x64xf32>
    %244 = arith.addf %240, %243 : vector<64x64xf32>
    %c3_118 = arith.constant 3 : index
    %c0_119 = arith.constant 0 : index
    %c0_120 = arith.constant 0 : index
    %245 = vector.load %arg4[%c3_118, %c0_119, %c0_120] : memref<5x64x64xf32, #tpu.memory_space<vmem>>, vector<1x64x64xf32>
    %246 = vector.shape_cast %245 : vector<1x64x64xf32> to vector<64x64xf32>
    %cst_121 = arith.constant 0.000000e+00 : f32
    %247 = vector.broadcast %cst_121 : f32 to vector<8x64xf32>
    %248 = vector.extract_strided_slice %244 {offsets = [0, 0], sizes = [8, 64], strides = [1, 1]} : vector<64x64xf32> to vector<8x64xf32>
    %249 = vector.extract_strided_slice %244 {offsets = [56, 0], sizes = [8, 64], strides = [1, 1]} : vector<64x64xf32> to vector<8x64xf32>
    %250 = arith.select %11, %248, %249 : vector<8x64xi1>, vector<8x64xf32>
    %cst_122 = arith.constant dense<0.000000e+00> : vector<8x64xf32>
    %251 = tpu.matmul %247, %246, %cst_122 {dimension_numbers = #tpu.dot_dimension_numbers<[1], [0], [0], [1], [0, 0, 1, 1], [], []>} : vector<8x64xf32>, vector<64x64xf32>, vector<8x64xf32> -> vector<8x64xf32>
    %252 = arith.addf %250, %251 : vector<8x64xf32>
    %253 = math.tanh %252 : vector<8x64xf32>
    %254 = vector.extract_strided_slice %244 {offsets = [8, 0], sizes = [8, 64], strides = [1, 1]} : vector<64x64xf32> to vector<8x64xf32>
    %255 = vector.extract_strided_slice %244 {offsets = [48, 0], sizes = [8, 64], strides = [1, 1]} : vector<64x64xf32> to vector<8x64xf32>
    %256 = arith.select %11, %254, %255 : vector<8x64xi1>, vector<8x64xf32>
    %cst_123 = arith.constant dense<0.000000e+00> : vector<8x64xf32>
    %257 = tpu.matmul %253, %246, %cst_123 {dimension_numbers = #tpu.dot_dimension_numbers<[1], [0], [0], [1], [0, 0, 1, 1], [], []>} : vector<8x64xf32>, vector<64x64xf32>, vector<8x64xf32> -> vector<8x64xf32>
    %258 = arith.addf %256, %257 : vector<8x64xf32>
    %259 = math.tanh %258 : vector<8x64xf32>
    %260 = vector.extract_strided_slice %244 {offsets = [16, 0], sizes = [8, 64], strides = [1, 1]} : vector<64x64xf32> to vector<8x64xf32>
    %261 = vector.extract_strided_slice %244 {offsets = [40, 0], sizes = [8, 64], strides = [1, 1]} : vector<64x64xf32> to vector<8x64xf32>
    %262 = arith.select %11, %260, %261 : vector<8x64xi1>, vector<8x64xf32>
    %cst_124 = arith.constant dense<0.000000e+00> : vector<8x64xf32>
    %263 = tpu.matmul %259, %246, %cst_124 {dimension_numbers = #tpu.dot_dimension_numbers<[1], [0], [0], [1], [0, 0, 1, 1], [], []>} : vector<8x64xf32>, vector<64x64xf32>, vector<8x64xf32> -> vector<8x64xf32>
    %264 = arith.addf %262, %263 : vector<8x64xf32>
    %265 = math.tanh %264 : vector<8x64xf32>
    %266 = vector.extract_strided_slice %244 {offsets = [24, 0], sizes = [8, 64], strides = [1, 1]} : vector<64x64xf32> to vector<8x64xf32>
    %267 = vector.extract_strided_slice %244 {offsets = [32, 0], sizes = [8, 64], strides = [1, 1]} : vector<64x64xf32> to vector<8x64xf32>
    %268 = arith.select %11, %266, %267 : vector<8x64xi1>, vector<8x64xf32>
    %cst_125 = arith.constant dense<0.000000e+00> : vector<8x64xf32>
    %269 = tpu.matmul %265, %246, %cst_125 {dimension_numbers = #tpu.dot_dimension_numbers<[1], [0], [0], [1], [0, 0, 1, 1], [], []>} : vector<8x64xf32>, vector<64x64xf32>, vector<8x64xf32> -> vector<8x64xf32>
    %270 = arith.addf %268, %269 : vector<8x64xf32>
    %271 = math.tanh %270 : vector<8x64xf32>
    %272 = vector.extract_strided_slice %244 {offsets = [32, 0], sizes = [8, 64], strides = [1, 1]} : vector<64x64xf32> to vector<8x64xf32>
    %273 = vector.extract_strided_slice %244 {offsets = [24, 0], sizes = [8, 64], strides = [1, 1]} : vector<64x64xf32> to vector<8x64xf32>
    %274 = arith.select %11, %272, %273 : vector<8x64xi1>, vector<8x64xf32>
    %cst_126 = arith.constant dense<0.000000e+00> : vector<8x64xf32>
    %275 = tpu.matmul %271, %246, %cst_126 {dimension_numbers = #tpu.dot_dimension_numbers<[1], [0], [0], [1], [0, 0, 1, 1], [], []>} : vector<8x64xf32>, vector<64x64xf32>, vector<8x64xf32> -> vector<8x64xf32>
    %276 = arith.addf %274, %275 : vector<8x64xf32>
    %277 = math.tanh %276 : vector<8x64xf32>
    %278 = vector.extract_strided_slice %244 {offsets = [40, 0], sizes = [8, 64], strides = [1, 1]} : vector<64x64xf32> to vector<8x64xf32>
    %279 = vector.extract_strided_slice %244 {offsets = [16, 0], sizes = [8, 64], strides = [1, 1]} : vector<64x64xf32> to vector<8x64xf32>
    %280 = arith.select %11, %278, %279 : vector<8x64xi1>, vector<8x64xf32>
    %cst_127 = arith.constant dense<0.000000e+00> : vector<8x64xf32>
    %281 = tpu.matmul %277, %246, %cst_127 {dimension_numbers = #tpu.dot_dimension_numbers<[1], [0], [0], [1], [0, 0, 1, 1], [], []>} : vector<8x64xf32>, vector<64x64xf32>, vector<8x64xf32> -> vector<8x64xf32>
    %282 = arith.addf %280, %281 : vector<8x64xf32>
    %283 = math.tanh %282 : vector<8x64xf32>
    %284 = vector.extract_strided_slice %244 {offsets = [48, 0], sizes = [8, 64], strides = [1, 1]} : vector<64x64xf32> to vector<8x64xf32>
    %285 = vector.extract_strided_slice %244 {offsets = [8, 0], sizes = [8, 64], strides = [1, 1]} : vector<64x64xf32> to vector<8x64xf32>
    %286 = arith.select %11, %284, %285 : vector<8x64xi1>, vector<8x64xf32>
    %cst_128 = arith.constant dense<0.000000e+00> : vector<8x64xf32>
    %287 = tpu.matmul %283, %246, %cst_128 {dimension_numbers = #tpu.dot_dimension_numbers<[1], [0], [0], [1], [0, 0, 1, 1], [], []>} : vector<8x64xf32>, vector<64x64xf32>, vector<8x64xf32> -> vector<8x64xf32>
    %288 = arith.addf %286, %287 : vector<8x64xf32>
    %289 = math.tanh %288 : vector<8x64xf32>
    %290 = vector.extract_strided_slice %244 {offsets = [56, 0], sizes = [8, 64], strides = [1, 1]} : vector<64x64xf32> to vector<8x64xf32>
    %291 = vector.extract_strided_slice %244 {offsets = [0, 0], sizes = [8, 64], strides = [1, 1]} : vector<64x64xf32> to vector<8x64xf32>
    %292 = arith.select %11, %290, %291 : vector<8x64xi1>, vector<8x64xf32>
    %cst_129 = arith.constant dense<0.000000e+00> : vector<8x64xf32>
    %293 = tpu.matmul %289, %246, %cst_129 {dimension_numbers = #tpu.dot_dimension_numbers<[1], [0], [0], [1], [0, 0, 1, 1], [], []>} : vector<8x64xf32>, vector<64x64xf32>, vector<8x64xf32> -> vector<8x64xf32>
    %294 = arith.addf %292, %293 : vector<8x64xf32>
    %295 = math.tanh %294 : vector<8x64xf32>
    %296 = arith.select %11, %253, %295 : vector<8x64xi1>, vector<8x64xf32>
    %c0_130 = arith.constant 0 : index
    %c0_131 = arith.constant 0 : index
    %297 = vector.load %arg12[%c0_130, %c0_131] : memref<64x64xf32, #tpu.memory_space<vmem>>, vector<8x64xf32>
    tpu.vector_store %arg12[%c0_130, %c0_131], %296 {strides = array<i32>} : memref<64x64xf32, #tpu.memory_space<vmem>>, vector<8x64xf32>,
    %298 = arith.select %11, %259, %289 : vector<8x64xi1>, vector<8x64xf32>
    %c8_132 = arith.constant 8 : index
    %c0_133 = arith.constant 0 : index
    %299 = vector.load %arg12[%c8_132, %c0_133] : memref<64x64xf32, #tpu.memory_space<vmem>>, vector<8x64xf32>
    tpu.vector_store %arg12[%c8_132, %c0_133], %298 {strides = array<i32>} : memref<64x64xf32, #tpu.memory_space<vmem>>, vector<8x64xf32>,
    %300 = arith.select %11, %265, %283 : vector<8x64xi1>, vector<8x64xf32>
    %c16_134 = arith.constant 16 : index
    %c0_135 = arith.constant 0 : index
    %301 = vector.load %arg12[%c16_134, %c0_135] : memref<64x64xf32, #tpu.memory_space<vmem>>, vector<8x64xf32>
    tpu.vector_store %arg12[%c16_134, %c0_135], %300 {strides = array<i32>} : memref<64x64xf32, #tpu.memory_space<vmem>>, vector<8x64xf32>,
    %302 = arith.select %11, %271, %277 : vector<8x64xi1>, vector<8x64xf32>
    %c24_136 = arith.constant 24 : index
    %c0_137 = arith.constant 0 : index
    %303 = vector.load %arg12[%c24_136, %c0_137] : memref<64x64xf32, #tpu.memory_space<vmem>>, vector<8x64xf32>
    tpu.vector_store %arg12[%c24_136, %c0_137], %302 {strides = array<i32>} : memref<64x64xf32, #tpu.memory_space<vmem>>, vector<8x64xf32>,
    %304 = arith.select %11, %277, %271 : vector<8x64xi1>, vector<8x64xf32>
    %c32_138 = arith.constant 32 : index
    %c0_139 = arith.constant 0 : index
    %305 = vector.load %arg12[%c32_138, %c0_139] : memref<64x64xf32, #tpu.memory_space<vmem>>, vector<8x64xf32>
    tpu.vector_store %arg12[%c32_138, %c0_139], %304 {strides = array<i32>} : memref<64x64xf32, #tpu.memory_space<vmem>>, vector<8x64xf32>,
    %306 = arith.select %11, %283, %265 : vector<8x64xi1>, vector<8x64xf32>
    %c40_140 = arith.constant 40 : index
    %c0_141 = arith.constant 0 : index
    %307 = vector.load %arg12[%c40_140, %c0_141] : memref<64x64xf32, #tpu.memory_space<vmem>>, vector<8x64xf32>
    tpu.vector_store %arg12[%c40_140, %c0_141], %306 {strides = array<i32>} : memref<64x64xf32, #tpu.memory_space<vmem>>, vector<8x64xf32>,
    %308 = arith.select %11, %289, %259 : vector<8x64xi1>, vector<8x64xf32>
    %c48_142 = arith.constant 48 : index
    %c0_143 = arith.constant 0 : index
    %309 = vector.load %arg12[%c48_142, %c0_143] : memref<64x64xf32, #tpu.memory_space<vmem>>, vector<8x64xf32>
    tpu.vector_store %arg12[%c48_142, %c0_143], %308 {strides = array<i32>} : memref<64x64xf32, #tpu.memory_space<vmem>>, vector<8x64xf32>,
    %310 = arith.select %11, %295, %253 : vector<8x64xi1>, vector<8x64xf32>
    %c56_144 = arith.constant 56 : index
    %c0_145 = arith.constant 0 : index
    %311 = vector.load %arg12[%c56_144, %c0_145] : memref<64x64xf32, #tpu.memory_space<vmem>>, vector<8x64xf32>
    tpu.vector_store %arg12[%c56_144, %c0_145], %310 {strides = array<i32>} : memref<64x64xf32, #tpu.memory_space<vmem>>, vector<8x64xf32>,
    %c0_146 = arith.constant 0 : index
    %c0_147 = arith.constant 0 : index
    %312 = vector.load %arg12[%c0_146, %c0_147] : memref<64x64xf32, #tpu.memory_space<vmem>>, vector<64x64xf32>
    %c4 = arith.constant 4 : index
    %c0_148 = arith.constant 0 : index
    %c0_149 = arith.constant 0 : index
    %313 = vector.load %arg3[%c4, %c0_148, %c0_149] : memref<5x64x64xf32, #tpu.memory_space<vmem>>, vector<1x64x64xf32>
    %314 = vector.shape_cast %313 : vector<1x64x64xf32> to vector<64x64xf32>
    %cst_150 = arith.constant dense<0.000000e+00> : vector<64x64xf32>
    %315 = tpu.matmul %312, %314, %cst_150 {dimension_numbers = #tpu.dot_dimension_numbers<[1], [0], [0], [1], [0, 0, 1, 1], [], []>} : vector<64x64xf32>, vector<64x64xf32>, vector<64x64xf32> -> vector<64x64xf32>
    %c4_151 = arith.constant 4 : index
    %c0_152 = arith.constant 0 : index
    %c0_153 = arith.constant 0 : index
    %316 = vector.load %arg5[%c4_151, %c0_152, %c0_153] : memref<5x1x64xf32, #tpu.memory_space<vmem>>, vector<1x1x64xf32>
    %317 = vector.shape_cast %316 : vector<1x1x64xf32> to vector<1x64xf32>
    %318 = vector.broadcast %317 : vector<1x64xf32> to vector<64x64xf32>
    %319 = arith.addf %315, %318 : vector<64x64xf32>
    %c4_154 = arith.constant 4 : index
    %c0_155 = arith.constant 0 : index
    %c0_156 = arith.constant 0 : index
    %320 = vector.load %arg4[%c4_154, %c0_155, %c0_156] : memref<5x64x64xf32, #tpu.memory_space<vmem>>, vector<1x64x64xf32>
    %321 = vector.shape_cast %320 : vector<1x64x64xf32> to vector<64x64xf32>
    %cst_157 = arith.constant 0.000000e+00 : f32
    %322 = vector.broadcast %cst_157 : f32 to vector<8x64xf32>
    %323 = vector.extract_strided_slice %319 {offsets = [0, 0], sizes = [8, 64], strides = [1, 1]} : vector<64x64xf32> to vector<8x64xf32>
    %324 = vector.extract_strided_slice %319 {offsets = [56, 0], sizes = [8, 64], strides = [1, 1]} : vector<64x64xf32> to vector<8x64xf32>
    %325 = arith.select %11, %323, %324 : vector<8x64xi1>, vector<8x64xf32>
    %cst_158 = arith.constant dense<0.000000e+00> : vector<8x64xf32>
    %326 = tpu.matmul %322, %321, %cst_158 {dimension_numbers = #tpu.dot_dimension_numbers<[1], [0], [0], [1], [0, 0, 1, 1], [], []>} : vector<8x64xf32>, vector<64x64xf32>, vector<8x64xf32> -> vector<8x64xf32>
    %327 = arith.addf %325, %326 : vector<8x64xf32>
    %328 = math.tanh %327 : vector<8x64xf32>
    %329 = vector.extract_strided_slice %319 {offsets = [8, 0], sizes = [8, 64], strides = [1, 1]} : vector<64x64xf32> to vector<8x64xf32>
    %330 = vector.extract_strided_slice %319 {offsets = [48, 0], sizes = [8, 64], strides = [1, 1]} : vector<64x64xf32> to vector<8x64xf32>
    %331 = arith.select %11, %329, %330 : vector<8x64xi1>, vector<8x64xf32>
    %cst_159 = arith.constant dense<0.000000e+00> : vector<8x64xf32>
    %332 = tpu.matmul %328, %321, %cst_159 {dimension_numbers = #tpu.dot_dimension_numbers<[1], [0], [0], [1], [0, 0, 1, 1], [], []>} : vector<8x64xf32>, vector<64x64xf32>, vector<8x64xf32> -> vector<8x64xf32>
    %333 = arith.addf %331, %332 : vector<8x64xf32>
    %334 = math.tanh %333 : vector<8x64xf32>
    %335 = vector.extract_strided_slice %319 {offsets = [16, 0], sizes = [8, 64], strides = [1, 1]} : vector<64x64xf32> to vector<8x64xf32>
    %336 = vector.extract_strided_slice %319 {offsets = [40, 0], sizes = [8, 64], strides = [1, 1]} : vector<64x64xf32> to vector<8x64xf32>
    %337 = arith.select %11, %335, %336 : vector<8x64xi1>, vector<8x64xf32>
    %cst_160 = arith.constant dense<0.000000e+00> : vector<8x64xf32>
    %338 = tpu.matmul %334, %321, %cst_160 {dimension_numbers = #tpu.dot_dimension_numbers<[1], [0], [0], [1], [0, 0, 1, 1], [], []>} : vector<8x64xf32>, vector<64x64xf32>, vector<8x64xf32> -> vector<8x64xf32>
    %339 = arith.addf %337, %338 : vector<8x64xf32>
    %340 = math.tanh %339 : vector<8x64xf32>
    %341 = vector.extract_strided_slice %319 {offsets = [24, 0], sizes = [8, 64], strides = [1, 1]} : vector<64x64xf32> to vector<8x64xf32>
    %342 = vector.extract_strided_slice %319 {offsets = [32, 0], sizes = [8, 64], strides = [1, 1]} : vector<64x64xf32> to vector<8x64xf32>
    %343 = arith.select %11, %341, %342 : vector<8x64xi1>, vector<8x64xf32>
    %cst_161 = arith.constant dense<0.000000e+00> : vector<8x64xf32>
    %344 = tpu.matmul %340, %321, %cst_161 {dimension_numbers = #tpu.dot_dimension_numbers<[1], [0], [0], [1], [0, 0, 1, 1], [], []>} : vector<8x64xf32>, vector<64x64xf32>, vector<8x64xf32> -> vector<8x64xf32>
    %345 = arith.addf %343, %344 : vector<8x64xf32>
    %346 = math.tanh %345 : vector<8x64xf32>
    %347 = vector.extract_strided_slice %319 {offsets = [32, 0], sizes = [8, 64], strides = [1, 1]} : vector<64x64xf32> to vector<8x64xf32>
    %348 = vector.extract_strided_slice %319 {offsets = [24, 0], sizes = [8, 64], strides = [1, 1]} : vector<64x64xf32> to vector<8x64xf32>
    %349 = arith.select %11, %347, %348 : vector<8x64xi1>, vector<8x64xf32>
    %cst_162 = arith.constant dense<0.000000e+00> : vector<8x64xf32>
    %350 = tpu.matmul %346, %321, %cst_162 {dimension_numbers = #tpu.dot_dimension_numbers<[1], [0], [0], [1], [0, 0, 1, 1], [], []>} : vector<8x64xf32>, vector<64x64xf32>, vector<8x64xf32> -> vector<8x64xf32>
    %351 = arith.addf %349, %350 : vector<8x64xf32>
    %352 = math.tanh %351 : vector<8x64xf32>
    %353 = vector.extract_strided_slice %319 {offsets = [40, 0], sizes = [8, 64], strides = [1, 1]} : vector<64x64xf32> to vector<8x64xf32>
    %354 = vector.extract_strided_slice %319 {offsets = [16, 0], sizes = [8, 64], strides = [1, 1]} : vector<64x64xf32> to vector<8x64xf32>
    %355 = arith.select %11, %353, %354 : vector<8x64xi1>, vector<8x64xf32>
    %cst_163 = arith.constant dense<0.000000e+00> : vector<8x64xf32>
    %356 = tpu.matmul %352, %321, %cst_163 {dimension_numbers = #tpu.dot_dimension_numbers<[1], [0], [0], [1], [0, 0, 1, 1], [], []>} : vector<8x64xf32>, vector<64x64xf32>, vector<8x64xf32> -> vector<8x64xf32>
    %357 = arith.addf %355, %356 : vector<8x64xf32>
    %358 = math.tanh %357 : vector<8x64xf32>
    %359 = vector.extract_strided_slice %319 {offsets = [48, 0], sizes = [8, 64], strides = [1, 1]} : vector<64x64xf32> to vector<8x64xf32>
    %360 = vector.extract_strided_slice %319 {offsets = [8, 0], sizes = [8, 64], strides = [1, 1]} : vector<64x64xf32> to vector<8x64xf32>
    %361 = arith.select %11, %359, %360 : vector<8x64xi1>, vector<8x64xf32>
    %cst_164 = arith.constant dense<0.000000e+00> : vector<8x64xf32>
    %362 = tpu.matmul %358, %321, %cst_164 {dimension_numbers = #tpu.dot_dimension_numbers<[1], [0], [0], [1], [0, 0, 1, 1], [], []>} : vector<8x64xf32>, vector<64x64xf32>, vector<8x64xf32> -> vector<8x64xf32>
    %363 = arith.addf %361, %362 : vector<8x64xf32>
    %364 = math.tanh %363 : vector<8x64xf32>
    %365 = vector.extract_strided_slice %319 {offsets = [56, 0], sizes = [8, 64], strides = [1, 1]} : vector<64x64xf32> to vector<8x64xf32>
    %366 = vector.extract_strided_slice %319 {offsets = [0, 0], sizes = [8, 64], strides = [1, 1]} : vector<64x64xf32> to vector<8x64xf32>
    %367 = arith.select %11, %365, %366 : vector<8x64xi1>, vector<8x64xf32>
    %cst_165 = arith.constant dense<0.000000e+00> : vector<8x64xf32>
    %368 = tpu.matmul %364, %321, %cst_165 {dimension_numbers = #tpu.dot_dimension_numbers<[1], [0], [0], [1], [0, 0, 1, 1], [], []>} : vector<8x64xf32>, vector<64x64xf32>, vector<8x64xf32> -> vector<8x64xf32>
    %369 = arith.addf %367, %368 : vector<8x64xf32>
    %370 = math.tanh %369 : vector<8x64xf32>
    %371 = arith.select %11, %328, %370 : vector<8x64xi1>, vector<8x64xf32>
    %c0_166 = arith.constant 0 : index
    %c0_167 = arith.constant 0 : index
    %372 = vector.load %arg12[%c0_166, %c0_167] : memref<64x64xf32, #tpu.memory_space<vmem>>, vector<8x64xf32>
    tpu.vector_store %arg12[%c0_166, %c0_167], %371 {strides = array<i32>} : memref<64x64xf32, #tpu.memory_space<vmem>>, vector<8x64xf32>,
    %373 = arith.select %11, %334, %364 : vector<8x64xi1>, vector<8x64xf32>
    %c8_168 = arith.constant 8 : index
    %c0_169 = arith.constant 0 : index
    %374 = vector.load %arg12[%c8_168, %c0_169] : memref<64x64xf32, #tpu.memory_space<vmem>>, vector<8x64xf32>
    tpu.vector_store %arg12[%c8_168, %c0_169], %373 {strides = array<i32>} : memref<64x64xf32, #tpu.memory_space<vmem>>, vector<8x64xf32>,
    %375 = arith.select %11, %340, %358 : vector<8x64xi1>, vector<8x64xf32>
    %c16_170 = arith.constant 16 : index
    %c0_171 = arith.constant 0 : index
    %376 = vector.load %arg12[%c16_170, %c0_171] : memref<64x64xf32, #tpu.memory_space<vmem>>, vector<8x64xf32>
    tpu.vector_store %arg12[%c16_170, %c0_171], %375 {strides = array<i32>} : memref<64x64xf32, #tpu.memory_space<vmem>>, vector<8x64xf32>,
    %377 = arith.select %11, %346, %352 : vector<8x64xi1>, vector<8x64xf32>
    %c24_172 = arith.constant 24 : index
    %c0_173 = arith.constant 0 : index
    %378 = vector.load %arg12[%c24_172, %c0_173] : memref<64x64xf32, #tpu.memory_space<vmem>>, vector<8x64xf32>
    tpu.vector_store %arg12[%c24_172, %c0_173], %377 {strides = array<i32>} : memref<64x64xf32, #tpu.memory_space<vmem>>, vector<8x64xf32>,
    %379 = arith.select %11, %352, %346 : vector<8x64xi1>, vector<8x64xf32>
    %c32_174 = arith.constant 32 : index
    %c0_175 = arith.constant 0 : index
    %380 = vector.load %arg12[%c32_174, %c0_175] : memref<64x64xf32, #tpu.memory_space<vmem>>, vector<8x64xf32>
    tpu.vector_store %arg12[%c32_174, %c0_175], %379 {strides = array<i32>} : memref<64x64xf32, #tpu.memory_space<vmem>>, vector<8x64xf32>,
    %381 = arith.select %11, %358, %340 : vector<8x64xi1>, vector<8x64xf32>
    %c40_176 = arith.constant 40 : index
    %c0_177 = arith.constant 0 : index
    %382 = vector.load %arg12[%c40_176, %c0_177] : memref<64x64xf32, #tpu.memory_space<vmem>>, vector<8x64xf32>
    tpu.vector_store %arg12[%c40_176, %c0_177], %381 {strides = array<i32>} : memref<64x64xf32, #tpu.memory_space<vmem>>, vector<8x64xf32>,
    %383 = arith.select %11, %364, %334 : vector<8x64xi1>, vector<8x64xf32>
    %c48_178 = arith.constant 48 : index
    %c0_179 = arith.constant 0 : index
    %384 = vector.load %arg12[%c48_178, %c0_179] : memref<64x64xf32, #tpu.memory_space<vmem>>, vector<8x64xf32>
    tpu.vector_store %arg12[%c48_178, %c0_179], %383 {strides = array<i32>} : memref<64x64xf32, #tpu.memory_space<vmem>>, vector<8x64xf32>,
    %385 = arith.select %11, %370, %328 : vector<8x64xi1>, vector<8x64xf32>
    %c56_180 = arith.constant 56 : index
    %c0_181 = arith.constant 0 : index
    %386 = vector.load %arg12[%c56_180, %c0_181] : memref<64x64xf32, #tpu.memory_space<vmem>>, vector<8x64xf32>
    tpu.vector_store %arg12[%c56_180, %c0_181], %385 {strides = array<i32>} : memref<64x64xf32, #tpu.memory_space<vmem>>, vector<8x64xf32>,
    %c0_182 = arith.constant 0 : index
    %c0_183 = arith.constant 0 : index
    %387 = vector.load %arg12[%c0_182, %c0_183] : memref<64x64xf32, #tpu.memory_space<vmem>>, vector<64x64xf32>
    %c0_184 = arith.constant 0 : index
    %c0_185 = arith.constant 0 : index
    %388 = vector.load %arg6[%c0_184, %c0_185] : memref<64x128xf32, #tpu.memory_space<vmem>>, vector<64x128xf32>
    %cst_186 = arith.constant dense<0.000000e+00> : vector<64x128xf32>
    %389 = tpu.matmul %387, %388, %cst_186 {dimension_numbers = #tpu.dot_dimension_numbers<[1], [0], [0], [1], [0, 0, 1, 1], [], []>} : vector<64x64xf32>, vector<64x128xf32>, vector<64x128xf32> -> vector<64x128xf32>
    %c0_187 = arith.constant 0 : index
    %c0_188 = arith.constant 0 : index
    %390 = vector.load %arg7[%c0_187, %c0_188] : memref<1x128xf32, #tpu.memory_space<vmem>>, vector<1x128xf32>
    %391 = vector.broadcast %390 : vector<1x128xf32> to vector<64x128xf32>
    %392 = arith.addf %389, %391 : vector<64x128xf32>
    %393 = arith.negf %392 : vector<64x128xf32>
    %394 = math.exp %393 : vector<64x128xf32>
    %cst_189 = arith.constant 1.000000e+00 : f32
    %395 = vector.broadcast %cst_189 : f32 to vector<64x128xf32>
    %396 = arith.addf %395, %394 : vector<64x128xf32>
    %397 = arith.divf %395, %396 : vector<64x128xf32>
    %c0_190 = arith.constant 0 : index
    %c0_191 = arith.constant 0 : index
    %398 = vector.load %arg10[%c0_190, %c0_191] : memref<64x128xf32, #tpu.memory_space<vmem>>, vector<64x128xf32>
    tpu.vector_store %arg10[%c0_190, %c0_191], %397 {strides = array<i32>} : memref<64x128xf32, #tpu.memory_space<vmem>>, vector<64x128xf32>,
    %c0_192 = arith.constant 0 : index
    %c0_193 = arith.constant 0 : index
    %399 = vector.load %arg8[%c0_192, %c0_193] : memref<64x128xf32, #tpu.memory_space<vmem>>, vector<64x128xf32>
    %cst_194 = arith.constant dense<0.000000e+00> : vector<64x128xf32>
    %400 = tpu.matmul %387, %399, %cst_194 {dimension_numbers = #tpu.dot_dimension_numbers<[1], [0], [0], [1], [0, 0, 1, 1], [], []>} : vector<64x64xf32>, vector<64x128xf32>, vector<64x128xf32> -> vector<64x128xf32>
    %c0_195 = arith.constant 0 : index
    %c0_196 = arith.constant 0 : index
    %401 = vector.load %arg9[%c0_195, %c0_196] : memref<1x128xf32, #tpu.memory_space<vmem>>, vector<1x128xf32>
    %402 = vector.broadcast %401 : vector<1x128xf32> to vector<64x128xf32>
    %403 = arith.addf %400, %402 : vector<64x128xf32>
    %c0_197 = arith.constant 0 : index
    %c0_198 = arith.constant 0 : index
    %404 = vector.load %arg11[%c0_197, %c0_198] : memref<64x128xf32, #tpu.memory_space<vmem>>, vector<64x128xf32>
    tpu.vector_store %arg11[%c0_197, %c0_198], %403 {strides = array<i32>} : memref<64x128xf32, #tpu.memory_space<vmem>>, vector<64x128xf32>,
    return
  }
}

</mosaic_0001>

<llo_original>
// kernel: myrnn_forward.1
$region0: #{myrnn_forward.1}
  #allocation0 [shape = 'u32[]', space=smem, size = 0x4, offset = 0x4, fixed_abs, tag = 'smem constant byte address 0x4 - core index']
  #allocation1 [shape = 'u32[72,128]{1,0:T(1,128)}', space=vmem, size = 0x9000, scoped, tag = 'internal scratch']
  #allocation2 [shape = 'f32[64,64]{1,0:T(8,128)}', space=vmem, size = 0x8000, scoped, tag = 'scratch operand']
  %s0 = inlined_call_operand.vmem [shape: f32[64,16], index: 0, kind: input, shape index: {}]
  %s1 = inlined_call_operand.vmem [shape: f32[16,64], index: 1, kind: input, shape index: {}]
  %s2 = inlined_call_operand.vmem [shape: f32[1,64], index: 2, kind: input, shape index: {}]
  %s3 = inlined_call_operand.hbm [shape: f32[5,64,64], index: 3, kind: input, shape index: {}]
  %s4 = inlined_call_operand.hbm [shape: f32[5,64,64], index: 4, kind: input, shape index: {}]
  %s5 = inlined_call_operand.vmem [shape: f32[5,1,64], index: 5, kind: input, shape index: {}]
  %s6 = inlined_call_operand.vmem [shape: f32[64,128], index: 6, kind: input, shape index: {}]
  %s7 = inlined_call_operand.vmem [shape: f32[1,128], index: 7, kind: input, shape index: {}]
  %s8 = inlined_call_operand.hbm [shape: f32[64,128], index: 8, kind: input, shape index: {}]
  %s9 = inlined_call_operand.vmem [shape: f32[1,128], index: 9, kind: input, shape index: {}]
  %s10 = inlined_call_operand.vmem [shape: f32[64,128], index: 10, kind: output, shape index: {0}]
  %s11 = inlined_call_operand.vmem [shape: f32[64,128], index: 11, kind: output, shape index: {1}]
  %12 = xla_tuple %s10, %s11
  %s13 = sld [smem:[#allocation0]]
  $region70: #{myrnn_forward.1} parent=0
    _
  %s15 = ssub.s32 1, %s13
  %s16 = scalar_select 0, %s15, %s13
  $region1: #{myrnn_forward.1} parent=0
    #allocation3 [shape = 'u8[163840]{0}', space=vmem, size = 0x28000, scoped, tag = 'input window, operand 3, single buffered']
    #allocation4 [shape = 's32[1]{0}', space=sflag, size = 0x4, scoped, tag = 'scoped memory for myrnn_forward.1']
    #allocation5 [shape = 'u8[163840]{0}', space=vmem, size = 0x28000, scoped, tag = 'input window, operand 4, single buffered']
    #allocation6 [shape = 's32[1]{0}', space=sflag, size = 0x4, scoped, tag = 'scoped memory for myrnn_forward.1']
    #allocation7 [shape = 'u8[32768]{0}', space=vmem, size = 0x8000, scoped, tag = 'input window, operand 8, single buffered']
    %17 = vsyncpa [#allocation4], 0
    %18 = vsyncpa [#allocation6], 0
    // Predicated region
    $region2: #{myrnn_forward.1} parent=1 // pred_check
      _
    $region3: #{myrnn_forward.1} parent=1 // pred_check_branch
      %20 = sbr.rel (0) target = $region5
    $region4: #{myrnn_forward.1} parent=1 // pred_region
      _
    $region5: #{myrnn_forward.1} parent=1 // pred_fallthru
      _
    // Predicated region
    $region6: #{myrnn_forward.1} parent=1 // pred_check
      _
    $region7: #{myrnn_forward.1} parent=1 // pred_check_branch
      %22 = sbr.rel (0) target = $region9
    $region8: #{myrnn_forward.1} parent=1 // pred_region
      _
    $region9: #{myrnn_forward.1} parent=1 // pred_fallthru
      _
    // Predicated region
    $region10: #{myrnn_forward.1} parent=1 // pred_check
      _
    $region11: #{myrnn_forward.1} parent=1 // pred_check_branch
      %24 = sbr.rel (0) target = $region13
    $region12: #{myrnn_forward.1} parent=1 // pred_region
      _
    $region13: #{myrnn_forward.1} parent=1 // pred_fallthru
      _
    // Predicated region
    $region14: #{myrnn_forward.1} parent=1 // pred_check
      _
    $region15: #{myrnn_forward.1} parent=1 // pred_check_branch
      %26 = sbr.rel (0) target = $region17
    $region16: #{myrnn_forward.1} parent=1 // pred_region
      %28 = vsyncadd [#allocation4], 0
      %s29 = sshll.u32 %s3, 4
      %s30 = int_to_ptr.hbm [resolvable:$true] %s29
      %s31 = sshll.u32 [#allocation3], 4
      %s32 = int_to_ptr.vmem [resolvable:$true] %s31
      %37 = dma.hbm_to_vmem [thread:$0]  %s30, 5120, %s32, [#allocation4], 128, 128, 8
    $region17: #{myrnn_forward.1} parent=1 // pred_fallthru
      _
    // Predicated region
    $region18: #{myrnn_forward.1} parent=1 // pred_check
      _
    $region19: #{myrnn_forward.1} parent=1 // pred_check_branch
      %39 = sbr.rel (0) target = $region21
    $region20: #{myrnn_forward.1} parent=1 // pred_region
      %41 = vsyncadd [#allocation6], 0
      %s42 = sshll.u32 %s4, 4
      %s43 = int_to_ptr.hbm [resolvable:$true] %s42
      %s44 = sshll.u32 [#allocation5], 4
      %s45 = int_to_ptr.vmem [resolvable:$true] %s44
      %50 = dma.hbm_to_vmem [thread:$0]  %s43, 5120, %s45, [#allocation6], 128, 128, 8
    $region21: #{myrnn_forward.1} parent=1 // pred_fallthru
      _
    // Predicated region
    $region22: #{myrnn_forward.1} parent=1 // pred_check
      _
    $region23: #{myrnn_forward.1} parent=1 // pred_check_branch
      %52 = sbr.rel (0) target = $region25
    $region24: #{myrnn_forward.1} parent=1 // pred_region
      _
    $region25: #{myrnn_forward.1} parent=1 // pred_fallthru
      _
    // Predicated region
    $region26: #{myrnn_forward.1} parent=1 // pred_check
      _
    $region27: #{myrnn_forward.1} parent=1 // pred_check_branch
      %54 = sbr.rel (0) target = $region29
    $region28: #{myrnn_forward.1} parent=1 // pred_region
      _
    $region29: #{myrnn_forward.1} parent=1 // pred_fallthru
      _
    // Predicated region
    $region30: #{myrnn_forward.1} parent=1 // pred_check
      _
    $region31: #{myrnn_forward.1} parent=1 // pred_check_branch
      %56 = sbr.rel (0) target = $region33
    $region32: #{myrnn_forward.1} parent=1 // pred_region
      _
    $region33: #{myrnn_forward.1} parent=1 // pred_fallthru
      _
    // Predicated region
    $region34: #{myrnn_forward.1} parent=1 // pred_check
      _
    $region35: #{myrnn_forward.1} parent=1 // pred_check_branch
      %58 = sbr.rel (0) target = $region37
    $region36: #{myrnn_forward.1} parent=1 // pred_region
      %60 = vsyncadd [#allocation6], 0
      %s61 = sshll.u32 %s8, 4
      %s62 = int_to_ptr.hbm [resolvable:$true] %s61
      %s63 = sshll.u32 [#allocation7], 4
      %s64 = int_to_ptr.vmem [resolvable:$true] %s63
      %69 = dma.hbm_to_vmem [thread:$0]  %s62, 1024, %s64, [#allocation6], 128, 128, 8
    $region37: #{myrnn_forward.1} parent=1 // pred_fallthru
      _
    // Predicated region
    $region38: #{myrnn_forward.1} parent=1 // pred_check
      _
    $region39: #{myrnn_forward.1} parent=1 // pred_check_branch
      %71 = sbr.rel (0) target = $region41
    $region40: #{myrnn_forward.1} parent=1 // pred_region
      _
    $region41: #{myrnn_forward.1} parent=1 // pred_fallthru
      _
    // Predicated region
    $region42: #{myrnn_forward.1} parent=1 // pred_check
      _
    $region43: #{myrnn_forward.1} parent=1 // pred_check_branch
      %73 = sbr.rel (0) target = $region45
    $region44: #{myrnn_forward.1} parent=1 // pred_region
      %75 = dma.done [#allocation4], 5120
    $region45: #{myrnn_forward.1} parent=1 // pred_fallthru
      _
    // Predicated region
    $region46: #{myrnn_forward.1} parent=1 // pred_check
      _
    $region47: #{myrnn_forward.1} parent=1 // pred_check_branch
      %77 = sbr.rel (0) target = $region49
    $region48: #{myrnn_forward.1} parent=1 // pred_region
      %79 = dma.done [#allocation6], 5120
    $region49: #{myrnn_forward.1} parent=1 // pred_fallthru
      _
    // Predicated region
    $region50: #{myrnn_forward.1} parent=1 // pred_check
      _
    $region51: #{myrnn_forward.1} parent=1 // pred_check_branch
      %81 = sbr.rel (0) target = $region53
    $region52: #{myrnn_forward.1} parent=1 // pred_region
      %83 = dma.done [#allocation6], 1024
    $region53: #{myrnn_forward.1} parent=1 // pred_fallthru
      _
    %v84 = vld [vmem:[%s0] sm:$0xff]
    %v85 = vld [vmem:[%s0 + $0x8] sm:$0xff]
    %v86 = vld [vmem:[%s0 + $0x10] sm:$0xff]
    %v87 = vld [vmem:[%s0 + $0x18] sm:$0xff]
    %v88 = vld [vmem:[%s0 + $0x20] sm:$0xff]
    %v89 = vld [vmem:[%s0 + $0x28] sm:$0xff]
    %v90 = vld [vmem:[%s0 + $0x30] sm:$0xff]
    %v91 = vld [vmem:[%s0 + $0x38] sm:$0xff]
    %v92 = vld [vmem:[%s1] sm:$0xff]
    %v93 = vld [vmem:[%s1 + $0x8] sm:$0xff]
    %v94 = vld [vmem:[%s2] sm:$0x1]
    %v96 = vperm.slane %v94, 0
    %vm98 = vcmask 130048
    %v100 = vsel %vm98, %v84, 0
    %v103 = vsel %vm98, %v85, 0
    %v106 = vsel %vm98, %v86, 0
    %v109 = vsel %vm98, %v87, 0
    %v112 = vsel %vm98, %v88, 0
    %v115 = vsel %vm98, %v89, 0
    %v118 = vsel %vm98, %v90, 0
    %v121 = vsel %vm98, %v91, 0
    %123 = vmatpush.msra.mxu0 0.0
    %124 = vmatpush.msra.mxu0 0.0
    %125 = vmatpush.msra.mxu0 0.0
    %126 = vmatpush.msra.mxu0 0.0
    %127 = vmatpush.msra.mxu0 0.0
    %128 = vmatpush.msra.mxu0 0.0
    %129 = vmatpush.msra.mxu0 0.0
    %130 = vmatpush.msra.mxu0 0.0
    %131 = vmatpush.msra.mxu0 0.0
    %132 = vmatpush.msra.mxu0 0.0
    %133 = vmatpush.msra.mxu0 0.0
    %134 = vmatpush.msra.mxu0 0.0
    %135 = vmatpush.msra.mxu0 0.0
    %136 = vmatpush.msra.mxu0 0.0
    %137 = vmatpush.msra.mxu0 %v93
    %138 = vmatpush.msra.mxu0 %v92
    %139 = vmatmul.f32.gmra.mxu0 %v100
    %v140 = vpop.f32.mrf.mxu0
    %v141 = vadd.f32 %v96, %v140
    %142 = vmatmul.f32.gmra.mxu0 %v103
    %v143 = vpop.f32.mrf.mxu0
    %v144 = vadd.f32 %v96, %v143
    %145 = vmatmul.f32.gmra.mxu0 %v106
    %v146 = vpop.f32.mrf.mxu0
    %v147 = vadd.f32 %v96, %v146
    %148 = vmatmul.f32.gmra.mxu0 %v109
    %v149 = vpop.f32.mrf.mxu0
    %v150 = vadd.f32 %v96, %v149
    %151 = vmatmul.f32.gmra.mxu0 %v112
    %v152 = vpop.f32.mrf.mxu0
    %v153 = vadd.f32 %v96, %v152
    %154 = vmatmul.f32.gmra.mxu0 %v115
    %v155 = vpop.f32.mrf.mxu0
    %v156 = vadd.f32 %v96, %v155
    %157 = vmatmul.f32.gmra.mxu0 %v118
    %v158 = vpop.f32.mrf.mxu0
    %v159 = vadd.f32 %v96, %v158
    %160 = vmatmul.f32.gmra.mxu0 %v121
    %v161 = vpop.f32.mrf.mxu0
    %v162 = vadd.f32 %v96, %v161
    %163 = vdwg.mxu0
    %v164 = vmax.f32 %v141, 0.0
    %v165 = vmax.f32 %v144, 0.0
    %v166 = vmax.f32 %v147, 0.0
    %v167 = vmax.f32 %v150, 0.0
    %v168 = vmax.f32 %v153, 0.0
    %v169 = vmax.f32 %v156, 0.0
    %v170 = vmax.f32 %v159, 0.0
    %v171 = vmax.f32 %v162, 0.0
    %vm172 = vcmask 523264
    %173 = vst.msk [vmem:[#allocation2] sm:$0xff] %vm172, %v164
    %174 = vst.msk [vmem:[#allocation2 + $0x8] sm:$0xff] %vm172, %v165
    %175 = vst.msk [vmem:[#allocation2 + $0x10] sm:$0xff] %vm172, %v166
    %176 = vst.msk [vmem:[#allocation2 + $0x18] sm:$0xff] %vm172, %v167
    %177 = vst.msk [vmem:[#allocation2 + $0x20] sm:$0xff] %vm172, %v168
    %178 = vst.msk [vmem:[#allocation2 + $0x28] sm:$0xff] %vm172, %v169
    %179 = vst.msk [vmem:[#allocation2 + $0x30] sm:$0xff] %vm172, %v170
    %180 = vst.msk [vmem:[#allocation2 + $0x38] sm:$0xff] %vm172, %v171
    %v181 = vlaneseq
    %v182 = vand.u32 %v181, 127
    %vm183 = vcmp.lt.s32.totalorder %v182, 32
    %v184 = vld [vmem:[#allocation2] sm:$0xff]
    %v185 = vld [vmem:[#allocation2 + $0x8] sm:$0xff]
    %v186 = vld [vmem:[#allocation2 + $0x10] sm:$0xff]
    %v187 = vld [vmem:[#allocation2 + $0x18] sm:$0xff]
    %v188 = vld [vmem:[#allocation2 + $0x20] sm:$0xff]
    %v189 = vld [vmem:[#allocation2 + $0x28] sm:$0xff]
    %v190 = vld [vmem:[#allocation2 + $0x30] sm:$0xff]
    %v191 = vld [vmem:[#allocation2 + $0x38] sm:$0xff]
    %v192 = vld [vmem:[#allocation3] sm:$0xff]
    %v193 = vld [vmem:[#allocation3 + $0x8] sm:$0xff]
    %v194 = vld [vmem:[#allocation3 + $0x10] sm:$0xff]
    %v195 = vld [vmem:[#allocation3 + $0x18] sm:$0xff]
    %v196 = vld [vmem:[#allocation3 + $0x20] sm:$0xff]
    %v197 = vld [vmem:[#allocation3 + $0x28] sm:$0xff]
    %v198 = vld [vmem:[#allocation3 + $0x30] sm:$0xff]
    %v199 = vld [vmem:[#allocation3 + $0x38] sm:$0xff]
    %v200 = vld [vmem:[%s5] sm:$0x1]
    %v202 = vperm.slane %v200, 0
    %v205 = vsel %vm172, %v184, 0
    %v208 = vsel %vm172, %v185, 0
    %v211 = vsel %vm172, %v186, 0
    %v214 = vsel %vm172, %v187, 0
    %v217 = vsel %vm172, %v188, 0
    %v220 = vsel %vm172, %v189, 0
    %v223 = vsel %vm172, %v190, 0
    %v226 = vsel %vm172, %v191, 0
    %228 = vmatpush.msra.mxu0 0.0
    %229 = vmatpush.msra.mxu0 0.0
    %230 = vmatpush.msra.mxu0 0.0
    %231 = vmatpush.msra.mxu0 0.0
    %232 = vmatpush.msra.mxu0 0.0
    %233 = vmatpush.msra.mxu0 0.0
    %234 = vmatpush.msra.mxu0 0.0
    %235 = vmatpush.msra.mxu0 0.0
    %236 = vmatpush.msra.mxu0 %v199
    %237 = vmatpush.msra.mxu0 %v198
    %238 = vmatpush.msra.mxu0 %v197
    %239 = vmatpush.msra.mxu0 %v196
    %240 = vmatpush.msra.mxu0 %v195
    %241 = vmatpush.msra.mxu0 %v194
    %242 = vmatpush.msra.mxu0 %v193
    %243 = vmatpush.msra.mxu0 %v192
    %244 = vmatmul.f32.gmra.mxu0 %v205
    %v245 = vpop.f32.mrf.mxu0
    %v246 = vadd.f32 %v202, %v245
    %247 = vmatmul.f32.gmra.mxu0 %v208
    %v248 = vpop.f32.mrf.mxu0
    %v249 = vadd.f32 %v202, %v248
    %250 = vmatmul.f32.gmra.mxu0 %v211
    %v251 = vpop.f32.mrf.mxu0
    %v252 = vadd.f32 %v202, %v251
    %253 = vmatmul.f32.gmra.mxu0 %v214
    %v254 = vpop.f32.mrf.mxu0
    %v255 = vadd.f32 %v202, %v254
    %256 = vmatmul.f32.gmra.mxu0 %v217
    %v257 = vpop.f32.mrf.mxu0
    %v258 = vadd.f32 %v202, %v257
    %259 = vmatmul.f32.gmra.mxu0 %v220
    %v260 = vpop.f32.mrf.mxu0
    %v261 = vadd.f32 %v202, %v260
    %262 = vmatmul.f32.gmra.mxu0 %v223
    %v263 = vpop.f32.mrf.mxu0
    %v264 = vadd.f32 %v202, %v263
    %265 = vmatmul.f32.gmra.mxu0 %v226
    %v266 = vpop.f32.mrf.mxu0
    %v267 = vadd.f32 %v202, %v266
    %268 = vdwg.mxu0
    %v269 = vld [vmem:[#allocation5] sm:$0xff]
    %v270 = vld [vmem:[#allocation5 + $0x8] sm:$0xff]
    %v271 = vld [vmem:[#allocation5 + $0x10] sm:$0xff]
    %v272 = vld [vmem:[#allocation5 + $0x18] sm:$0xff]
    %v273 = vld [vmem:[#allocation5 + $0x20] sm:$0xff]
    %v274 = vld [vmem:[#allocation5 + $0x28] sm:$0xff]
    %v275 = vld [vmem:[#allocation5 + $0x30] sm:$0xff]
    %v276 = vld [vmem:[#allocation5 + $0x38] sm:$0xff]
    %v277 = vsel %vm183, %v246, %v267
    %v279 = vsel %vm172, 0.0, 0
    %281 = vmatpush.msra.mxu0 0.0
    %282 = vmatpush.msra.mxu0 0.0
    %283 = vmatpush.msra.mxu0 0.0
    %284 = vmatpush.msra.mxu0 0.0
    %285 = vmatpush.msra.mxu0 0.0
    %286 = vmatpush.msra.mxu0 0.0
    %287 = vmatpush.msra.mxu0 0.0
    %288 = vmatpush.msra.mxu0 0.0
    %289 = vmatpush.msra.mxu0 %v276
    %290 = vmatpush.msra.mxu0 %v275
    %291 = vmatpush.msra.mxu0 %v274
    %292 = vmatpush.msra.mxu0 %v273
    %293 = vmatpush.msra.mxu0 %v272
    %294 = vmatpush.msra.mxu0 %v271
    %295 = vmatpush.msra.mxu0 %v270
    %296 = vmatpush.msra.mxu0 %v269
    %297 = vmatmul.f32.gmra.mxu0 %v279
    %v298 = vpop.f32.mrf.mxu0
    %v299 = vadd.f32 0.0, %v298
    %300 = vdwg.mxu0
    %v301 = vadd.f32 %v277, %v299
    %v302 = vtanh.pop %v301
    %v303 = vsel %vm183, %v249, %v264
    %v305 = vsel %vm172, %v302, 0
    %307 = vmatpush.msra.mxu0 0.0
    %308 = vmatpush.msra.mxu0 0.0
    %309 = vmatpush.msra.mxu0 0.0
    %310 = vmatpush.msra.mxu0 0.0
    %311 = vmatpush.msra.mxu0 0.0
    %312 = vmatpush.msra.mxu0 0.0
    %313 = vmatpush.msra.mxu0 0.0
    %314 = vmatpush.msra.mxu0 0.0
    %315 = vmatpush.msra.mxu0 %v276
    %316 = vmatpush.msra.mxu0 %v275
    %317 = vmatpush.msra.mxu0 %v274
    %318 = vmatpush.msra.mxu0 %v273
    %319 = vmatpush.msra.mxu0 %v272
    %320 = vmatpush.msra.mxu0 %v271
    %321 = vmatpush.msra.mxu0 %v270
    %322 = vmatpush.msra.mxu0 %v269
    %323 = vmatmul.f32.gmra.mxu0 %v305
    %v324 = vpop.f32.mrf.mxu0
    %v325 = vadd.f32 0.0, %v324
    %326 = vdwg.mxu0
    %v327 = vadd.f32 %v303, %v325
    %v328 = vtanh.pop %v327
    %v329 = vsel %vm183, %v252, %v261
    %v331 = vsel %vm172, %v328, 0
    %333 = vmatpush.msra.mxu0 0.0
    %334 = vmatpush.msra.mxu0 0.0
    %335 = vmatpush.msra.mxu0 0.0
    %336 = vmatpush.msra.mxu0 0.0
    %337 = vmatpush.msra.mxu0 0.0
    %338 = vmatpush.msra.mxu0 0.0
    %339 = vmatpush.msra.mxu0 0.0
    %340 = vmatpush.msra.mxu0 0.0
    %341 = vmatpush.msra.mxu0 %v276
    %342 = vmatpush.msra.mxu0 %v275
    %343 = vmatpush.msra.mxu0 %v274
    %344 = vmatpush.msra.mxu0 %v273
    %345 = vmatpush.msra.mxu0 %v272
    %346 = vmatpush.msra.mxu0 %v271
    %347 = vmatpush.msra.mxu0 %v270
    %348 = vmatpush.msra.mxu0 %v269
    %349 = vmatmul.f32.gmra.mxu0 %v331
    %v350 = vpop.f32.mrf.mxu0
    %v351 = vadd.f32 0.0, %v350
    %352 = vdwg.mxu0
    %v353 = vadd.f32 %v329, %v351
    %v354 = vtanh.pop %v353
    %v355 = vsel %vm183, %v255, %v258
    %v357 = vsel %vm172, %v354, 0
    %359 = vmatpush.msra.mxu0 0.0
    %360 = vmatpush.msra.mxu0 0.0
    %361 = vmatpush.msra.mxu0 0.0
    %362 = vmatpush.msra.mxu0 0.0
    %363 = vmatpush.msra.mxu0 0.0
    %364 = vmatpush.msra.mxu0 0.0
    %365 = vmatpush.msra.mxu0 0.0
    %366 = vmatpush.msra.mxu0 0.0
    %367 = vmatpush.msra.mxu0 %v276
    %368 = vmatpush.msra.mxu0 %v275
    %369 = vmatpush.msra.mxu0 %v274
    %370 = vmatpush.msra.mxu0 %v273
    %371 = vmatpush.msra.mxu0 %v272
    %372 = vmatpush.msra.mxu0 %v271
    %373 = vmatpush.msra.mxu0 %v270
    %374 = vmatpush.msra.mxu0 %v269
    %375 = vmatmul.f32.gmra.mxu0 %v357
    %v376 = vpop.f32.mrf.mxu0
    %v377 = vadd.f32 0.0, %v376
    %378 = vdwg.mxu0
    %v379 = vadd.f32 %v355, %v377
    %v380 = vtanh.pop %v379
    %v381 = vsel %vm183, %v258, %v255
    %v383 = vsel %vm172, %v380, 0
    %385 = vmatpush.msra.mxu0 0.0
    %386 = vmatpush.msra.mxu0 0.0
    %387 = vmatpush.msra.mxu0 0.0
    %388 = vmatpush.msra.mxu0 0.0
    %389 = vmatpush.msra.mxu0 0.0
    %390 = vmatpush.msra.mxu0 0.0
    %391 = vmatpush.msra.mxu0 0.0
    %392 = vmatpush.msra.mxu0 0.0
    %393 = vmatpush.msra.mxu0 %v276
    %394 = vmatpush.msra.mxu0 %v275
    %395 = vmatpush.msra.mxu0 %v274
    %396 = vmatpush.msra.mxu0 %v273
    %397 = vmatpush.msra.mxu0 %v272
    %398 = vmatpush.msra.mxu0 %v271
    %399 = vmatpush.msra.mxu0 %v270
    %400 = vmatpush.msra.mxu0 %v269
    %401 = vmatmul.f32.gmra.mxu0 %v383
    %v402 = vpop.f32.mrf.mxu0
    %v403 = vadd.f32 0.0, %v402
    %404 = vdwg.mxu0
    %v405 = vadd.f32 %v381, %v403
    %v406 = vtanh.pop %v405
    %v407 = vsel %vm183, %v261, %v252
    %v409 = vsel %vm172, %v406, 0
    %411 = vmatpush.msra.mxu0 0.0
    %412 = vmatpush.msra.mxu0 0.0
    %413 = vmatpush.msra.mxu0 0.0
    %414 = vmatpush.msra.mxu0 0.0
    %415 = vmatpush.msra.mxu0 0.0
    %416 = vmatpush.msra.mxu0 0.0
    %417 = vmatpush.msra.mxu0 0.0
    %418 = vmatpush.msra.mxu0 0.0
    %419 = vmatpush.msra.mxu0 %v276
    %420 = vmatpush.msra.mxu0 %v275
    %421 = vmatpush.msra.mxu0 %v274
    %422 = vmatpush.msra.mxu0 %v273
    %423 = vmatpush.msra.mxu0 %v272
    %424 = vmatpush.msra.mxu0 %v271
    %425 = vmatpush.msra.mxu0 %v270
    %426 = vmatpush.msra.mxu0 %v269
    %427 = vmatmul.f32.gmra.mxu0 %v409
    %v428 = vpop.f32.mrf.mxu0
    %v429 = vadd.f32 0.0, %v428
    %430 = vdwg.mxu0
    %v431 = vadd.f32 %v407, %v429
    %v432 = vtanh.pop %v431
    %v433 = vsel %vm183, %v264, %v249
    %v435 = vsel %vm172, %v432, 0
    %437 = vmatpush.msra.mxu0 0.0
    %438 = vmatpush.msra.mxu0 0.0
    %439 = vmatpush.msra.mxu0 0.0
    %440 = vmatpush.msra.mxu0 0.0
    %441 = vmatpush.msra.mxu0 0.0
    %442 = vmatpush.msra.mxu0 0.0
    %443 = vmatpush.msra.mxu0 0.0
    %444 = vmatpush.msra.mxu0 0.0
    %445 = vmatpush.msra.mxu0 %v276
    %446 = vmatpush.msra.mxu0 %v275
    %447 = vmatpush.msra.mxu0 %v274
    %448 = vmatpush.msra.mxu0 %v273
    %449 = vmatpush.msra.mxu0 %v272
    %450 = vmatpush.msra.mxu0 %v271
    %451 = vmatpush.msra.mxu0 %v270
    %452 = vmatpush.msra.mxu0 %v269
    %453 = vmatmul.f32.gmra.mxu0 %v435
    %v454 = vpop.f32.mrf.mxu0
    %v455 = vadd.f32 0.0, %v454
    %456 = vdwg.mxu0
    %v457 = vadd.f32 %v433, %v455
    %v458 = vtanh.pop %v457
    %v459 = vsel %vm183, %v267, %v246
    %v461 = vsel %vm172, %v458, 0
    %463 = vmatpush.msra.mxu0 0.0
    %464 = vmatpush.msra.mxu0 0.0
    %465 = vmatpush.msra.mxu0 0.0
    %466 = vmatpush.msra.mxu0 0.0
    %467 = vmatpush.msra.mxu0 0.0
    %468 = vmatpush.msra.mxu0 0.0
    %469 = vmatpush.msra.mxu0 0.0
    %470 = vmatpush.msra.mxu0 0.0
    %471 = vmatpush.msra.mxu0 %v276
    %472 = vmatpush.msra.mxu0 %v275
    %473 = vmatpush.msra.mxu0 %v274
    %474 = vmatpush.msra.mxu0 %v273
    %475 = vmatpush.msra.mxu0 %v272
    %476 = vmatpush.msra.mxu0 %v271
    %477 = vmatpush.msra.mxu0 %v270
    %478 = vmatpush.msra.mxu0 %v269
    %479 = vmatmul.f32.gmra.mxu0 %v461
    %v480 = vpop.f32.mrf.mxu0
    %v481 = vadd.f32 0.0, %v480
    %482 = vdwg.mxu0
    %v483 = vadd.f32 %v459, %v481
    %v484 = vtanh.pop %v483
    %v485 = vsel %vm183, %v302, %v484
    %486 = vst.msk [vmem:[#allocation2] sm:$0xff] %vm172, %v485
    %v487 = vsel %vm183, %v328, %v458
    %488 = vst.msk [vmem:[#allocation2 + $0x8] sm:$0xff] %vm172, %v487
    %v489 = vsel %vm183, %v354, %v432
    %490 = vst.msk [vmem:[#allocation2 + $0x10] sm:$0xff] %vm172, %v489
    %v491 = vsel %vm183, %v380, %v406
    %492 = vst.msk [vmem:[#allocation2 + $0x18] sm:$0xff] %vm172, %v491
    %v493 = vsel %vm183, %v406, %v380
    %494 = vst.msk [vmem:[#allocation2 + $0x20] sm:$0xff] %vm172, %v493
    %v495 = vsel %vm183, %v432, %v354
    %496 = vst.msk [vmem:[#allocation2 + $0x28] sm:$0xff] %vm172, %v495
    %v497 = vsel %vm183, %v458, %v328
    %498 = vst.msk [vmem:[#allocation2 + $0x30] sm:$0xff] %vm172, %v497
    %v499 = vsel %vm183, %v484, %v302
    %500 = vst.msk [vmem:[#allocation2 + $0x38] sm:$0xff] %vm172, %v499
    %v501 = vld [vmem:[#allocation2] sm:$0xff]
    %v502 = vld [vmem:[#allocation2 + $0x8] sm:$0xff]
    %v503 = vld [vmem:[#allocation2 + $0x10] sm:$0xff]
    %v504 = vld [vmem:[#allocation2 + $0x18] sm:$0xff]
    %v505 = vld [vmem:[#allocation2 + $0x20] sm:$0xff]
    %v506 = vld [vmem:[#allocation2 + $0x28] sm:$0xff]
    %v507 = vld [vmem:[#allocation2 + $0x30] sm:$0xff]
    %v508 = vld [vmem:[#allocation2 + $0x38] sm:$0xff]
    %s509 = scalar_lea.vmem [#allocation3], 64
    %v510 = vld [vmem:[%s509] sm:$0xff]
    %v511 = vld [vmem:[%s509 + $0x8] sm:$0xff]
    %v512 = vld [vmem:[%s509 + $0x10] sm:$0xff]
    %v513 = vld [vmem:[%s509 + $0x18] sm:$0xff]
    %v514 = vld [vmem:[%s509 + $0x20] sm:$0xff]
    %v515 = vld [vmem:[%s509 + $0x28] sm:$0xff]
    %v516 = vld [vmem:[%s509 + $0x30] sm:$0xff]
    %v517 = vld [vmem:[%s509 + $0x38] sm:$0xff]
    %s518 = scalar_lea.vmem %s5, 1
    %v519 = vld [vmem:[%s518] sm:$0x1]
    %v521 = vperm.slane %v519, 0
    %v524 = vsel %vm172, %v501, 0
    %v527 = vsel %vm172, %v502, 0
    %v530 = vsel %vm172, %v503, 0
    %v533 = vsel %vm172, %v504, 0
    %v536 = vsel %vm172, %v505, 0
    %v539 = vsel %vm172, %v506, 0
    %v542 = vsel %vm172, %v507, 0
    %v545 = vsel %vm172, %v508, 0
    %547 = vmatpush.msra.mxu0 0.0
    %548 = vmatpush.msra.mxu0 0.0
    %549 = vmatpush.msra.mxu0 0.0
    %550 = vmatpush.msra.mxu0 0.0
    %551 = vmatpush.msra.mxu0 0.0
    %552 = vmatpush.msra.mxu0 0.0
    %553 = vmatpush.msra.mxu0 0.0
    %554 = vmatpush.msra.mxu0 0.0
    %555 = vmatpush.msra.mxu0 %v517
    %556 = vmatpush.msra.mxu0 %v516
    %557 = vmatpush.msra.mxu0 %v515
    %558 = vmatpush.msra.mxu0 %v514
    %559 = vmatpush.msra.mxu0 %v513
    %560 = vmatpush.msra.mxu0 %v512
    %561 = vmatpush.msra.mxu0 %v511
    %562 = vmatpush.msra.mxu0 %v510
    %563 = vmatmul.f32.gmra.mxu0 %v524
    %v564 = vpop.f32.mrf.mxu0
    %v565 = vadd.f32 %v521, %v564
    %566 = vmatmul.f32.gmra.mxu0 %v527
    %v567 = vpop.f32.mrf.mxu0
    %v568 = vadd.f32 %v521, %v567
    %569 = vmatmul.f32.gmra.mxu0 %v530
    %v570 = vpop.f32.mrf.mxu0
    %v571 = vadd.f32 %v521, %v570
    %572 = vmatmul.f32.gmra.mxu0 %v533
    %v573 = vpop.f32.mrf.mxu0
    %v574 = vadd.f32 %v521, %v573
    %575 = vmatmul.f32.gmra.mxu0 %v536
    %v576 = vpop.f32.mrf.mxu0
    %v577 = vadd.f32 %v521, %v576
    %578 = vmatmul.f32.gmra.mxu0 %v539
    %v579 = vpop.f32.mrf.mxu0
    %v580 = vadd.f32 %v521, %v579
    %581 = vmatmul.f32.gmra.mxu0 %v542
    %v582 = vpop.f32.mrf.mxu0
    %v583 = vadd.f32 %v521, %v582
    %584 = vmatmul.f32.gmra.mxu0 %v545
    %v585 = vpop.f32.mrf.mxu0
    %v586 = vadd.f32 %v521, %v585
    %587 = vdwg.mxu0
    %s588 = scalar_lea.vmem [#allocation5], 64
    %v589 = vld [vmem:[%s588] sm:$0xff]
    %v590 = vld [vmem:[%s588 + $0x8] sm:$0xff]
    %v591 = vld [vmem:[%s588 + $0x10] sm:$0xff]
    %v592 = vld [vmem:[%s588 + $0x18] sm:$0xff]
    %v593 = vld [vmem:[%s588 + $0x20] sm:$0xff]
    %v594 = vld [vmem:[%s588 + $0x28] sm:$0xff]
    %v595 = vld [vmem:[%s588 + $0x30] sm:$0xff]
    %v596 = vld [vmem:[%s588 + $0x38] sm:$0xff]
    %v597 = vsel %vm183, %v565, %v586
    %598 = vmatpush.msra.mxu0 0.0
    %599 = vmatpush.msra.mxu0 0.0
    %600 = vmatpush.msra.mxu0 0.0
    %601 = vmatpush.msra.mxu0 0.0
    %602 = vmatpush.msra.mxu0 0.0
    %603 = vmatpush.msra.mxu0 0.0
    %604 = vmatpush.msra.mxu0 0.0
    %605 = vmatpush.msra.mxu0 0.0
    %606 = vmatpush.msra.mxu0 %v596
    %607 = vmatpush.msra.mxu0 %v595
    %608 = vmatpush.msra.mxu0 %v594
    %609 = vmatpush.msra.mxu0 %v593
    %610 = vmatpush.msra.mxu0 %v592
    %611 = vmatpush.msra.mxu0 %v591
    %612 = vmatpush.msra.mxu0 %v590
    %613 = vmatpush.msra.mxu0 %v589
    %614 = vmatmul.f32.gmra.mxu0 %v279
    %v615 = vpop.f32.mrf.mxu0
    %v616 = vadd.f32 0.0, %v615
    %617 = vdwg.mxu0
    %v618 = vadd.f32 %v597, %v616
    %v619 = vtanh.pop %v618
    %v620 = vsel %vm183, %v568, %v583
    %v622 = vsel %vm172, %v619, 0
    %624 = vmatpush.msra.mxu0 0.0
    %625 = vmatpush.msra.mxu0 0.0
    %626 = vmatpush.msra.mxu0 0.0
    %627 = vmatpush.msra.mxu0 0.0
    %628 = vmatpush.msra.mxu0 0.0
    %629 = vmatpush.msra.mxu0 0.0
    %630 = vmatpush.msra.mxu0 0.0
    %631 = vmatpush.msra.mxu0 0.0
    %632 = vmatpush.msra.mxu0 %v596
    %633 = vmatpush.msra.mxu0 %v595
    %634 = vmatpush.msra.mxu0 %v594
    %635 = vmatpush.msra.mxu0 %v593
    %636 = vmatpush.msra.mxu0 %v592
    %637 = vmatpush.msra.mxu0 %v591
    %638 = vmatpush.msra.mxu0 %v590
    %639 = vmatpush.msra.mxu0 %v589
    %640 = vmatmul.f32.gmra.mxu0 %v622
    %v641 = vpop.f32.mrf.mxu0
    %v642 = vadd.f32 0.0, %v641
    %643 = vdwg.mxu0
    %v644 = vadd.f32 %v620, %v642
    %v645 = vtanh.pop %v644
    %v646 = vsel %vm183, %v571, %v580
    %v648 = vsel %vm172, %v645, 0
    %650 = vmatpush.msra.mxu0 0.0
    %651 = vmatpush.msra.mxu0 0.0
    %652 = vmatpush.msra.mxu0 0.0
    %653 = vmatpush.msra.mxu0 0.0
    %654 = vmatpush.msra.mxu0 0.0
    %655 = vmatpush.msra.mxu0 0.0
    %656 = vmatpush.msra.mxu0 0.0
    %657 = vmatpush.msra.mxu0 0.0
    %658 = vmatpush.msra.mxu0 %v596
    %659 = vmatpush.msra.mxu0 %v595
    %660 = vmatpush.msra.mxu0 %v594
    %661 = vmatpush.msra.mxu0 %v593
    %662 = vmatpush.msra.mxu0 %v592
    %663 = vmatpush.msra.mxu0 %v591
    %664 = vmatpush.msra.mxu0 %v590
    %665 = vmatpush.msra.mxu0 %v589
    %666 = vmatmul.f32.gmra.mxu0 %v648
    %v667 = vpop.f32.mrf.mxu0
    %v668 = vadd.f32 0.0, %v667
    %669 = vdwg.mxu0
    %v670 = vadd.f32 %v646, %v668
    %v671 = vtanh.pop %v670
    %v672 = vsel %vm183, %v574, %v577
    %v674 = vsel %vm172, %v671, 0
    %676 = vmatpush.msra.mxu0 0.0
    %677 = vmatpush.msra.mxu0 0.0
    %678 = vmatpush.msra.mxu0 0.0
    %679 = vmatpush.msra.mxu0 0.0
    %680 = vmatpush.msra.mxu0 0.0
    %681 = vmatpush.msra.mxu0 0.0
    %682 = vmatpush.msra.mxu0 0.0
    %683 = vmatpush.msra.mxu0 0.0
    %684 = vmatpush.msra.mxu0 %v596
    %685 = vmatpush.msra.mxu0 %v595
    %686 = vmatpush.msra.mxu0 %v594
    %687 = vmatpush.msra.mxu0 %v593
    %688 = vmatpush.msra.mxu0 %v592
    %689 = vmatpush.msra.mxu0 %v591
    %690 = vmatpush.msra.mxu0 %v590
    %691 = vmatpush.msra.mxu0 %v589
    %692 = vmatmul.f32.gmra.mxu0 %v674
    %v693 = vpop.f32.mrf.mxu0
    %v694 = vadd.f32 0.0, %v693
    %695 = vdwg.mxu0
    %v696 = vadd.f32 %v672, %v694
    %v697 = vtanh.pop %v696
    %v698 = vsel %vm183, %v577, %v574
    %v700 = vsel %vm172, %v697, 0
    %702 = vmatpush.msra.mxu0 0.0
    %703 = vmatpush.msra.mxu0 0.0
    %704 = vmatpush.msra.mxu0 0.0
    %705 = vmatpush.msra.mxu0 0.0
    %706 = vmatpush.msra.mxu0 0.0
    %707 = vmatpush.msra.mxu0 0.0
    %708 = vmatpush.msra.mxu0 0.0
    %709 = vmatpush.msra.mxu0 0.0
    %710 = vmatpush.msra.mxu0 %v596
    %711 = vmatpush.msra.mxu0 %v595
    %712 = vmatpush.msra.mxu0 %v594
    %713 = vmatpush.msra.mxu0 %v593
    %714 = vmatpush.msra.mxu0 %v592
    %715 = vmatpush.msra.mxu0 %v591
    %716 = vmatpush.msra.mxu0 %v590
    %717 = vmatpush.msra.mxu0 %v589
    %718 = vmatmul.f32.gmra.mxu0 %v700
    %v719 = vpop.f32.mrf.mxu0
    %v720 = vadd.f32 0.0, %v719
    %721 = vdwg.mxu0
    %v722 = vadd.f32 %v698, %v720
    %v723 = vtanh.pop %v722
    %v724 = vsel %vm183, %v580, %v571
    %v726 = vsel %vm172, %v723, 0
    %728 = vmatpush.msra.mxu0 0.0
    %729 = vmatpush.msra.mxu0 0.0
    %730 = vmatpush.msra.mxu0 0.0
    %731 = vmatpush.msra.mxu0 0.0
    %732 = vmatpush.msra.mxu0 0.0
    %733 = vmatpush.msra.mxu0 0.0
    %734 = vmatpush.msra.mxu0 0.0
    %735 = vmatpush.msra.mxu0 0.0
    %736 = vmatpush.msra.mxu0 %v596
    %737 = vmatpush.msra.mxu0 %v595
    %738 = vmatpush.msra.mxu0 %v594
    %739 = vmatpush.msra.mxu0 %v593
    %740 = vmatpush.msra.mxu0 %v592
    %741 = vmatpush.msra.mxu0 %v591
    %742 = vmatpush.msra.mxu0 %v590
    %743 = vmatpush.msra.mxu0 %v589
    %744 = vmatmul.f32.gmra.mxu0 %v726
    %v745 = vpop.f32.mrf.mxu0
    %v746 = vadd.f32 0.0, %v745
    %747 = vdwg.mxu0
    %v748 = vadd.f32 %v724, %v746
    %v749 = vtanh.pop %v748
    %v750 = vsel %vm183, %v583, %v568
    %v752 = vsel %vm172, %v749, 0
    %754 = vmatpush.msra.mxu0 0.0
    %755 = vmatpush.msra.mxu0 0.0
    %756 = vmatpush.msra.mxu0 0.0
    %757 = vmatpush.msra.mxu0 0.0
    %758 = vmatpush.msra.mxu0 0.0
    %759 = vmatpush.msra.mxu0 0.0
    %760 = vmatpush.msra.mxu0 0.0
    %761 = vmatpush.msra.mxu0 0.0
    %762 = vmatpush.msra.mxu0 %v596
    %763 = vmatpush.msra.mxu0 %v595
    %764 = vmatpush.msra.mxu0 %v594
    %765 = vmatpush.msra.mxu0 %v593
    %766 = vmatpush.msra.mxu0 %v592
    %767 = vmatpush.msra.mxu0 %v591
    %768 = vmatpush.msra.mxu0 %v590
    %769 = vmatpush.msra.mxu0 %v589
    %770 = vmatmul.f32.gmra.mxu0 %v752
    %v771 = vpop.f32.mrf.mxu0
    %v772 = vadd.f32 0.0, %v771
    %773 = vdwg.mxu0
    %v774 = vadd.f32 %v750, %v772
    %v775 = vtanh.pop %v774
    %v776 = vsel %vm183, %v586, %v565
    %v778 = vsel %vm172, %v775, 0
    %780 = vmatpush.msra.mxu0 0.0
    %781 = vmatpush.msra.mxu0 0.0
    %782 = vmatpush.msra.mxu0 0.0
    %783 = vmatpush.msra.mxu0 0.0
    %784 = vmatpush.msra.mxu0 0.0
    %785 = vmatpush.msra.mxu0 0.0
    %786 = vmatpush.msra.mxu0 0.0
    %787 = vmatpush.msra.mxu0 0.0
    %788 = vmatpush.msra.mxu0 %v596
    %789 = vmatpush.msra.mxu0 %v595
    %790 = vmatpush.msra.mxu0 %v594
    %791 = vmatpush.msra.mxu0 %v593
    %792 = vmatpush.msra.mxu0 %v592
    %793 = vmatpush.msra.mxu0 %v591
    %794 = vmatpush.msra.mxu0 %v590
    %795 = vmatpush.msra.mxu0 %v589
    %796 = vmatmul.f32.gmra.mxu0 %v778
    %v797 = vpop.f32.mrf.mxu0
    %v798 = vadd.f32 0.0, %v797
    %799 = vdwg.mxu0
    %v800 = vadd.f32 %v776, %v798
    %v801 = vtanh.pop %v800
    %v802 = vsel %vm183, %v619, %v801
    %803 = vst.msk [vmem:[#allocation2] sm:$0xff] %vm172, %v802
    %v804 = vsel %vm183, %v645, %v775
    %805 = vst.msk [vmem:[#allocation2 + $0x8] sm:$0xff] %vm172, %v804
    %v806 = vsel %vm183, %v671, %v749
    %807 = vst.msk [vmem:[#allocation2 + $0x10] sm:$0xff] %vm172, %v806
    %v808 = vsel %vm183, %v697, %v723
    %809 = vst.msk [vmem:[#allocation2 + $0x18] sm:$0xff] %vm172, %v808
    %v810 = vsel %vm183, %v723, %v697
    %811 = vst.msk [vmem:[#allocation2 + $0x20] sm:$0xff] %vm172, %v810
    %v812 = vsel %vm183, %v749, %v671
    %813 = vst.msk [vmem:[#allocation2 + $0x28] sm:$0xff] %vm172, %v812
    %v814 = vsel %vm183, %v775, %v645
    %815 = vst.msk [vmem:[#allocation2 + $0x30] sm:$0xff] %vm172, %v814
    %v816 = vsel %vm183, %v801, %v619
    %817 = vst.msk [vmem:[#allocation2 + $0x38] sm:$0xff] %vm172, %v816
    %v818 = vld [vmem:[#allocation2] sm:$0xff]
    %v819 = vld [vmem:[#allocation2 + $0x8] sm:$0xff]
    %v820 = vld [vmem:[#allocation2 + $0x10] sm:$0xff]
    %v821 = vld [vmem:[#allocation2 + $0x18] sm:$0xff]
    %v822 = vld [vmem:[#allocation2 + $0x20] sm:$0xff]
    %v823 = vld [vmem:[#allocation2 + $0x28] sm:$0xff]
    %v824 = vld [vmem:[#allocation2 + $0x30] sm:$0xff]
    %v825 = vld [vmem:[#allocation2 + $0x38] sm:$0xff]
    %s826 = scalar_lea.vmem [#allocation3], 128
    %v827 = vld [vmem:[%s826] sm:$0xff]
    %v828 = vld [vmem:[%s826 + $0x8] sm:$0xff]
    %v829 = vld [vmem:[%s826 + $0x10] sm:$0xff]
    %v830 = vld [vmem:[%s826 + $0x18] sm:$0xff]
    %v831 = vld [vmem:[%s826 + $0x20] sm:$0xff]
    %v832 = vld [vmem:[%s826 + $0x28] sm:$0xff]
    %v833 = vld [vmem:[%s826 + $0x30] sm:$0xff]
    %v834 = vld [vmem:[%s826 + $0x38] sm:$0xff]
    %s835 = scalar_lea.vmem %s5, 2
    %v836 = vld [vmem:[%s835] sm:$0x1]
    %v838 = vperm.slane %v836, 0
    %v841 = vsel %vm172, %v818, 0
    %v844 = vsel %vm172, %v819, 0
    %v847 = vsel %vm172, %v820, 0
    %v850 = vsel %vm172, %v821, 0
    %v853 = vsel %vm172, %v822, 0
    %v856 = vsel %vm172, %v823, 0
    %v859 = vsel %vm172, %v824, 0
    %v862 = vsel %vm172, %v825, 0
    %864 = vmatpush.msra.mxu0 0.0
    %865 = vmatpush.msra.mxu0 0.0
    %866 = vmatpush.msra.mxu0 0.0
    %867 = vmatpush.msra.mxu0 0.0
    %868 = vmatpush.msra.mxu0 0.0
    %869 = vmatpush.msra.mxu0 0.0
    %870 = vmatpush.msra.mxu0 0.0
    %871 = vmatpush.msra.mxu0 0.0
    %872 = vmatpush.msra.mxu0 %v834
    %873 = vmatpush.msra.mxu0 %v833
    %874 = vmatpush.msra.mxu0 %v832
    %875 = vmatpush.msra.mxu0 %v831
    %876 = vmatpush.msra.mxu0 %v830
    %877 = vmatpush.msra.mxu0 %v829
    %878 = vmatpush.msra.mxu0 %v828
    %879 = vmatpush.msra.mxu0 %v827
    %880 = vmatmul.f32.gmra.mxu0 %v841
    %v881 = vpop.f32.mrf.mxu0
    %v882 = vadd.f32 %v838, %v881
    %883 = vmatmul.f32.gmra.mxu0 %v844
    %v884 = vpop.f32.mrf.mxu0
    %v885 = vadd.f32 %v838, %v884
    %886 = vmatmul.f32.gmra.mxu0 %v847
    %v887 = vpop.f32.mrf.mxu0
    %v888 = vadd.f32 %v838, %v887
    %889 = vmatmul.f32.gmra.mxu0 %v850
    %v890 = vpop.f32.mrf.mxu0
    %v891 = vadd.f32 %v838, %v890
    %892 = vmatmul.f32.gmra.mxu0 %v853
    %v893 = vpop.f32.mrf.mxu0
    %v894 = vadd.f32 %v838, %v893
    %895 = vmatmul.f32.gmra.mxu0 %v856
    %v896 = vpop.f32.mrf.mxu0
    %v897 = vadd.f32 %v838, %v896
    %898 = vmatmul.f32.gmra.mxu0 %v859
    %v899 = vpop.f32.mrf.mxu0
    %v900 = vadd.f32 %v838, %v899
    %901 = vmatmul.f32.gmra.mxu0 %v862
    %v902 = vpop.f32.mrf.mxu0
    %v903 = vadd.f32 %v838, %v902
    %904 = vdwg.mxu0
    %s905 = scalar_lea.vmem [#allocation5], 128
    %v906 = vld [vmem:[%s905] sm:$0xff]
    %v907 = vld [vmem:[%s905 + $0x8] sm:$0xff]
    %v908 = vld [vmem:[%s905 + $0x10] sm:$0xff]
    %v909 = vld [vmem:[%s905 + $0x18] sm:$0xff]
    %v910 = vld [vmem:[%s905 + $0x20] sm:$0xff]
    %v911 = vld [vmem:[%s905 + $0x28] sm:$0xff]
    %v912 = vld [vmem:[%s905 + $0x30] sm:$0xff]
    %v913 = vld [vmem:[%s905 + $0x38] sm:$0xff]
    %v914 = vsel %vm183, %v882, %v903
    %915 = vmatpush.msra.mxu0 0.0
    %916 = vmatpush.msra.mxu0 0.0
    %917 = vmatpush.msra.mxu0 0.0
    %918 = vmatpush.msra.mxu0 0.0
    %919 = vmatpush.msra.mxu0 0.0
    %920 = vmatpush.msra.mxu0 0.0
    %921 = vmatpush.msra.mxu0 0.0
    %922 = vmatpush.msra.mxu0 0.0
    %923 = vmatpush.msra.mxu0 %v913
    %924 = vmatpush.msra.mxu0 %v912
    %925 = vmatpush.msra.mxu0 %v911
    %926 = vmatpush.msra.mxu0 %v910
    %927 = vmatpush.msra.mxu0 %v909
    %928 = vmatpush.msra.mxu0 %v908
    %929 = vmatpush.msra.mxu0 %v907
    %930 = vmatpush.msra.mxu0 %v906
    %931 = vmatmul.f32.gmra.mxu0 %v279
    %v932 = vpop.f32.mrf.mxu0
    %v933 = vadd.f32 0.0, %v932
    %934 = vdwg.mxu0
    %v935 = vadd.f32 %v914, %v933
    %v936 = vtanh.pop %v935
    %v937 = vsel %vm183, %v885, %v900
    %v939 = vsel %vm172, %v936, 0
    %941 = vmatpush.msra.mxu0 0.0
    %942 = vmatpush.msra.mxu0 0.0
    %943 = vmatpush.msra.mxu0 0.0
    %944 = vmatpush.msra.mxu0 0.0
    %945 = vmatpush.msra.mxu0 0.0
    %946 = vmatpush.msra.mxu0 0.0
    %947 = vmatpush.msra.mxu0 0.0
    %948 = vmatpush.msra.mxu0 0.0
    %949 = vmatpush.msra.mxu0 %v913
    %950 = vmatpush.msra.mxu0 %v912
    %951 = vmatpush.msra.mxu0 %v911
    %952 = vmatpush.msra.mxu0 %v910
    %953 = vmatpush.msra.mxu0 %v909
    %954 = vmatpush.msra.mxu0 %v908
    %955 = vmatpush.msra.mxu0 %v907
    %956 = vmatpush.msra.mxu0 %v906
    %957 = vmatmul.f32.gmra.mxu0 %v939
    %v958 = vpop.f32.mrf.mxu0
    %v959 = vadd.f32 0.0, %v958
    %960 = vdwg.mxu0
    %v961 = vadd.f32 %v937, %v959
    %v962 = vtanh.pop %v961
    %v963 = vsel %vm183, %v888, %v897
    %v965 = vsel %vm172, %v962, 0
    %967 = vmatpush.msra.mxu0 0.0
    %968 = vmatpush.msra.mxu0 0.0
    %969 = vmatpush.msra.mxu0 0.0
    %970 = vmatpush.msra.mxu0 0.0
    %971 = vmatpush.msra.mxu0 0.0
    %972 = vmatpush.msra.mxu0 0.0
    %973 = vmatpush.msra.mxu0 0.0
    %974 = vmatpush.msra.mxu0 0.0
    %975 = vmatpush.msra.mxu0 %v913
    %976 = vmatpush.msra.mxu0 %v912
    %977 = vmatpush.msra.mxu0 %v911
    %978 = vmatpush.msra.mxu0 %v910
    %979 = vmatpush.msra.mxu0 %v909
    %980 = vmatpush.msra.mxu0 %v908
    %981 = vmatpush.msra.mxu0 %v907
    %982 = vmatpush.msra.mxu0 %v906
    %983 = vmatmul.f32.gmra.mxu0 %v965
    %v984 = vpop.f32.mrf.mxu0
    %v985 = vadd.f32 0.0, %v984
    %986 = vdwg.mxu0
    %v987 = vadd.f32 %v963, %v985
    %v988 = vtanh.pop %v987
    %v989 = vsel %vm183, %v891, %v894
    %v991 = vsel %vm172, %v988, 0
    %993 = vmatpush.msra.mxu0 0.0
    %994 = vmatpush.msra.mxu0 0.0
    %995 = vmatpush.msra.mxu0 0.0
    %996 = vmatpush.msra.mxu0 0.0
    %997 = vmatpush.msra.mxu0 0.0
    %998 = vmatpush.msra.mxu0 0.0
    %999 = vmatpush.msra.mxu0 0.0
    %1000 = vmatpush.msra.mxu0 0.0
    %1001 = vmatpush.msra.mxu0 %v913
    %1002 = vmatpush.msra.mxu0 %v912
    %1003 = vmatpush.msra.mxu0 %v911
    %1004 = vmatpush.msra.mxu0 %v910
    %1005 = vmatpush.msra.mxu0 %v909
    %1006 = vmatpush.msra.mxu0 %v908
    %1007 = vmatpush.msra.mxu0 %v907
    %1008 = vmatpush.msra.mxu0 %v906
    %1009 = vmatmul.f32.gmra.mxu0 %v991
    %v1010 = vpop.f32.mrf.mxu0
    %v1011 = vadd.f32 0.0, %v1010
    %1012 = vdwg.mxu0
    %v1013 = vadd.f32 %v989, %v1011
    %v1014 = vtanh.pop %v1013
    %v1015 = vsel %vm183, %v894, %v891
    %v1017 = vsel %vm172, %v1014, 0
    %1019 = vmatpush.msra.mxu0 0.0
    %1020 = vmatpush.msra.mxu0 0.0
    %1021 = vmatpush.msra.mxu0 0.0
    %1022 = vmatpush.msra.mxu0 0.0
    %1023 = vmatpush.msra.mxu0 0.0
    %1024 = vmatpush.msra.mxu0 0.0
    %1025 = vmatpush.msra.mxu0 0.0
    %1026 = vmatpush.msra.mxu0 0.0
    %1027 = vmatpush.msra.mxu0 %v913
    %1028 = vmatpush.msra.mxu0 %v912
    %1029 = vmatpush.msra.mxu0 %v911
    %1030 = vmatpush.msra.mxu0 %v910
    %1031 = vmatpush.msra.mxu0 %v909
    %1032 = vmatpush.msra.mxu0 %v908
    %1033 = vmatpush.msra.mxu0 %v907
    %1034 = vmatpush.msra.mxu0 %v906
    %1035 = vmatmul.f32.gmra.mxu0 %v1017
    %v1036 = vpop.f32.mrf.mxu0
    %v1037 = vadd.f32 0.0, %v1036
    %1038 = vdwg.mxu0
    %v1039 = vadd.f32 %v1015, %v1037
    %v1040 = vtanh.pop %v1039
    %v1041 = vsel %vm183, %v897, %v888
    %v1043 = vsel %vm172, %v1040, 0
    %1045 = vmatpush.msra.mxu0 0.0
    %1046 = vmatpush.msra.mxu0 0.0
    %1047 = vmatpush.msra.mxu0 0.0
    %1048 = vmatpush.msra.mxu0 0.0
    %1049 = vmatpush.msra.mxu0 0.0
    %1050 = vmatpush.msra.mxu0 0.0
    %1051 = vmatpush.msra.mxu0 0.0
    %1052 = vmatpush.msra.mxu0 0.0
    %1053 = vmatpush.msra.mxu0 %v913
    %1054 = vmatpush.msra.mxu0 %v912
    %1055 = vmatpush.msra.mxu0 %v911
    %1056 = vmatpush.msra.mxu0 %v910
    %1057 = vmatpush.msra.mxu0 %v909
    %1058 = vmatpush.msra.mxu0 %v908
    %1059 = vmatpush.msra.mxu0 %v907
    %1060 = vmatpush.msra.mxu0 %v906
    %1061 = vmatmul.f32.gmra.mxu0 %v1043
    %v1062 = vpop.f32.mrf.mxu0
    %v1063 = vadd.f32 0.0, %v1062
    %1064 = vdwg.mxu0
    %v1065 = vadd.f32 %v1041, %v1063
    %v1066 = vtanh.pop %v1065
    %v1067 = vsel %vm183, %v900, %v885
    %v1069 = vsel %vm172, %v1066, 0
    %1071 = vmatpush.msra.mxu0 0.0
    %1072 = vmatpush.msra.mxu0 0.0
    %1073 = vmatpush.msra.mxu0 0.0
    %1074 = vmatpush.msra.mxu0 0.0
    %1075 = vmatpush.msra.mxu0 0.0
    %1076 = vmatpush.msra.mxu0 0.0
    %1077 = vmatpush.msra.mxu0 0.0
    %1078 = vmatpush.msra.mxu0 0.0
    %1079 = vmatpush.msra.mxu0 %v913
    %1080 = vmatpush.msra.mxu0 %v912
    %1081 = vmatpush.msra.mxu0 %v911
    %1082 = vmatpush.msra.mxu0 %v910
    %1083 = vmatpush.msra.mxu0 %v909
    %1084 = vmatpush.msra.mxu0 %v908
    %1085 = vmatpush.msra.mxu0 %v907
    %1086 = vmatpush.msra.mxu0 %v906
    %1087 = vmatmul.f32.gmra.mxu0 %v1069
    %v1088 = vpop.f32.mrf.mxu0
    %v1089 = vadd.f32 0.0, %v1088
    %1090 = vdwg.mxu0
    %v1091 = vadd.f32 %v1067, %v1089
    %v1092 = vtanh.pop %v1091
    %v1093 = vsel %vm183, %v903, %v882
    %v1095 = vsel %vm172, %v1092, 0
    %1097 = vmatpush.msra.mxu0 0.0
    %1098 = vmatpush.msra.mxu0 0.0
    %1099 = vmatpush.msra.mxu0 0.0
    %1100 = vmatpush.msra.mxu0 0.0
    %1101 = vmatpush.msra.mxu0 0.0
    %1102 = vmatpush.msra.mxu0 0.0
    %1103 = vmatpush.msra.mxu0 0.0
    %1104 = vmatpush.msra.mxu0 0.0
    %1105 = vmatpush.msra.mxu0 %v913
    %1106 = vmatpush.msra.mxu0 %v912
    %1107 = vmatpush.msra.mxu0 %v911
    %1108 = vmatpush.msra.mxu0 %v910
    %1109 = vmatpush.msra.mxu0 %v909
    %1110 = vmatpush.msra.mxu0 %v908
    %1111 = vmatpush.msra.mxu0 %v907
    %1112 = vmatpush.msra.mxu0 %v906
    %1113 = vmatmul.f32.gmra.mxu0 %v1095
    %v1114 = vpop.f32.mrf.mxu0
    %v1115 = vadd.f32 0.0, %v1114
    %1116 = vdwg.mxu0
    %v1117 = vadd.f32 %v1093, %v1115
    %v1118 = vtanh.pop %v1117
    %v1119 = vsel %vm183, %v936, %v1118
    %1120 = vst.msk [vmem:[#allocation2] sm:$0xff] %vm172, %v1119
    %v1121 = vsel %vm183, %v962, %v1092
    %1122 = vst.msk [vmem:[#allocation2 + $0x8] sm:$0xff] %vm172, %v1121
    %v1123 = vsel %vm183, %v988, %v1066
    %1124 = vst.msk [vmem:[#allocation2 + $0x10] sm:$0xff] %vm172, %v1123
    %v1125 = vsel %vm183, %v1014, %v1040
    %1126 = vst.msk [vmem:[#allocation2 + $0x18] sm:$0xff] %vm172, %v1125
    %v1127 = vsel %vm183, %v1040, %v1014
    %1128 = vst.msk [vmem:[#allocation2 + $0x20] sm:$0xff] %vm172, %v1127
    %v1129 = vsel %vm183, %v1066, %v988
    %1130 = vst.msk [vmem:[#allocation2 + $0x28] sm:$0xff] %vm172, %v1129
    %v1131 = vsel %vm183, %v1092, %v962
    %1132 = vst.msk [vmem:[#allocation2 + $0x30] sm:$0xff] %vm172, %v1131
    %v1133 = vsel %vm183, %v1118, %v936
    %1134 = vst.msk [vmem:[#allocation2 + $0x38] sm:$0xff] %vm172, %v1133
    %v1135 = vld [vmem:[#allocation2] sm:$0xff]
    %v1136 = vld [vmem:[#allocation2 + $0x8] sm:$0xff]
    %v1137 = vld [vmem:[#allocation2 + $0x10] sm:$0xff]
    %v1138 = vld [vmem:[#allocation2 + $0x18] sm:$0xff]
    %v1139 = vld [vmem:[#allocation2 + $0x20] sm:$0xff]
    %v1140 = vld [vmem:[#allocation2 + $0x28] sm:$0xff]
    %v1141 = vld [vmem:[#allocation2 + $0x30] sm:$0xff]
    %v1142 = vld [vmem:[#allocation2 + $0x38] sm:$0xff]
    %s1143 = scalar_lea.vmem [#allocation3], 192
    %v1144 = vld [vmem:[%s1143] sm:$0xff]
    %v1145 = vld [vmem:[%s1143 + $0x8] sm:$0xff]
    %v1146 = vld [vmem:[%s1143 + $0x10] sm:$0xff]
    %v1147 = vld [vmem:[%s1143 + $0x18] sm:$0xff]
    %v1148 = vld [vmem:[%s1143 + $0x20] sm:$0xff]
    %v1149 = vld [vmem:[%s1143 + $0x28] sm:$0xff]
    %v1150 = vld [vmem:[%s1143 + $0x30] sm:$0xff]
    %v1151 = vld [vmem:[%s1143 + $0x38] sm:$0xff]
    %s1152 = scalar_lea.vmem %s5, 3
    %v1153 = vld [vmem:[%s1152] sm:$0x1]
    %v1155 = vperm.slane %v1153, 0
    %v1158 = vsel %vm172, %v1135, 0
    %v1161 = vsel %vm172, %v1136, 0
    %v1164 = vsel %vm172, %v1137, 0
    %v1167 = vsel %vm172, %v1138, 0
    %v1170 = vsel %vm172, %v1139, 0
    %v1173 = vsel %vm172, %v1140, 0
    %v1176 = vsel %vm172, %v1141, 0
    %v1179 = vsel %vm172, %v1142, 0
    %1181 = vmatpush.msra.mxu0 0.0
    %1182 = vmatpush.msra.mxu0 0.0
    %1183 = vmatpush.msra.mxu0 0.0
    %1184 = vmatpush.msra.mxu0 0.0
    %1185 = vmatpush.msra.mxu0 0.0
    %1186 = vmatpush.msra.mxu0 0.0
    %1187 = vmatpush.msra.mxu0 0.0
    %1188 = vmatpush.msra.mxu0 0.0
    %1189 = vmatpush.msra.mxu0 %v1151
    %1190 = vmatpush.msra.mxu0 %v1150
    %1191 = vmatpush.msra.mxu0 %v1149
    %1192 = vmatpush.msra.mxu0 %v1148
    %1193 = vmatpush.msra.mxu0 %v1147
    %1194 = vmatpush.msra.mxu0 %v1146
    %1195 = vmatpush.msra.mxu0 %v1145
    %1196 = vmatpush.msra.mxu0 %v1144
    %1197 = vmatmul.f32.gmra.mxu0 %v1158
    %v1198 = vpop.f32.mrf.mxu0
    %v1199 = vadd.f32 %v1155, %v1198
    %1200 = vmatmul.f32.gmra.mxu0 %v1161
    %v1201 = vpop.f32.mrf.mxu0
    %v1202 = vadd.f32 %v1155, %v1201
    %1203 = vmatmul.f32.gmra.mxu0 %v1164
    %v1204 = vpop.f32.mrf.mxu0
    %v1205 = vadd.f32 %v1155, %v1204
    %1206 = vmatmul.f32.gmra.mxu0 %v1167
    %v1207 = vpop.f32.mrf.mxu0
    %v1208 = vadd.f32 %v1155, %v1207
    %1209 = vmatmul.f32.gmra.mxu0 %v1170
    %v1210 = vpop.f32.mrf.mxu0
    %v1211 = vadd.f32 %v1155, %v1210
    %1212 = vmatmul.f32.gmra.mxu0 %v1173
    %v1213 = vpop.f32.mrf.mxu0
    %v1214 = vadd.f32 %v1155, %v1213
    %1215 = vmatmul.f32.gmra.mxu0 %v1176
    %v1216 = vpop.f32.mrf.mxu0
    %v1217 = vadd.f32 %v1155, %v1216
    %1218 = vmatmul.f32.gmra.mxu0 %v1179
    %v1219 = vpop.f32.mrf.mxu0
    %v1220 = vadd.f32 %v1155, %v1219
    %1221 = vdwg.mxu0
    %s1222 = scalar_lea.vmem [#allocation5], 192
    %v1223 = vld [vmem:[%s1222] sm:$0xff]
    %v1224 = vld [vmem:[%s1222 + $0x8] sm:$0xff]
    %v1225 = vld [vmem:[%s1222 + $0x10] sm:$0xff]
    %v1226 = vld [vmem:[%s1222 + $0x18] sm:$0xff]
    %v1227 = vld [vmem:[%s1222 + $0x20] sm:$0xff]
    %v1228 = vld [vmem:[%s1222 + $0x28] sm:$0xff]
    %v1229 = vld [vmem:[%s1222 + $0x30] sm:$0xff]
    %v1230 = vld [vmem:[%s1222 + $0x38] sm:$0xff]
    %v1231 = vsel %vm183, %v1199, %v1220
    %1232 = vmatpush.msra.mxu0 0.0
    %1233 = vmatpush.msra.mxu0 0.0
    %1234 = vmatpush.msra.mxu0 0.0
    %1235 = vmatpush.msra.mxu0 0.0
    %1236 = vmatpush.msra.mxu0 0.0
    %1237 = vmatpush.msra.mxu0 0.0
    %1238 = vmatpush.msra.mxu0 0.0
    %1239 = vmatpush.msra.mxu0 0.0
    %1240 = vmatpush.msra.mxu0 %v1230
    %1241 = vmatpush.msra.mxu0 %v1229
    %1242 = vmatpush.msra.mxu0 %v1228
    %1243 = vmatpush.msra.mxu0 %v1227
    %1244 = vmatpush.msra.mxu0 %v1226
    %1245 = vmatpush.msra.mxu0 %v1225
    %1246 = vmatpush.msra.mxu0 %v1224
    %1247 = vmatpush.msra.mxu0 %v1223
    %1248 = vmatmul.f32.gmra.mxu0 %v279
    %v1249 = vpop.f32.mrf.mxu0
    %v1250 = vadd.f32 0.0, %v1249
    %1251 = vdwg.mxu0
    %v1252 = vadd.f32 %v1231, %v1250
    %v1253 = vtanh.pop %v1252
    %v1254 = vsel %vm183, %v1202, %v1217
    %v1256 = vsel %vm172, %v1253, 0
    %1258 = vmatpush.msra.mxu0 0.0
    %1259 = vmatpush.msra.mxu0 0.0
    %1260 = vmatpush.msra.mxu0 0.0
    %1261 = vmatpush.msra.mxu0 0.0
    %1262 = vmatpush.msra.mxu0 0.0
    %1263 = vmatpush.msra.mxu0 0.0
    %1264 = vmatpush.msra.mxu0 0.0
    %1265 = vmatpush.msra.mxu0 0.0
    %1266 = vmatpush.msra.mxu0 %v1230
    %1267 = vmatpush.msra.mxu0 %v1229
    %1268 = vmatpush.msra.mxu0 %v1228
    %1269 = vmatpush.msra.mxu0 %v1227
    %1270 = vmatpush.msra.mxu0 %v1226
    %1271 = vmatpush.msra.mxu0 %v1225
    %1272 = vmatpush.msra.mxu0 %v1224
    %1273 = vmatpush.msra.mxu0 %v1223
    %1274 = vmatmul.f32.gmra.mxu0 %v1256
    %v1275 = vpop.f32.mrf.mxu0
    %v1276 = vadd.f32 0.0, %v1275
    %1277 = vdwg.mxu0
    %v1278 = vadd.f32 %v1254, %v1276
    %v1279 = vtanh.pop %v1278
    %v1280 = vsel %vm183, %v1205, %v1214
    %v1282 = vsel %vm172, %v1279, 0
    %1284 = vmatpush.msra.mxu0 0.0
    %1285 = vmatpush.msra.mxu0 0.0
    %1286 = vmatpush.msra.mxu0 0.0
    %1287 = vmatpush.msra.mxu0 0.0
    %1288 = vmatpush.msra.mxu0 0.0
    %1289 = vmatpush.msra.mxu0 0.0
    %1290 = vmatpush.msra.mxu0 0.0
    %1291 = vmatpush.msra.mxu0 0.0
    %1292 = vmatpush.msra.mxu0 %v1230
    %1293 = vmatpush.msra.mxu0 %v1229
    %1294 = vmatpush.msra.mxu0 %v1228
    %1295 = vmatpush.msra.mxu0 %v1227
    %1296 = vmatpush.msra.mxu0 %v1226
    %1297 = vmatpush.msra.mxu0 %v1225
    %1298 = vmatpush.msra.mxu0 %v1224
    %1299 = vmatpush.msra.mxu0 %v1223
    %1300 = vmatmul.f32.gmra.mxu0 %v1282
    %v1301 = vpop.f32.mrf.mxu0
    %v1302 = vadd.f32 0.0, %v1301
    %1303 = vdwg.mxu0
    %v1304 = vadd.f32 %v1280, %v1302
    %v1305 = vtanh.pop %v1304
    %v1306 = vsel %vm183, %v1208, %v1211
    %v1308 = vsel %vm172, %v1305, 0
    %1310 = vmatpush.msra.mxu0 0.0
    %1311 = vmatpush.msra.mxu0 0.0
    %1312 = vmatpush.msra.mxu0 0.0
    %1313 = vmatpush.msra.mxu0 0.0
    %1314 = vmatpush.msra.mxu0 0.0
    %1315 = vmatpush.msra.mxu0 0.0
    %1316 = vmatpush.msra.mxu0 0.0
    %1317 = vmatpush.msra.mxu0 0.0
    %1318 = vmatpush.msra.mxu0 %v1230
    %1319 = vmatpush.msra.mxu0 %v1229
    %1320 = vmatpush.msra.mxu0 %v1228
    %1321 = vmatpush.msra.mxu0 %v1227
    %1322 = vmatpush.msra.mxu0 %v1226
    %1323 = vmatpush.msra.mxu0 %v1225
    %1324 = vmatpush.msra.mxu0 %v1224
    %1325 = vmatpush.msra.mxu0 %v1223
    %1326 = vmatmul.f32.gmra.mxu0 %v1308
    %v1327 = vpop.f32.mrf.mxu0
    %v1328 = vadd.f32 0.0, %v1327
    %1329 = vdwg.mxu0
    %v1330 = vadd.f32 %v1306, %v1328
    %v1331 = vtanh.pop %v1330
    %v1332 = vsel %vm183, %v1211, %v1208
    %v1334 = vsel %vm172, %v1331, 0
    %1336 = vmatpush.msra.mxu0 0.0
    %1337 = vmatpush.msra.mxu0 0.0
    %1338 = vmatpush.msra.mxu0 0.0
    %1339 = vmatpush.msra.mxu0 0.0
    %1340 = vmatpush.msra.mxu0 0.0
    %1341 = vmatpush.msra.mxu0 0.0
    %1342 = vmatpush.msra.mxu0 0.0
    %1343 = vmatpush.msra.mxu0 0.0
    %1344 = vmatpush.msra.mxu0 %v1230
    %1345 = vmatpush.msra.mxu0 %v1229
    %1346 = vmatpush.msra.mxu0 %v1228
    %1347 = vmatpush.msra.mxu0 %v1227
    %1348 = vmatpush.msra.mxu0 %v1226
    %1349 = vmatpush.msra.mxu0 %v1225
    %1350 = vmatpush.msra.mxu0 %v1224
    %1351 = vmatpush.msra.mxu0 %v1223
    %1352 = vmatmul.f32.gmra.mxu0 %v1334
    %v1353 = vpop.f32.mrf.mxu0
    %v1354 = vadd.f32 0.0, %v1353
    %1355 = vdwg.mxu0
    %v1356 = vadd.f32 %v1332, %v1354
    %v1357 = vtanh.pop %v1356
    %v1358 = vsel %vm183, %v1214, %v1205
    %v1360 = vsel %vm172, %v1357, 0
    %1362 = vmatpush.msra.mxu0 0.0
    %1363 = vmatpush.msra.mxu0 0.0
    %1364 = vmatpush.msra.mxu0 0.0
    %1365 = vmatpush.msra.mxu0 0.0
    %1366 = vmatpush.msra.mxu0 0.0
    %1367 = vmatpush.msra.mxu0 0.0
    %1368 = vmatpush.msra.mxu0 0.0
    %1369 = vmatpush.msra.mxu0 0.0
    %1370 = vmatpush.msra.mxu0 %v1230
    %1371 = vmatpush.msra.mxu0 %v1229
    %1372 = vmatpush.msra.mxu0 %v1228
    %1373 = vmatpush.msra.mxu0 %v1227
    %1374 = vmatpush.msra.mxu0 %v1226
    %1375 = vmatpush.msra.mxu0 %v1225
    %1376 = vmatpush.msra.mxu0 %v1224
    %1377 = vmatpush.msra.mxu0 %v1223
    %1378 = vmatmul.f32.gmra.mxu0 %v1360
    %v1379 = vpop.f32.mrf.mxu0
    %v1380 = vadd.f32 0.0, %v1379
    %1381 = vdwg.mxu0
    %v1382 = vadd.f32 %v1358, %v1380
    %v1383 = vtanh.pop %v1382
    %v1384 = vsel %vm183, %v1217, %v1202
    %v1386 = vsel %vm172, %v1383, 0
    %1388 = vmatpush.msra.mxu0 0.0
    %1389 = vmatpush.msra.mxu0 0.0
    %1390 = vmatpush.msra.mxu0 0.0
    %1391 = vmatpush.msra.mxu0 0.0
    %1392 = vmatpush.msra.mxu0 0.0
    %1393 = vmatpush.msra.mxu0 0.0
    %1394 = vmatpush.msra.mxu0 0.0
    %1395 = vmatpush.msra.mxu0 0.0
    %1396 = vmatpush.msra.mxu0 %v1230
    %1397 = vmatpush.msra.mxu0 %v1229
    %1398 = vmatpush.msra.mxu0 %v1228
    %1399 = vmatpush.msra.mxu0 %v1227
    %1400 = vmatpush.msra.mxu0 %v1226
    %1401 = vmatpush.msra.mxu0 %v1225
    %1402 = vmatpush.msra.mxu0 %v1224
    %1403 = vmatpush.msra.mxu0 %v1223
    %1404 = vmatmul.f32.gmra.mxu0 %v1386
    %v1405 = vpop.f32.mrf.mxu0
    %v1406 = vadd.f32 0.0, %v1405
    %1407 = vdwg.mxu0
    %v1408 = vadd.f32 %v1384, %v1406
    %v1409 = vtanh.pop %v1408
    %v1410 = vsel %vm183, %v1220, %v1199
    %v1412 = vsel %vm172, %v1409, 0
    %1414 = vmatpush.msra.mxu0 0.0
    %1415 = vmatpush.msra.mxu0 0.0
    %1416 = vmatpush.msra.mxu0 0.0
    %1417 = vmatpush.msra.mxu0 0.0
    %1418 = vmatpush.msra.mxu0 0.0
    %1419 = vmatpush.msra.mxu0 0.0
    %1420 = vmatpush.msra.mxu0 0.0
    %1421 = vmatpush.msra.mxu0 0.0
    %1422 = vmatpush.msra.mxu0 %v1230
    %1423 = vmatpush.msra.mxu0 %v1229
    %1424 = vmatpush.msra.mxu0 %v1228
    %1425 = vmatpush.msra.mxu0 %v1227
    %1426 = vmatpush.msra.mxu0 %v1226
    %1427 = vmatpush.msra.mxu0 %v1225
    %1428 = vmatpush.msra.mxu0 %v1224
    %1429 = vmatpush.msra.mxu0 %v1223
    %1430 = vmatmul.f32.gmra.mxu0 %v1412
    %v1431 = vpop.f32.mrf.mxu0
    %v1432 = vadd.f32 0.0, %v1431
    %1433 = vdwg.mxu0
    %v1434 = vadd.f32 %v1410, %v1432
    %v1435 = vtanh.pop %v1434
    %v1436 = vsel %vm183, %v1253, %v1435
    %1437 = vst.msk [vmem:[#allocation2] sm:$0xff] %vm172, %v1436
    %v1438 = vsel %vm183, %v1279, %v1409
    %1439 = vst.msk [vmem:[#allocation2 + $0x8] sm:$0xff] %vm172, %v1438
    %v1440 = vsel %vm183, %v1305, %v1383
    %1441 = vst.msk [vmem:[#allocation2 + $0x10] sm:$0xff] %vm172, %v1440
    %v1442 = vsel %vm183, %v1331, %v1357
    %1443 = vst.msk [vmem:[#allocation2 + $0x18] sm:$0xff] %vm172, %v1442
    %v1444 = vsel %vm183, %v1357, %v1331
    %1445 = vst.msk [vmem:[#allocation2 + $0x20] sm:$0xff] %vm172, %v1444
    %v1446 = vsel %vm183, %v1383, %v1305
    %1447 = vst.msk [vmem:[#allocation2 + $0x28] sm:$0xff] %vm172, %v1446
    %v1448 = vsel %vm183, %v1409, %v1279
    %1449 = vst.msk [vmem:[#allocation2 + $0x30] sm:$0xff] %vm172, %v1448
    %v1450 = vsel %vm183, %v1435, %v1253
    %1451 = vst.msk [vmem:[#allocation2 + $0x38] sm:$0xff] %vm172, %v1450
    %v1452 = vld [vmem:[#allocation2] sm:$0xff]
    %v1453 = vld [vmem:[#allocation2 + $0x8] sm:$0xff]
    %v1454 = vld [vmem:[#allocation2 + $0x10] sm:$0xff]
    %v1455 = vld [vmem:[#allocation2 + $0x18] sm:$0xff]
    %v1456 = vld [vmem:[#allocation2 + $0x20] sm:$0xff]
    %v1457 = vld [vmem:[#allocation2 + $0x28] sm:$0xff]
    %v1458 = vld [vmem:[#allocation2 + $0x30] sm:$0xff]
    %v1459 = vld [vmem:[#allocation2 + $0x38] sm:$0xff]
    %s1460 = scalar_lea.vmem [#allocation3], 256
    %v1461 = vld [vmem:[%s1460] sm:$0xff]
    %v1462 = vld [vmem:[%s1460 + $0x8] sm:$0xff]
    %v1463 = vld [vmem:[%s1460 + $0x10] sm:$0xff]
    %v1464 = vld [vmem:[%s1460 + $0x18] sm:$0xff]
    %v1465 = vld [vmem:[%s1460 + $0x20] sm:$0xff]
    %v1466 = vld [vmem:[%s1460 + $0x28] sm:$0xff]
    %v1467 = vld [vmem:[%s1460 + $0x30] sm:$0xff]
    %v1468 = vld [vmem:[%s1460 + $0x38] sm:$0xff]
    %s1469 = scalar_lea.vmem %s5, 4
    %v1470 = vld [vmem:[%s1469] sm:$0x1]
    %v1472 = vperm.slane %v1470, 0
    %v1475 = vsel %vm172, %v1452, 0
    %v1478 = vsel %vm172, %v1453, 0
    %v1481 = vsel %vm172, %v1454, 0
    %v1484 = vsel %vm172, %v1455, 0
    %v1487 = vsel %vm172, %v1456, 0
    %v1490 = vsel %vm172, %v1457, 0
    %v1493 = vsel %vm172, %v1458, 0
    %v1496 = vsel %vm172, %v1459, 0
    %1498 = vmatpush.msra.mxu0 0.0
    %1499 = vmatpush.msra.mxu0 0.0
    %1500 = vmatpush.msra.mxu0 0.0
    %1501 = vmatpush.msra.mxu0 0.0
    %1502 = vmatpush.msra.mxu0 0.0
    %1503 = vmatpush.msra.mxu0 0.0
    %1504 = vmatpush.msra.mxu0 0.0
    %1505 = vmatpush.msra.mxu0 0.0
    %1506 = vmatpush.msra.mxu0 %v1468
    %1507 = vmatpush.msra.mxu0 %v1467
    %1508 = vmatpush.msra.mxu0 %v1466
    %1509 = vmatpush.msra.mxu0 %v1465
    %1510 = vmatpush.msra.mxu0 %v1464
    %1511 = vmatpush.msra.mxu0 %v1463
    %1512 = vmatpush.msra.mxu0 %v1462
    %1513 = vmatpush.msra.mxu0 %v1461
    %1514 = vmatmul.f32.gmra.mxu0 %v1475
    %v1515 = vpop.f32.mrf.mxu0
    %v1516 = vadd.f32 %v1472, %v1515
    %1517 = vmatmul.f32.gmra.mxu0 %v1478
    %v1518 = vpop.f32.mrf.mxu0
    %v1519 = vadd.f32 %v1472, %v1518
    %1520 = vmatmul.f32.gmra.mxu0 %v1481
    %v1521 = vpop.f32.mrf.mxu0
    %v1522 = vadd.f32 %v1472, %v1521
    %1523 = vmatmul.f32.gmra.mxu0 %v1484
    %v1524 = vpop.f32.mrf.mxu0
    %v1525 = vadd.f32 %v1472, %v1524
    %1526 = vmatmul.f32.gmra.mxu0 %v1487
    %v1527 = vpop.f32.mrf.mxu0
    %v1528 = vadd.f32 %v1472, %v1527
    %1529 = vmatmul.f32.gmra.mxu0 %v1490
    %v1530 = vpop.f32.mrf.mxu0
    %v1531 = vadd.f32 %v1472, %v1530
    %1532 = vmatmul.f32.gmra.mxu0 %v1493
    %v1533 = vpop.f32.mrf.mxu0
    %v1534 = vadd.f32 %v1472, %v1533
    %1535 = vmatmul.f32.gmra.mxu0 %v1496
    %v1536 = vpop.f32.mrf.mxu0
    %v1537 = vadd.f32 %v1472, %v1536
    %1538 = vdwg.mxu0
    %s1539 = scalar_lea.vmem [#allocation5], 256
    %v1540 = vld [vmem:[%s1539] sm:$0xff]
    %v1541 = vld [vmem:[%s1539 + $0x8] sm:$0xff]
    %v1542 = vld [vmem:[%s1539 + $0x10] sm:$0xff]
    %v1543 = vld [vmem:[%s1539 + $0x18] sm:$0xff]
    %v1544 = vld [vmem:[%s1539 + $0x20] sm:$0xff]
    %v1545 = vld [vmem:[%s1539 + $0x28] sm:$0xff]
    %v1546 = vld [vmem:[%s1539 + $0x30] sm:$0xff]
    %v1547 = vld [vmem:[%s1539 + $0x38] sm:$0xff]
    %v1548 = vsel %vm183, %v1516, %v1537
    %1549 = vmatpush.msra.mxu0 0.0
    %1550 = vmatpush.msra.mxu0 0.0
    %1551 = vmatpush.msra.mxu0 0.0
    %1552 = vmatpush.msra.mxu0 0.0
    %1553 = vmatpush.msra.mxu0 0.0
    %1554 = vmatpush.msra.mxu0 0.0
    %1555 = vmatpush.msra.mxu0 0.0
    %1556 = vmatpush.msra.mxu0 0.0
    %1557 = vmatpush.msra.mxu0 %v1547
    %1558 = vmatpush.msra.mxu0 %v1546
    %1559 = vmatpush.msra.mxu0 %v1545
    %1560 = vmatpush.msra.mxu0 %v1544
    %1561 = vmatpush.msra.mxu0 %v1543
    %1562 = vmatpush.msra.mxu0 %v1542
    %1563 = vmatpush.msra.mxu0 %v1541
    %1564 = vmatpush.msra.mxu0 %v1540
    %1565 = vmatmul.f32.gmra.mxu0 %v279
    %v1566 = vpop.f32.mrf.mxu0
    %v1567 = vadd.f32 0.0, %v1566
    %1568 = vdwg.mxu0
    %v1569 = vadd.f32 %v1548, %v1567
    %v1570 = vtanh.pop %v1569
    %v1571 = vsel %vm183, %v1519, %v1534
    %v1573 = vsel %vm172, %v1570, 0
    %1575 = vmatpush.msra.mxu0 0.0
    %1576 = vmatpush.msra.mxu0 0.0
    %1577 = vmatpush.msra.mxu0 0.0
    %1578 = vmatpush.msra.mxu0 0.0
    %1579 = vmatpush.msra.mxu0 0.0
    %1580 = vmatpush.msra.mxu0 0.0
    %1581 = vmatpush.msra.mxu0 0.0
    %1582 = vmatpush.msra.mxu0 0.0
    %1583 = vmatpush.msra.mxu0 %v1547
    %1584 = vmatpush.msra.mxu0 %v1546
    %1585 = vmatpush.msra.mxu0 %v1545
    %1586 = vmatpush.msra.mxu0 %v1544
    %1587 = vmatpush.msra.mxu0 %v1543
    %1588 = vmatpush.msra.mxu0 %v1542
    %1589 = vmatpush.msra.mxu0 %v1541
    %1590 = vmatpush.msra.mxu0 %v1540
    %1591 = vmatmul.f32.gmra.mxu0 %v1573
    %v1592 = vpop.f32.mrf.mxu0
    %v1593 = vadd.f32 0.0, %v1592
    %1594 = vdwg.mxu0
    %v1595 = vadd.f32 %v1571, %v1593
    %v1596 = vtanh.pop %v1595
    %v1597 = vsel %vm183, %v1522, %v1531
    %v1599 = vsel %vm172, %v1596, 0
    %1601 = vmatpush.msra.mxu0 0.0
    %1602 = vmatpush.msra.mxu0 0.0
    %1603 = vmatpush.msra.mxu0 0.0
    %1604 = vmatpush.msra.mxu0 0.0
    %1605 = vmatpush.msra.mxu0 0.0
    %1606 = vmatpush.msra.mxu0 0.0
    %1607 = vmatpush.msra.mxu0 0.0
    %1608 = vmatpush.msra.mxu0 0.0
    %1609 = vmatpush.msra.mxu0 %v1547
    %1610 = vmatpush.msra.mxu0 %v1546
    %1611 = vmatpush.msra.mxu0 %v1545
    %1612 = vmatpush.msra.mxu0 %v1544
    %1613 = vmatpush.msra.mxu0 %v1543
    %1614 = vmatpush.msra.mxu0 %v1542
    %1615 = vmatpush.msra.mxu0 %v1541
    %1616 = vmatpush.msra.mxu0 %v1540
    %1617 = vmatmul.f32.gmra.mxu0 %v1599
    %v1618 = vpop.f32.mrf.mxu0
    %v1619 = vadd.f32 0.0, %v1618
    %1620 = vdwg.mxu0
    %v1621 = vadd.f32 %v1597, %v1619
    %v1622 = vtanh.pop %v1621
    %v1623 = vsel %vm183, %v1525, %v1528
    %v1625 = vsel %vm172, %v1622, 0
    %1627 = vmatpush.msra.mxu0 0.0
    %1628 = vmatpush.msra.mxu0 0.0
    %1629 = vmatpush.msra.mxu0 0.0
    %1630 = vmatpush.msra.mxu0 0.0
    %1631 = vmatpush.msra.mxu0 0.0
    %1632 = vmatpush.msra.mxu0 0.0
    %1633 = vmatpush.msra.mxu0 0.0
    %1634 = vmatpush.msra.mxu0 0.0
    %1635 = vmatpush.msra.mxu0 %v1547
    %1636 = vmatpush.msra.mxu0 %v1546
    %1637 = vmatpush.msra.mxu0 %v1545
    %1638 = vmatpush.msra.mxu0 %v1544
    %1639 = vmatpush.msra.mxu0 %v1543
    %1640 = vmatpush.msra.mxu0 %v1542
    %1641 = vmatpush.msra.mxu0 %v1541
    %1642 = vmatpush.msra.mxu0 %v1540
    %1643 = vmatmul.f32.gmra.mxu0 %v1625
    %v1644 = vpop.f32.mrf.mxu0
    %v1645 = vadd.f32 0.0, %v1644
    %1646 = vdwg.mxu0
    %v1647 = vadd.f32 %v1623, %v1645
    %v1648 = vtanh.pop %v1647
    %v1649 = vsel %vm183, %v1528, %v1525
    %v1651 = vsel %vm172, %v1648, 0
    %1653 = vmatpush.msra.mxu0 0.0
    %1654 = vmatpush.msra.mxu0 0.0
    %1655 = vmatpush.msra.mxu0 0.0
    %1656 = vmatpush.msra.mxu0 0.0
    %1657 = vmatpush.msra.mxu0 0.0
    %1658 = vmatpush.msra.mxu0 0.0
    %1659 = vmatpush.msra.mxu0 0.0
    %1660 = vmatpush.msra.mxu0 0.0
    %1661 = vmatpush.msra.mxu0 %v1547
    %1662 = vmatpush.msra.mxu0 %v1546
    %1663 = vmatpush.msra.mxu0 %v1545
    %1664 = vmatpush.msra.mxu0 %v1544
    %1665 = vmatpush.msra.mxu0 %v1543
    %1666 = vmatpush.msra.mxu0 %v1542
    %1667 = vmatpush.msra.mxu0 %v1541
    %1668 = vmatpush.msra.mxu0 %v1540
    %1669 = vmatmul.f32.gmra.mxu0 %v1651
    %v1670 = vpop.f32.mrf.mxu0
    %v1671 = vadd.f32 0.0, %v1670
    %1672 = vdwg.mxu0
    %v1673 = vadd.f32 %v1649, %v1671
    %v1674 = vtanh.pop %v1673
    %v1675 = vsel %vm183, %v1531, %v1522
    %v1677 = vsel %vm172, %v1674, 0
    %1679 = vmatpush.msra.mxu0 0.0
    %1680 = vmatpush.msra.mxu0 0.0
    %1681 = vmatpush.msra.mxu0 0.0
    %1682 = vmatpush.msra.mxu0 0.0
    %1683 = vmatpush.msra.mxu0 0.0
    %1684 = vmatpush.msra.mxu0 0.0
    %1685 = vmatpush.msra.mxu0 0.0
    %1686 = vmatpush.msra.mxu0 0.0
    %1687 = vmatpush.msra.mxu0 %v1547
    %1688 = vmatpush.msra.mxu0 %v1546
    %1689 = vmatpush.msra.mxu0 %v1545
    %1690 = vmatpush.msra.mxu0 %v1544
    %1691 = vmatpush.msra.mxu0 %v1543
    %1692 = vmatpush.msra.mxu0 %v1542
    %1693 = vmatpush.msra.mxu0 %v1541
    %1694 = vmatpush.msra.mxu0 %v1540
    %1695 = vmatmul.f32.gmra.mxu0 %v1677
    %v1696 = vpop.f32.mrf.mxu0
    %v1697 = vadd.f32 0.0, %v1696
    %1698 = vdwg.mxu0
    %v1699 = vadd.f32 %v1675, %v1697
    %v1700 = vtanh.pop %v1699
    %v1701 = vsel %vm183, %v1534, %v1519
    %v1703 = vsel %vm172, %v1700, 0
    %1705 = vmatpush.msra.mxu0 0.0
    %1706 = vmatpush.msra.mxu0 0.0
    %1707 = vmatpush.msra.mxu0 0.0
    %1708 = vmatpush.msra.mxu0 0.0
    %1709 = vmatpush.msra.mxu0 0.0
    %1710 = vmatpush.msra.mxu0 0.0
    %1711 = vmatpush.msra.mxu0 0.0
    %1712 = vmatpush.msra.mxu0 0.0
    %1713 = vmatpush.msra.mxu0 %v1547
    %1714 = vmatpush.msra.mxu0 %v1546
    %1715 = vmatpush.msra.mxu0 %v1545
    %1716 = vmatpush.msra.mxu0 %v1544
    %1717 = vmatpush.msra.mxu0 %v1543
    %1718 = vmatpush.msra.mxu0 %v1542
    %1719 = vmatpush.msra.mxu0 %v1541
    %1720 = vmatpush.msra.mxu0 %v1540
    %1721 = vmatmul.f32.gmra.mxu0 %v1703
    %v1722 = vpop.f32.mrf.mxu0
    %v1723 = vadd.f32 0.0, %v1722
    %1724 = vdwg.mxu0
    %v1725 = vadd.f32 %v1701, %v1723
    %v1726 = vtanh.pop %v1725
    %v1727 = vsel %vm183, %v1537, %v1516
    %v1729 = vsel %vm172, %v1726, 0
    %1731 = vmatpush.msra.mxu0 0.0
    %1732 = vmatpush.msra.mxu0 0.0
    %1733 = vmatpush.msra.mxu0 0.0
    %1734 = vmatpush.msra.mxu0 0.0
    %1735 = vmatpush.msra.mxu0 0.0
    %1736 = vmatpush.msra.mxu0 0.0
    %1737 = vmatpush.msra.mxu0 0.0
    %1738 = vmatpush.msra.mxu0 0.0
    %1739 = vmatpush.msra.mxu0 %v1547
    %1740 = vmatpush.msra.mxu0 %v1546
    %1741 = vmatpush.msra.mxu0 %v1545
    %1742 = vmatpush.msra.mxu0 %v1544
    %1743 = vmatpush.msra.mxu0 %v1543
    %1744 = vmatpush.msra.mxu0 %v1542
    %1745 = vmatpush.msra.mxu0 %v1541
    %1746 = vmatpush.msra.mxu0 %v1540
    %1747 = vmatmul.f32.gmra.mxu0 %v1729
    %v1748 = vpop.f32.mrf.mxu0
    %v1749 = vadd.f32 0.0, %v1748
    %1750 = vdwg.mxu0
    %v1751 = vadd.f32 %v1727, %v1749
    %v1752 = vtanh.pop %v1751
    %v1753 = vsel %vm183, %v1570, %v1752
    %1754 = vst.msk [vmem:[#allocation2] sm:$0xff] %vm172, %v1753
    %v1755 = vsel %vm183, %v1596, %v1726
    %1756 = vst.msk [vmem:[#allocation2 + $0x8] sm:$0xff] %vm172, %v1755
    %v1757 = vsel %vm183, %v1622, %v1700
    %1758 = vst.msk [vmem:[#allocation2 + $0x10] sm:$0xff] %vm172, %v1757
    %v1759 = vsel %vm183, %v1648, %v1674
    %1760 = vst.msk [vmem:[#allocation2 + $0x18] sm:$0xff] %vm172, %v1759
    %v1761 = vsel %vm183, %v1674, %v1648
    %1762 = vst.msk [vmem:[#allocation2 + $0x20] sm:$0xff] %vm172, %v1761
    %v1763 = vsel %vm183, %v1700, %v1622
    %1764 = vst.msk [vmem:[#allocation2 + $0x28] sm:$0xff] %vm172, %v1763
    %v1765 = vsel %vm183, %v1726, %v1596
    %1766 = vst.msk [vmem:[#allocation2 + $0x30] sm:$0xff] %vm172, %v1765
    %v1767 = vsel %vm183, %v1752, %v1570
    %1768 = vst.msk [vmem:[#allocation2 + $0x38] sm:$0xff] %vm172, %v1767
    %v1769 = vld [vmem:[#allocation2] sm:$0xff]
    %v1770 = vld [vmem:[#allocation2 + $0x8] sm:$0xff]
    %v1771 = vld [vmem:[#allocation2 + $0x10] sm:$0xff]
    %v1772 = vld [vmem:[#allocation2 + $0x18] sm:$0xff]
    %v1773 = vld [vmem:[#allocation2 + $0x20] sm:$0xff]
    %v1774 = vld [vmem:[#allocation2 + $0x28] sm:$0xff]
    %v1775 = vld [vmem:[#allocation2 + $0x30] sm:$0xff]
    %v1776 = vld [vmem:[#allocation2 + $0x38] sm:$0xff]
    %v1777 = vld [vmem:[%s6] sm:$0xff]
    %v1778 = vld [vmem:[%s6 + $0x8] sm:$0xff]
    %v1779 = vld [vmem:[%s6 + $0x10] sm:$0xff]
    %v1780 = vld [vmem:[%s6 + $0x18] sm:$0xff]
    %v1781 = vld [vmem:[%s6 + $0x20] sm:$0xff]
    %v1782 = vld [vmem:[%s6 + $0x28] sm:$0xff]
    %v1783 = vld [vmem:[%s6 + $0x30] sm:$0xff]
    %v1784 = vld [vmem:[%s6 + $0x38] sm:$0xff]
    %v1785 = vld [vmem:[%s7] sm:$0x1]
    %v1787 = vperm.slane %v1785, 0
    %v1790 = vsel %vm172, %v1769, 0
    %v1793 = vsel %vm172, %v1770, 0
    %v1796 = vsel %vm172, %v1771, 0
    %v1799 = vsel %vm172, %v1772, 0
    %v1802 = vsel %vm172, %v1773, 0
    %v1805 = vsel %vm172, %v1774, 0
    %v1808 = vsel %vm172, %v1775, 0
    %v1811 = vsel %vm172, %v1776, 0
    %1813 = vmatpush.msra.mxu0 0.0
    %1814 = vmatpush.msra.mxu0 0.0
    %1815 = vmatpush.msra.mxu0 0.0
    %1816 = vmatpush.msra.mxu0 0.0
    %1817 = vmatpush.msra.mxu0 0.0
    %1818 = vmatpush.msra.mxu0 0.0
    %1819 = vmatpush.msra.mxu0 0.0
    %1820 = vmatpush.msra.mxu0 0.0
    %1821 = vmatpush.msra.mxu0 %v1784
    %1822 = vmatpush.msra.mxu0 %v1783
    %1823 = vmatpush.msra.mxu0 %v1782
    %1824 = vmatpush.msra.mxu0 %v1781
    %1825 = vmatpush.msra.mxu0 %v1780
    %1826 = vmatpush.msra.mxu0 %v1779
    %1827 = vmatpush.msra.mxu0 %v1778
    %1828 = vmatpush.msra.mxu0 %v1777
    %1829 = vmatmul.f32.gmra.mxu0 %v1790
    %v1830 = vpop.f32.mrf.mxu0
    %v1831 = vadd.f32 %v1787, %v1830
    %1832 = vmatmul.f32.gmra.mxu0 %v1793
    %v1833 = vpop.f32.mrf.mxu0
    %v1834 = vadd.f32 %v1787, %v1833
    %1835 = vmatmul.f32.gmra.mxu0 %v1796
    %v1836 = vpop.f32.mrf.mxu0
    %v1837 = vadd.f32 %v1787, %v1836
    %1838 = vmatmul.f32.gmra.mxu0 %v1799
    %v1839 = vpop.f32.mrf.mxu0
    %v1840 = vadd.f32 %v1787, %v1839
    %1841 = vmatmul.f32.gmra.mxu0 %v1802
    %v1842 = vpop.f32.mrf.mxu0
    %v1843 = vadd.f32 %v1787, %v1842
    %1844 = vmatmul.f32.gmra.mxu0 %v1805
    %v1845 = vpop.f32.mrf.mxu0
    %v1846 = vadd.f32 %v1787, %v1845
    %1847 = vmatmul.f32.gmra.mxu0 %v1808
    %v1848 = vpop.f32.mrf.mxu0
    %v1849 = vadd.f32 %v1787, %v1848
    %1850 = vmatmul.f32.gmra.mxu0 %v1811
    %v1851 = vpop.f32.mrf.mxu0
    %v1852 = vadd.f32 %v1787, %v1851
    %1853 = vdwg.mxu0
    %v1854 = vxor.u32 %v1831, 2147483648
    %v1855 = vxor.u32 %v1834, 2147483648
    %v1856 = vxor.u32 %v1837, 2147483648
    %v1857 = vxor.u32 %v1840, 2147483648
    %v1858 = vxor.u32 %v1843, 2147483648
    %v1859 = vxor.u32 %v1846, 2147483648
    %v1860 = vxor.u32 %v1849, 2147483648
    %v1861 = vxor.u32 %v1852, 2147483648
    %v1862 = vmul.f32 %v1854, 1.442695
    %v1863 = vpow.pop %v1862
    %v1864 = vmul.f32 %v1855, 1.442695
    %v1865 = vpow.pop %v1864
    %v1866 = vmul.f32 %v1856, 1.442695
    %v1867 = vpow.pop %v1866
    %v1868 = vmul.f32 %v1857, 1.442695
    %v1869 = vpow.pop %v1868
    %v1870 = vmul.f32 %v1858, 1.442695
    %v1871 = vpow.pop %v1870
    %v1872 = vmul.f32 %v1859, 1.442695
    %v1873 = vpow.pop %v1872
    %v1874 = vmul.f32 %v1860, 1.442695
    %v1875 = vpow.pop %v1874
    %v1876 = vmul.f32 %v1861, 1.442695
    %v1877 = vpow.pop %v1876
    %v1878 = vadd.f32 %v1863, 1.0
    %v1879 = vadd.f32 %v1865, 1.0
    %v1880 = vadd.f32 %v1867, 1.0
    %v1881 = vadd.f32 %v1869, 1.0
    %v1882 = vadd.f32 %v1871, 1.0
    %v1883 = vadd.f32 %v1873, 1.0
    %v1884 = vadd.f32 %v1875, 1.0
    %v1885 = vadd.f32 %v1877, 1.0
    %v1886 = vrcp.pop %v1878
    %v1887 = vmul.f32 %v1878, %v1886
    %v1888 = vsub.f32 1.0, %v1887
    %v1889 = vmul.f32 %v1886, %v1888
    %v1890 = vadd.f32 %v1886, %v1889
    %vm1891 = vweird.f32 %v1878
    %vm1892 = vweird.f32 %v1886
    %vm1893 = vmor %vm1891, %vm1892
    %v1894 = vsel %vm1893, %v1886, %v1890
    %v1895 = vand.u32 2147483647, %v1878
    %vm1896 = vcmp.eq.f32.partialorder %v1895, 8.507059e+37
    %v1897 = vand.u32 %v1878, 2147483648
    %v1898 = vor.u32 1.1754944e-38, %v1897
    %v1899 = vsel %vm1896, %v1898, %v1894
    %v1900 = vmul.f32 1.0, %v1899
    %v1901 = vrcp.pop %v1879
    %v1902 = vmul.f32 %v1879, %v1901
    %v1903 = vsub.f32 1.0, %v1902
    %v1904 = vmul.f32 %v1901, %v1903
    %v1905 = vadd.f32 %v1901, %v1904
    %vm1906 = vweird.f32 %v1879
    %vm1907 = vweird.f32 %v1901
    %vm1908 = vmor %vm1906, %vm1907
    %v1909 = vsel %vm1908, %v1901, %v1905
    %v1910 = vand.u32 2147483647, %v1879
    %vm1911 = vcmp.eq.f32.partialorder %v1910, 8.507059e+37
    %v1912 = vand.u32 %v1879, 2147483648
    %v1913 = vor.u32 1.1754944e-38, %v1912
    %v1914 = vsel %vm1911, %v1913, %v1909
    %v1915 = vmul.f32 1.0, %v1914
    %v1916 = vrcp.pop %v1880
    %v1917 = vmul.f32 %v1880, %v1916
    %v1918 = vsub.f32 1.0, %v1917
    %v1919 = vmul.f32 %v1916, %v1918
    %v1920 = vadd.f32 %v1916, %v1919
    %vm1921 = vweird.f32 %v1880
    %vm1922 = vweird.f32 %v1916
    %vm1923 = vmor %vm1921, %vm1922
    %v1924 = vsel %vm1923, %v1916, %v1920
    %v1925 = vand.u32 2147483647, %v1880
    %vm1926 = vcmp.eq.f32.partialorder %v1925, 8.507059e+37
    %v1927 = vand.u32 %v1880, 2147483648
    %v1928 = vor.u32 1.1754944e-38, %v1927
    %v1929 = vsel %vm1926, %v1928, %v1924
    %v1930 = vmul.f32 1.0, %v1929
    %v1931 = vrcp.pop %v1881
    %v1932 = vmul.f32 %v1881, %v1931
    %v1933 = vsub.f32 1.0, %v1932
    %v1934 = vmul.f32 %v1931, %v1933
    %v1935 = vadd.f32 %v1931, %v1934
    %vm1936 = vweird.f32 %v1881
    %vm1937 = vweird.f32 %v1931
    %vm1938 = vmor %vm1936, %vm1937
    %v1939 = vsel %vm1938, %v1931, %v1935
    %v1940 = vand.u32 2147483647, %v1881
    %vm1941 = vcmp.eq.f32.partialorder %v1940, 8.507059e+37
    %v1942 = vand.u32 %v1881, 2147483648
    %v1943 = vor.u32 1.1754944e-38, %v1942
    %v1944 = vsel %vm1941, %v1943, %v1939
    %v1945 = vmul.f32 1.0, %v1944
    %v1946 = vrcp.pop %v1882
    %v1947 = vmul.f32 %v1882, %v1946
    %v1948 = vsub.f32 1.0, %v1947
    %v1949 = vmul.f32 %v1946, %v1948
    %v1950 = vadd.f32 %v1946, %v1949
    %vm1951 = vweird.f32 %v1882
    %vm1952 = vweird.f32 %v1946
    %vm1953 = vmor %vm1951, %vm1952
    %v1954 = vsel %vm1953, %v1946, %v1950
    %v1955 = vand.u32 2147483647, %v1882
    %vm1956 = vcmp.eq.f32.partialorder %v1955, 8.507059e+37
    %v1957 = vand.u32 %v1882, 2147483648
    %v1958 = vor.u32 1.1754944e-38, %v1957
    %v1959 = vsel %vm1956, %v1958, %v1954
    %v1960 = vmul.f32 1.0, %v1959
    %v1961 = vrcp.pop %v1883
    %v1962 = vmul.f32 %v1883, %v1961
    %v1963 = vsub.f32 1.0, %v1962
    %v1964 = vmul.f32 %v1961, %v1963
    %v1965 = vadd.f32 %v1961, %v1964
    %vm1966 = vweird.f32 %v1883
    %vm1967 = vweird.f32 %v1961
    %vm1968 = vmor %vm1966, %vm1967
    %v1969 = vsel %vm1968, %v1961, %v1965
    %v1970 = vand.u32 2147483647, %v1883
    %vm1971 = vcmp.eq.f32.partialorder %v1970, 8.507059e+37
    %v1972 = vand.u32 %v1883, 2147483648
    %v1973 = vor.u32 1.1754944e-38, %v1972
    %v1974 = vsel %vm1971, %v1973, %v1969
    %v1975 = vmul.f32 1.0, %v1974
    %v1976 = vrcp.pop %v1884
    %v1977 = vmul.f32 %v1884, %v1976
    %v1978 = vsub.f32 1.0, %v1977
    %v1979 = vmul.f32 %v1976, %v1978
    %v1980 = vadd.f32 %v1976, %v1979
    %vm1981 = vweird.f32 %v1884
    %vm1982 = vweird.f32 %v1976
    %vm1983 = vmor %vm1981, %vm1982
    %v1984 = vsel %vm1983, %v1976, %v1980
    %v1985 = vand.u32 2147483647, %v1884
    %vm1986 = vcmp.eq.f32.partialorder %v1985, 8.507059e+37
    %v1987 = vand.u32 %v1884, 2147483648
    %v1988 = vor.u32 1.1754944e-38, %v1987
    %v1989 = vsel %vm1986, %v1988, %v1984
    %v1990 = vmul.f32 1.0, %v1989
    %v1991 = vrcp.pop %v1885
    %v1992 = vmul.f32 %v1885, %v1991
    %v1993 = vsub.f32 1.0, %v1992
    %v1994 = vmul.f32 %v1991, %v1993
    %v1995 = vadd.f32 %v1991, %v1994
    %vm1996 = vweird.f32 %v1885
    %vm1997 = vweird.f32 %v1991
    %vm1998 = vmor %vm1996, %vm1997
    %v1999 = vsel %vm1998, %v1991, %v1995
    %v2000 = vand.u32 2147483647, %v1885
    %vm2001 = vcmp.eq.f32.partialorder %v2000, 8.507059e+37
    %v2002 = vand.u32 %v1885, 2147483648
    %v2003 = vor.u32 1.1754944e-38, %v2002
    %v2004 = vsel %vm2001, %v2003, %v1999
    %v2005 = vmul.f32 1.0, %v2004
    %2006 = vst [vmem:[%s10] sm:$0xff] %v1900
    %2007 = vst [vmem:[%s10 + $0x8] sm:$0xff] %v1915
    %2008 = vst [vmem:[%s10 + $0x10] sm:$0xff] %v1930
    %2009 = vst [vmem:[%s10 + $0x18] sm:$0xff] %v1945
    %2010 = vst [vmem:[%s10 + $0x20] sm:$0xff] %v1960
    %2011 = vst [vmem:[%s10 + $0x28] sm:$0xff] %v1975
    %2012 = vst [vmem:[%s10 + $0x30] sm:$0xff] %v1990
    %2013 = vst [vmem:[%s10 + $0x38] sm:$0xff] %v2005
    %v2014 = vld [vmem:[#allocation7] sm:$0xff]
    %v2015 = vld [vmem:[#allocation7 + $0x8] sm:$0xff]
    %v2016 = vld [vmem:[#allocation7 + $0x10] sm:$0xff]
    %v2017 = vld [vmem:[#allocation7 + $0x18] sm:$0xff]
    %v2018 = vld [vmem:[#allocation7 + $0x20] sm:$0xff]
    %v2019 = vld [vmem:[#allocation7 + $0x28] sm:$0xff]
    %v2020 = vld [vmem:[#allocation7 + $0x30] sm:$0xff]
    %v2021 = vld [vmem:[#allocation7 + $0x38] sm:$0xff]
    %v2022 = vld [vmem:[%s9] sm:$0x1]
    %v2024 = vperm.slane %v2022, 0
    %2026 = vmatpush.msra.mxu0 0.0
    %2027 = vmatpush.msra.mxu0 0.0
    %2028 = vmatpush.msra.mxu0 0.0
    %2029 = vmatpush.msra.mxu0 0.0
    %2030 = vmatpush.msra.mxu0 0.0
    %2031 = vmatpush.msra.mxu0 0.0
    %2032 = vmatpush.msra.mxu0 0.0
    %2033 = vmatpush.msra.mxu0 0.0
    %2034 = vmatpush.msra.mxu0 %v2021
    %2035 = vmatpush.msra.mxu0 %v2020
    %2036 = vmatpush.msra.mxu0 %v2019
    %2037 = vmatpush.msra.mxu0 %v2018
    %2038 = vmatpush.msra.mxu0 %v2017
    %2039 = vmatpush.msra.mxu0 %v2016
    %2040 = vmatpush.msra.mxu0 %v2015
    %2041 = vmatpush.msra.mxu0 %v2014
    %2042 = vmatmul.f32.gmra.mxu0 %v1790
    %v2043 = vpop.f32.mrf.mxu0
    %v2044 = vadd.f32 %v2024, %v2043
    %2045 = vmatmul.f32.gmra.mxu0 %v1793
    %v2046 = vpop.f32.mrf.mxu0
    %v2047 = vadd.f32 %v2024, %v2046
    %2048 = vmatmul.f32.gmra.mxu0 %v1796
    %v2049 = vpop.f32.mrf.mxu0
    %v2050 = vadd.f32 %v2024, %v2049
    %2051 = vmatmul.f32.gmra.mxu0 %v1799
    %v2052 = vpop.f32.mrf.mxu0
    %v2053 = vadd.f32 %v2024, %v2052
    %2054 = vmatmul.f32.gmra.mxu0 %v1802
    %v2055 = vpop.f32.mrf.mxu0
    %v2056 = vadd.f32 %v2024, %v2055
    %2057 = vmatmul.f32.gmra.mxu0 %v1805
    %v2058 = vpop.f32.mrf.mxu0
    %v2059 = vadd.f32 %v2024, %v2058
    %2060 = vmatmul.f32.gmra.mxu0 %v1808
    %v2061 = vpop.f32.mrf.mxu0
    %v2062 = vadd.f32 %v2024, %v2061
    %2063 = vmatmul.f32.gmra.mxu0 %v1811
    %v2064 = vpop.f32.mrf.mxu0
    %v2065 = vadd.f32 %v2024, %v2064
    %2066 = vdwg.mxu0
    %2067 = vst [vmem:[%s11] sm:$0xff] %v2044
    %2068 = vst [vmem:[%s11 + $0x8] sm:$0xff] %v2047
    %2069 = vst [vmem:[%s11 + $0x10] sm:$0xff] %v2050
    %2070 = vst [vmem:[%s11 + $0x18] sm:$0xff] %v2053
    %2071 = vst [vmem:[%s11 + $0x20] sm:$0xff] %v2056
    %2072 = vst [vmem:[%s11 + $0x28] sm:$0xff] %v2059
    %2073 = vst [vmem:[%s11 + $0x30] sm:$0xff] %v2062
    %2074 = vst [vmem:[%s11 + $0x38] sm:$0xff] %v2065
    // Predicated region
    $region54: #{myrnn_forward.1} parent=1 // pred_check
      _
    $region55: #{myrnn_forward.1} parent=1 // pred_check_branch
      %2076 = sbr.rel (0) target = $region57
    $region56: #{myrnn_forward.1} parent=1 // pred_region
      _
    $region57: #{myrnn_forward.1} parent=1 // pred_fallthru
      _
    // Predicated region
    $region58: #{myrnn_forward.1} parent=1 // pred_check
      _
    $region59: #{myrnn_forward.1} parent=1 // pred_check_branch
      %2078 = sbr.rel (0) target = $region61
    $region60: #{myrnn_forward.1} parent=1 // pred_region
      _
    $region61: #{myrnn_forward.1} parent=1 // pred_fallthru
      _
    // Predicated region
    $region62: #{myrnn_forward.1} parent=1 // pred_check
      _
    $region63: #{myrnn_forward.1} parent=1 // pred_check_branch
      %2080 = sbr.rel (0) target = $region65
    $region64: #{myrnn_forward.1} parent=1 // pred_region
      _
    $region65: #{myrnn_forward.1} parent=1 // pred_fallthru
      _
    // Predicated region
    $region66: #{myrnn_forward.1} parent=1 // pred_check
      _
    $region67: #{myrnn_forward.1} parent=1 // pred_check_branch
      %2082 = sbr.rel (0) target = $region69
    $region68: #{myrnn_forward.1} parent=1 // pred_region
      _
    $region69: #{myrnn_forward.1} parent=1 // pred_fallthru
      _
    %2083 = vsyncpa [#allocation4], 1
    %2084 = vsyncpa [#allocation6], 1

</llo_original>
